<compile_context>
chip_gen: v6e
topology: v6e:2x2x1
jax: 0.10.0
libtpu: 0.0.40
codegen_flags: <defaults>
</compile_context>

<pallas_src>
import numpy as np
import jax
import jax.numpy as jnp
from jax import lax
from jax.experimental import pallas as pl
from jax.experimental.pallas import tpu as pltpu

EPS = 1e-5


# ----------------------------------------------------------------------------
# One-time parameter preprocessing (wrapper side, plain numpy/XLA).
# ----------------------------------------------------------------------------

def banded_conv_weights(w, width):
    """w: (K, K, Cin, Cout) HWIO conv weights, stride 1, padding K//2.

    Returns a stacked banded matrix (K*width*Cin, width*Cout): the K vertical
    taps are folded into the contraction, so a whole KxK conv over a row-slab
    is ONE MXU matmul.  Horizontal zero-padding is implicit (out-of-range
    taps absent from the band); vertical padding is handled by the in-kernel
    slab construction."""
    w = np.asarray(w, np.float32)
    K, _, Cin, Cout = w.shape
    half = K // 2
    mats = np.zeros((K, width, Cin, width, Cout), np.float32)
    for dy in range(K):
        for dx in range(K):
            for wx in range(width):
                src = wx + dx - half
                if 0 <= src < width:
                    mats[dy, src, :, wx, :] = w[dy, dx]
    return mats.reshape(K * width * Cin, width * Cout)


def channel_fold_matrices(width, C):
    """r_fold (W*C, C): sums the W lane-groups per channel.  r_bcast (C, W*C):
    broadcasts a per-channel vector back to the interleaved lane layout."""
    eye = np.eye(C, dtype=np.float32)
    r_fold = np.tile(eye, (width, 1))
    r_bcast = np.ascontiguousarray(r_fold.T)
    return r_fold, r_bcast


def prepare_basic_block(params, width, in_planes, planes):
    r_fold, r_bcast = channel_fold_matrices(width, planes)
    has_proj = bool(in_planes != planes)
    if not has_proj:
        assert in_planes == planes
    ops = {
        "cin": in_planes, "c": planes, "has_proj": has_proj,
        "wb1": jnp.asarray(banded_conv_weights(params["w1"], width)).astype(jnp.bfloat16),
        "g1": jnp.asarray(params["g1"], jnp.float32),
        "b1": jnp.asarray(params["b1"], jnp.float32),
        "wb2": jnp.asarray(banded_conv_weights(params["w2"], width)).astype(jnp.bfloat16),
        "g2": jnp.asarray(params["g2"], jnp.float32),
        "b2": jnp.asarray(params["b2"], jnp.float32),
        "r_fold": jnp.asarray(r_fold),
        "r_bcast": jnp.asarray(r_bcast),
    }
    if has_proj:
        # 1x1 projection: K=1 banded matrix is exactly (W*Cin, W*Cout).
        ops["ws"] = jnp.asarray(banded_conv_weights(params["ws"], width)).astype(jnp.bfloat16)
        ops["gs"] = jnp.asarray(params["gs"], jnp.float32)
        ops["bs"] = jnp.asarray(params["bs"], jnp.float32)
    return ops


# ----------------------------------------------------------------------------
# The fused multi-block kernel.
# ----------------------------------------------------------------------------

def make_blocks_kernel(cfgs, N, H, W):
    NH = N * H
    inv_cnt = 1.0 / float(N * H * W)

    def bn_train(acc, gamma, beta, r_fold, r_bcast):
        # acc: (NH, W*C) f32 conv accumulator, channels interleaved in lanes.
        # Batched BN fold/broadcast: ONE (2,WC)x(WC,C) matmul for [sum; sumsq]
        # and ONE (2,C)x(C,WC) matmul for [scale; shift].
        stats = jnp.concatenate(
            [jnp.sum(acc, axis=0, keepdims=True),
             jnp.sum(acc * acc, axis=0, keepdims=True)], axis=0)          # (2, WC)
        ch = jnp.dot(stats, r_fold, preferred_element_type=jnp.float32)    # (2, C)
        mean = ch[0:1, :] * inv_cnt
        var = jnp.maximum(ch[1:2, :] * inv_cnt - mean * mean, 0.0)         # clamp >= 0
        scale = gamma * lax.rsqrt(var + EPS)
        shift = beta - mean * scale
        ss = jnp.concatenate([scale, shift], axis=0)                       # (2, C)
        ss_w = jnp.dot(ss, r_bcast, preferred_element_type=jnp.float32)    # (2, WC)
        return acc * ss_w[0:1, :] + ss_w[1:2, :]

    def fill_slab(slab_ref, val, lanes):
        # val: (NH, lanes) f32 activation rows.  Writes the conv LHS slab
        # [row(h-1) | row(h) | row(h+1)] (zeros across image boundaries) into
        # the first 3*lanes lanes of the bf16 scratch.  All stores are full
        # NH-row, sublane-aligned; activations are cast to bf16 only here.
        zrow = jnp.zeros((1, lanes), jnp.float32)
        ridx = lax.broadcasted_iota(jnp.int32, (NH, lanes), 0)
        up = jnp.concatenate([zrow, val[:NH - 1, :]], axis=0)
        up = jnp.where(ridx % H == 0, 0.0, up)              # h == 0 rows -> 0
        down = jnp.concatenate([val[1:NH, :], zrow], axis=0)
        down = jnp.where(ridx % H == H - 1, 0.0, down)      # h == H-1 rows -> 0
        slab_ref[:, 0:lanes] = up.astype(jnp.bfloat16)
        slab_ref[:, lanes:2 * lanes] = val.astype(jnp.bfloat16)
        slab_ref[:, 2 * lanes:3 * lanes] = down.astype(jnp.bfloat16)

    def kernel(*refs):
        it = iter(refs)
        x_ref = next(it)
        blk = []
        for cfg in cfgs:
            b = {k: next(it) for k in ("wb1", "g1", "b1", "wb2", "g2", "b2")}
            if cfg["has_proj"]:
                b.update({k: next(it) for k in ("ws", "gs", "bs")})
            b["r_fold"] = next(it)
            b["r_bcast"] = next(it)
            blk.append(b)
        out_ref = next(it)
        slab_ref = next(it)

        h = x_ref[...]                                      # (NH, W*Cin0) f32
        for cfg, b in zip(cfgs, blk):
            li, lo = W * cfg["cin"], W * cfg["c"]
            r_fold = b["r_fold"][...]
            r_bcast = b["r_bcast"][...]

            # -- conv1 (3x3, pad 1) = ONE banded bf16 MXU matmul, K = 3*W*Cin
            fill_slab(slab_ref, h, li)
            a1 = jnp.dot(slab_ref[:, 0:3 * li], b["wb1"][...],
                         preferred_element_type=jnp.float32)

            # -- shortcut (reuse slab center section = bf16 copy of h) --------
            if cfg["has_proj"]:
                a_s = jnp.dot(slab_ref[:, li:2 * li], b["ws"][...],
                              preferred_element_type=jnp.float32)
                res = bn_train(a_s, b["gs"][...], b["bs"][...], r_fold, r_bcast)
            else:
                res = h                                     # exact f32 identity

            # -- bn1 + relu ----------------------------------------------------
            h1 = jnp.maximum(
                bn_train(a1, b["g1"][...], b["b1"][...], r_fold, r_bcast), 0.0)

            # -- conv2 + bn2 (slab reused, stays in VMEM) ------------------------
            fill_slab(slab_ref, h1, lo)
            a2 = jnp.dot(slab_ref[:, 0:3 * lo], b["wb2"][...],
                         preferred_element_type=jnp.float32)
            o = bn_train(a2, b["g2"][...], b["b2"][...], r_fold, r_bcast)

            # -- add + relu; next block consumes h directly from VMEM/vregs -----
            h = jnp.maximum(o + res, 0.0)                   # (NH, W*planes) f32

        out_ref[...] = h                                    # lane-dense store
    return kernel


def _full_spec(shape):
    nd = len(shape)
    return pl.BlockSpec(shape, lambda i: (0,) * nd)


def _cost_estimate(cfgs, N, H, W):
    NH = N * H
    flops = 0
    bytes_accessed = 4 * NH * W * cfgs[0]["cin"] + 4 * NH * W * cfgs[-1]["c"]
    for cfg in cfgs:
        li, lo, c = W * cfg["cin"], W * cfg["c"], cfg["c"]
        flops += 2 * NH * (3 * li) * lo + 2 * NH * (3 * lo) * lo
        bytes_accessed += 2 * (3 * li * lo + 3 * lo * lo)        # bf16 weights
        n_bn = 2
        if cfg["has_proj"]:
            flops += 2 * NH * li * lo
            bytes_accessed += 2 * li * lo + 4 * 2 * c
            n_bn = 3
        flops += n_bn * (2 * 2 * lo * c + 2 * 2 * c * lo + 8 * NH * lo)
        bytes_accessed += 4 * (2 * lo * c + 4 * c)
    return int(flops), int(bytes_accessed)


def fused_blocks(x_rows, ops_list, N, H, W):
    """x_rows: (N*H, W*Cin0) f32 activation rows (channels along lanes).

    Runs the whole chain of BasicBlocks in ONE pallas_call; intermediate
    activations never leave VMEM."""
    cfgs = [{"cin": o["cin"], "c": o["c"], "has_proj": o["has_proj"]}
            for o in ops_list]
    for prev, nxt in zip(cfgs[:-1], cfgs[1:]):
        assert prev["c"] == nxt["cin"], "block chain channel mismatch"
    NH = N * H

    inputs = [x_rows]
    for o in ops_list:
        inputs += [o["wb1"], o["g1"], o["b1"], o["wb2"], o["g2"], o["b2"]]
        if o["has_proj"]:
            inputs += [o["ws"], o["gs"], o["bs"]]
        inputs += [o["r_fold"], o["r_bcast"]]

    out_lanes = W * cfgs[-1]["c"]
    slab_lanes = 3 * W * max(max(c["cin"], c["c"]) for c in cfgs)
    flops, bytes_accessed = _cost_estimate(cfgs, N, H, W)

    return pl.pallas_call(
        make_blocks_kernel(cfgs, N, H, W),
        grid=(1,),
        in_specs=[_full_spec(a.shape) for a in inputs],
        out_specs=_full_spec((NH, out_lanes)),
        out_shape=jax.ShapeDtypeStruct((NH, out_lanes), jnp.float32),
        scratch_shapes=[pltpu.VMEM((NH, slab_lanes), jnp.bfloat16)],   # bf16 LHS slab
        compiler_params=pltpu.CompilerParams(
            dimension_semantics=("arbitrary",),
            vmem_limit_bytes=32 * 1024 * 1024),
        cost_estimate=pl.CostEstimate(flops=flops, transcendentals=0,
                                      bytes_accessed=bytes_accessed),
    )(*inputs)


# ----------------------------------------------------------------------------
# Layout helpers (NCHW <-> lane-interleaved rows) and the public forward.
# ----------------------------------------------------------------------------

def nchw_to_rows(x_nchw):
    N, C, H, W = x_nchw.shape
    return jnp.transpose(x_nchw, (0, 2, 3, 1)).reshape(N * H, W * C)


def rows_to_nchw(rows, N, H, W, C):
    return jnp.transpose(rows.reshape(N, H, W, C), (0, 3, 1, 2))


def resnet_blocks_forward(x_nchw, ops_list, stride=1):
    # TODO(synk): stride != 1 blocks need strided banded weights + a
    # stride-aware projection trigger (PyTorch also projects on stride != 1).
    assert stride == 1, "only stride=1 BasicBlocks are implemented"
    N, Cin, H, W = x_nchw.shape
    assert Cin == ops_list[0]["cin"]
    rows = nchw_to_rows(x_nchw.astype(jnp.float32))
    out_rows = fused_blocks(rows, ops_list, N, H, W)
    return rows_to_nchw(out_rows, N, H, W, ops_list[-1]["c"])


# ----------------------------------------------------------------------------
# Parameter init (HWIO conv weights, BN affine).
# ----------------------------------------------------------------------------

def init_basic_block_params(key, in_planes, out_planes, stride=1):
    ks = jax.random.split(key, 9)
    p = {
        "w1": 0.1 * jax.random.normal(ks[0], (3, 3, in_planes, out_planes), jnp.float32),
        "g1": 1.0 + 0.1 * jax.random.normal(ks[1], (1, out_planes), jnp.float32),
        "b1": 0.1 * jax.random.normal(ks[2], (1, out_planes), jnp.float32),
        "w2": 0.1 * jax.random.normal(ks[3], (3, 3, out_planes, out_planes), jnp.float32),
        "g2": 1.0 + 0.1 * jax.random.normal(ks[4], (1, out_planes), jnp.float32),
        "b2": 0.1 * jax.random.normal(ks[5], (1, out_planes), jnp.float32),
    }
    if stride != 1 or in_planes != out_planes:
        p["ws"] = 0.1 * jax.random.normal(ks[6], (1, 1, in_planes, out_planes), jnp.float32)
        p["gs"] = 1.0 + 0.1 * jax.random.normal(ks[7], (1, out_planes), jnp.float32)
        p["bs"] = 0.1 * jax.random.normal(ks[8], (1, out_planes), jnp.float32)
    return p


# ----------------------------------------------------------------------------
# Pure-JAX f32 reference (PyTorch train-mode BN semantics).
# ----------------------------------------------------------------------------

def _ref_conv(x, w, pad):
    return lax.conv_general_dilated(
        x, w, (1, 1), ((pad, pad), (pad, pad)),
        dimension_numbers=("NHWC", "HWIO", "NHWC"))


def _ref_bn(x, g, b):
    mean = x.mean(axis=(0, 1, 2), keepdims=True)
    var = ((x - mean) ** 2).mean(axis=(0, 1, 2), keepdims=True)
    return (x - mean) / jnp.sqrt(var + EPS) * g.reshape(1, 1, 1, -1) + b.reshape(1, 1, 1, -1)


def ref_basic_block(x_nchw, p, in_planes, out_planes):
    x = jnp.transpose(x_nchw, (0, 2, 3, 1)).astype(jnp.float32)
    h = jax.nn.relu(_ref_bn(_ref_conv(x, p["w1"], 1), p["g1"], p["b1"]))
    o = _ref_bn(_ref_conv(h, p["w2"], 1), p["g2"], p["b2"])
    if in_planes != out_planes:
        sc = _ref_bn(_ref_conv(x, p["ws"], 0), p["gs"], p["bs"])
    else:
        sc = x
    return jnp.transpose(jax.nn.relu(o + sc), (0, 3, 1, 2))


# ----------------------------------------------------------------------------

if __name__ == "__main__":
    key = jax.random.PRNGKey(0)
    kx, k1, k2 = jax.random.split(key, 3)

    x = jax.random.normal(kx, (2, 4, 16, 16), jnp.float32)     # NCHW, like PyTorch

    # Block A: 4 -> 8 channels (projection 1x1-conv + BN shortcut)
    pA = init_basic_block_params(k1, 4, 8, stride=1)
    opsA = prepare_basic_block(pA, 16, 4, 8)
    # Block B: 8 -> 8 channels (identity shortcut)
    pB = init_basic_block_params(k2, 8, 8, stride=1)
    opsB = prepare_basic_block(pB, 16, 8, 8)

    # Both blocks fused into a single pallas_call; rows layout kept in VMEM.
    y = jax.block_until_ready(resnet_blocks_forward(x, [opsA, opsB]))

    # Correctness check against the pure-f32 reference (kernel uses bf16 MXU
    # operands with f32 accumulation + train-mode BN, hence relaxed tolerance).
    rA = ref_basic_block(x, pA, 4, 8)
    rB = jax.block_until_ready(ref_basic_block(rA, pB, 8, 8))
    err = float(jnp.max(jnp.abs(y - rB) / (1.0 + jnp.abs(rB))))
    assert err < 1e-1, f"max normalized error {err}"

    print("KERNEL_OK")
</pallas_src>

<mosaic_0001>
module attributes {stable_mosaic.version = 11 : i64} {
  func.func @kernel(%arg0: i32, %arg1: memref<32x64xf32, #tpu.memory_space<vmem>>, %arg2: memref<192x128xbf16, #tpu.memory_space<vmem>>, %arg3: memref<1x8xf32, #tpu.memory_space<vmem>>, %arg4: memref<1x8xf32, #tpu.memory_space<vmem>>, %arg5: memref<384x128xbf16, #tpu.memory_space<vmem>>, %arg6: memref<1x8xf32, #tpu.memory_space<vmem>>, %arg7: memref<1x8xf32, #tpu.memory_space<vmem>>, %arg8: memref<64x128xbf16, #tpu.memory_space<vmem>>, %arg9: memref<1x8xf32, #tpu.memory_space<vmem>>, %arg10: memref<1x8xf32, #tpu.memory_space<vmem>>, %arg11: memref<128x8xf32, #tpu.memory_space<vmem>>, %arg12: memref<8x128xf32, #tpu.memory_space<vmem>>, %arg13: memref<384x128xbf16, #tpu.memory_space<vmem>>, %arg14: memref<1x8xf32, #tpu.memory_space<vmem>>, %arg15: memref<1x8xf32, #tpu.memory_space<vmem>>, %arg16: memref<384x128xbf16, #tpu.memory_space<vmem>>, %arg17: memref<1x8xf32, #tpu.memory_space<vmem>>, %arg18: memref<1x8xf32, #tpu.memory_space<vmem>>, %arg19: memref<128x8xf32, #tpu.memory_space<vmem>>, %arg20: memref<8x128xf32, #tpu.memory_space<vmem>>, %arg21: memref<32x128xf32, #tpu.memory_space<vmem>>, %arg22: memref<32x384xbf16, #tpu.memory_space<vmem>>) attributes {dimension_semantics = [#tpu.dimension_semantics<arbitrary>], iteration_bounds = array<i64: 1>, scalar_prefetch = 0 : i64, scratch_operands = 1 : i64, tpu.core_type = #tpu.core_type<tc>, window_params = [{pipeline_mode = #tpu.pipeline_mode<synchronous>, transform_indices = @transform_0, window_bounds = array<i64: 32, 64>}, {pipeline_mode = #tpu.pipeline_mode<synchronous>, transform_indices = @transform_1, window_bounds = array<i64: 192, 128>}, {pipeline_mode = #tpu.pipeline_mode<synchronous>, transform_indices = @transform_2, window_bounds = array<i64: 1, 8>}, {pipeline_mode = #tpu.pipeline_mode<synchronous>, transform_indices = @transform_3, window_bounds = array<i64: 1, 8>}, {pipeline_mode = #tpu.pipeline_mode<synchronous>, transform_indices = @transform_4, window_bounds = array<i64: 384, 128>}, {pipeline_mode = #tpu.pipeline_mode<synchronous>, transform_indices = @transform_5, window_bounds = array<i64: 1, 8>}, {pipeline_mode = #tpu.pipeline_mode<synchronous>, transform_indices = @transform_6, window_bounds = array<i64: 1, 8>}, {pipeline_mode = #tpu.pipeline_mode<synchronous>, transform_indices = @transform_7, window_bounds = array<i64: 64, 128>}, {pipeline_mode = #tpu.pipeline_mode<synchronous>, transform_indices = @transform_8, window_bounds = array<i64: 1, 8>}, {pipeline_mode = #tpu.pipeline_mode<synchronous>, transform_indices = @transform_9, window_bounds = array<i64: 1, 8>}, {pipeline_mode = #tpu.pipeline_mode<synchronous>, transform_indices = @transform_10, window_bounds = array<i64: 128, 8>}, {pipeline_mode = #tpu.pipeline_mode<synchronous>, transform_indices = @transform_11, window_bounds = array<i64: 8, 128>}, {pipeline_mode = #tpu.pipeline_mode<synchronous>, transform_indices = @transform_12, window_bounds = array<i64: 384, 128>}, {pipeline_mode = #tpu.pipeline_mode<synchronous>, transform_indices = @transform_13, window_bounds = array<i64: 1, 8>}, {pipeline_mode = #tpu.pipeline_mode<synchronous>, transform_indices = @transform_14, window_bounds = array<i64: 1, 8>}, {pipeline_mode = #tpu.pipeline_mode<synchronous>, transform_indices = @transform_15, window_bounds = array<i64: 384, 128>}, {pipeline_mode = #tpu.pipeline_mode<synchronous>, transform_indices = @transform_16, window_bounds = array<i64: 1, 8>}, {pipeline_mode = #tpu.pipeline_mode<synchronous>, transform_indices = @transform_17, window_bounds = array<i64: 1, 8>}, {pipeline_mode = #tpu.pipeline_mode<synchronous>, transform_indices = @transform_18, window_bounds = array<i64: 128, 8>}, {pipeline_mode = #tpu.pipeline_mode<synchronous>, transform_indices = @transform_19, window_bounds = array<i64: 8, 128>}, {pipeline_mode = #tpu.pipeline_mode<synchronous>, transform_indices = @transform_20, window_bounds = array<i64: 32, 128>}]} {
    %c0 = arith.constant 0 : index
    %c0_0 = arith.constant 0 : index
    %0 = vector.load %arg1[%c0, %c0_0] : memref<32x64xf32, #tpu.memory_space<vmem>>, vector<32x64xf32>
    %c0_1 = arith.constant 0 : index
    %c0_2 = arith.constant 0 : index
    %1 = vector.load %arg11[%c0_1, %c0_2] : memref<128x8xf32, #tpu.memory_space<vmem>>, vector<128x8xf32>
    %c0_3 = arith.constant 0 : index
    %c0_4 = arith.constant 0 : index
    %2 = vector.load %arg12[%c0_3, %c0_4] : memref<8x128xf32, #tpu.memory_space<vmem>>, vector<8x128xf32>
    %cst = arith.constant 0.000000e+00 : f32
    %3 = vector.broadcast %cst : f32 to vector<1x64xf32>
    %4 = tpu.iota {dimensions = array<i32: 0>} : vector<32x64xi32>
    %5 = vector.extract_strided_slice %0 {offsets = [0, 0], sizes = [31, 64], strides = [1, 1]} : vector<32x64xf32> to vector<31x64xf32>
    %6 = tpu.concatenate %3, %5 in 0 : vector<1x64xf32>, vector<31x64xf32> -> vector<32x64xf32>
    %c16_i32 = arith.constant 16 : i32
    %c0_i32 = arith.constant 0 : i32
    %7 = arith.cmpi eq, %c16_i32, %c0_i32 : i32
    %c1_i32 = arith.constant 1 : i32
    %8 = arith.select %7, %c1_i32, %c16_i32 : i32
    %9 = vector.broadcast %8 : i32 to vector<32x64xi32>
    %10 = arith.remsi %4, %9 : vector<32x64xi32>
    %c0_i32_5 = arith.constant 0 : i32
    %11 = vector.broadcast %c0_i32_5 : i32 to vector<32x64xi32>
    %12 = arith.cmpi ne, %10, %11 : vector<32x64xi32>
    %c0_i32_6 = arith.constant 0 : i32
    %13 = vector.broadcast %c0_i32_6 : i32 to vector<32x64xi32>
    %14 = arith.cmpi slt, %10, %13 : vector<32x64xi32>
    %c0_i32_7 = arith.constant 0 : i32
    %15 = arith.cmpi slt, %8, %c0_i32_7 : i32
    %16 = vector.broadcast %15 : i1 to vector<32x64xi1>
    %17 = vector.broadcast %16 : vector<32x64xi1> to vector<32x64xi1>
    %18 = arith.xori %14, %17 : vector<32x64xi1>
    %19 = arith.andi %18, %12 : vector<32x64xi1>
    %20 = vector.broadcast %8 : i32 to vector<32x64xi32>
    %21 = arith.addi %10, %20 : vector<32x64xi32>
    %22 = arith.select %19, %21, %10 : vector<32x64xi1>, vector<32x64xi32>
    %c0_i32_8 = arith.constant 0 : i32
    %23 = vector.broadcast %c0_i32_8 : i32 to vector<32x64xi32>
    %24 = arith.cmpi eq, %22, %23 : vector<32x64xi32>
    %cst_9 = arith.constant 0.000000e+00 : f32
    %25 = vector.broadcast %cst_9 : f32 to vector<32x64xf32>
    %26 = arith.select %24, %25, %6 : vector<32x64xi1>, vector<32x64xf32>
    %27 = vector.extract_strided_slice %0 {offsets = [1, 0], sizes = [31, 64], strides = [1, 1]} : vector<32x64xf32> to vector<31x64xf32>
    %28 = tpu.concatenate %27, %3 in 0 : vector<31x64xf32>, vector<1x64xf32> -> vector<32x64xf32>
    %c16_i32_10 = arith.constant 16 : i32
    %c0_i32_11 = arith.constant 0 : i32
    %29 = arith.cmpi eq, %c16_i32_10, %c0_i32_11 : i32
    %c1_i32_12 = arith.constant 1 : i32
    %30 = arith.select %29, %c1_i32_12, %c16_i32_10 : i32
    %31 = vector.broadcast %30 : i32 to vector<32x64xi32>
    %32 = arith.remsi %4, %31 : vector<32x64xi32>
    %c0_i32_13 = arith.constant 0 : i32
    %33 = vector.broadcast %c0_i32_13 : i32 to vector<32x64xi32>
    %34 = arith.cmpi ne, %32, %33 : vector<32x64xi32>
    %c0_i32_14 = arith.constant 0 : i32
    %35 = vector.broadcast %c0_i32_14 : i32 to vector<32x64xi32>
    %36 = arith.cmpi slt, %32, %35 : vector<32x64xi32>
    %c0_i32_15 = arith.constant 0 : i32
    %37 = arith.cmpi slt, %30, %c0_i32_15 : i32
    %38 = vector.broadcast %37 : i1 to vector<32x64xi1>
    %39 = vector.broadcast %38 : vector<32x64xi1> to vector<32x64xi1>
    %40 = arith.xori %36, %39 : vector<32x64xi1>
    %41 = arith.andi %40, %34 : vector<32x64xi1>
    %42 = vector.broadcast %30 : i32 to vector<32x64xi32>
    %43 = arith.addi %32, %42 : vector<32x64xi32>
    %44 = arith.select %41, %43, %32 : vector<32x64xi1>, vector<32x64xi32>
    %c15_i32 = arith.constant 15 : i32
    %45 = vector.broadcast %c15_i32 : i32 to vector<32x64xi32>
    %46 = arith.cmpi eq, %44, %45 : vector<32x64xi32>
    %cst_16 = arith.constant 0.000000e+00 : f32
    %47 = vector.broadcast %cst_16 : f32 to vector<32x64xf32>
    %48 = arith.select %46, %47, %28 : vector<32x64xi1>, vector<32x64xf32>
    %49 = arith.truncf %26 : vector<32x64xf32> to vector<32x64xbf16>
    %c0_17 = arith.constant 0 : index
    %c0_18 = arith.constant 0 : index
    %50 = vector.load %arg22[%c0_17, %c0_18] : memref<32x384xbf16, #tpu.memory_space<vmem>>, vector<32x64xbf16>
    tpu.vector_store %arg22[%c0_17, %c0_18], %49 {strides = array<i32>} : memref<32x384xbf16, #tpu.memory_space<vmem>>, vector<32x64xbf16>,
    %51 = arith.truncf %0 : vector<32x64xf32> to vector<32x64xbf16>
    %c0_19 = arith.constant 0 : index
    %c64 = arith.constant 64 : index
    %52 = vector.load %arg22[%c0_19, %c64] : memref<32x384xbf16, #tpu.memory_space<vmem>>, vector<32x64xbf16>
    tpu.vector_store %arg22[%c0_19, %c64], %51 {strides = array<i32>} : memref<32x384xbf16, #tpu.memory_space<vmem>>, vector<32x64xbf16>,
    %53 = arith.truncf %48 : vector<32x64xf32> to vector<32x64xbf16>
    %c0_20 = arith.constant 0 : index
    %c128 = arith.constant 128 : index
    %54 = vector.load %arg22[%c0_20, %c128] : memref<32x384xbf16, #tpu.memory_space<vmem>>, vector<32x64xbf16>
    tpu.vector_store %arg22[%c0_20, %c128], %53 {strides = array<i32>} : memref<32x384xbf16, #tpu.memory_space<vmem>>, vector<32x64xbf16>,
    %c0_21 = arith.constant 0 : index
    %c0_22 = arith.constant 0 : index
    %55 = vector.load %arg22[%c0_21, %c0_22] : memref<32x384xbf16, #tpu.memory_space<vmem>>, vector<32x192xbf16>
    %c0_23 = arith.constant 0 : index
    %c0_24 = arith.constant 0 : index
    %56 = vector.load %arg2[%c0_23, %c0_24] : memref<192x128xbf16, #tpu.memory_space<vmem>>, vector<192x128xbf16>
    %cst_25 = arith.constant dense<0.000000e+00> : vector<32x128xf32>
    %57 = tpu.matmul %55, %56, %cst_25 {dimension_numbers = #tpu.dot_dimension_numbers<[1], [0], [0], [1], [0, 0, 1, 1], [], []>} : vector<32x192xbf16>, vector<192x128xbf16>, vector<32x128xf32> -> vector<32x128xf32>
    %c0_26 = arith.constant 0 : index
    %c64_27 = arith.constant 64 : index
    %58 = vector.load %arg22[%c0_26, %c64_27] : memref<32x384xbf16, #tpu.memory_space<vmem>>, vector<32x64xbf16>
    %c0_28 = arith.constant 0 : index
    %c0_29 = arith.constant 0 : index
    %59 = vector.load %arg8[%c0_28, %c0_29] : memref<64x128xbf16, #tpu.memory_space<vmem>>, vector<64x128xbf16>
    %cst_30 = arith.constant dense<0.000000e+00> : vector<32x128xf32>
    %60 = tpu.matmul %58, %59, %cst_30 {dimension_numbers = #tpu.dot_dimension_numbers<[1], [0], [0], [1], [0, 0, 1, 1], [], []>} : vector<32x64xbf16>, vector<64x128xbf16>, vector<32x128xf32> -> vector<32x128xf32>
    %c0_31 = arith.constant 0 : index
    %c0_32 = arith.constant 0 : index
    %61 = vector.load %arg9[%c0_31, %c0_32] : memref<1x8xf32, #tpu.memory_space<vmem>>, vector<1x8xf32>
    %c0_33 = arith.constant 0 : index
    %c0_34 = arith.constant 0 : index
    %62 = vector.load %arg10[%c0_33, %c0_34] : memref<1x8xf32, #tpu.memory_space<vmem>>, vector<1x8xf32>
    %cst_35 = arith.constant dense<0.000000e+00> : vector<128xf32>
    %63 = vector.multi_reduction <add>, %60, %cst_35 [0] : vector<32x128xf32> to vector<128xf32>
    %64 = vector.shape_cast %63 : vector<128xf32> to vector<1x128xf32>
    %65 = arith.mulf %60, %60 : vector<32x128xf32>
    %cst_36 = arith.constant dense<0.000000e+00> : vector<128xf32>
    %66 = vector.multi_reduction <add>, %65, %cst_36 [0] : vector<32x128xf32> to vector<128xf32>
    %67 = vector.shape_cast %66 : vector<128xf32> to vector<1x128xf32>
    %68 = tpu.concatenate %64, %67 in 0 : vector<1x128xf32>, vector<1x128xf32> -> vector<2x128xf32>
    %cst_37 = arith.constant dense<0.000000e+00> : vector<2x8xf32>
    %69 = tpu.matmul %68, %1, %cst_37 {dimension_numbers = #tpu.dot_dimension_numbers<[1], [0], [0], [1], [0, 0, 1, 1], [], []>} : vector<2x128xf32>, vector<128x8xf32>, vector<2x8xf32> -> vector<2x8xf32>
    %70 = vector.extract_strided_slice %69 {offsets = [0, 0], sizes = [1, 8], strides = [1, 1]} : vector<2x8xf32> to vector<1x8xf32>
    %cst_38 = arith.constant 0.001953125 : f32
    %71 = vector.broadcast %cst_38 : f32 to vector<1x8xf32>
    %72 = arith.mulf %70, %71 : vector<1x8xf32>
    %73 = vector.extract_strided_slice %69 {offsets = [1, 0], sizes = [1, 8], strides = [1, 1]} : vector<2x8xf32> to vector<1x8xf32>
    %cst_39 = arith.constant 0.001953125 : f32
    %74 = vector.broadcast %cst_39 : f32 to vector<1x8xf32>
    %75 = arith.mulf %73, %74 : vector<1x8xf32>
    %76 = arith.mulf %72, %72 : vector<1x8xf32>
    %77 = arith.subf %75, %76 : vector<1x8xf32>
    %cst_40 = arith.constant 0.000000e+00 : f32
    %78 = vector.broadcast %cst_40 : f32 to vector<1x8xf32>
    %79 = arith.maximumf %77, %78 : vector<1x8xf32>
    %cst_41 = arith.constant 9.99999974E-6 : f32
    %80 = vector.broadcast %cst_41 : f32 to vector<1x8xf32>
    %81 = arith.addf %79, %80 : vector<1x8xf32>
    %82 = math.rsqrt %81 : vector<1x8xf32>
    %83 = arith.mulf %61, %82 : vector<1x8xf32>
    %84 = arith.mulf %72, %83 : vector<1x8xf32>
    %85 = arith.subf %62, %84 : vector<1x8xf32>
    %86 = tpu.concatenate %83, %85 in 0 : vector<1x8xf32>, vector<1x8xf32> -> vector<2x8xf32>
    %cst_42 = arith.constant dense<0.000000e+00> : vector<2x128xf32>
    %87 = tpu.matmul %86, %2, %cst_42 {dimension_numbers = #tpu.dot_dimension_numbers<[1], [0], [0], [1], [0, 0, 1, 1], [], []>} : vector<2x8xf32>, vector<8x128xf32>, vector<2x128xf32> -> vector<2x128xf32>
    %88 = vector.extract_strided_slice %87 {offsets = [0, 0], sizes = [1, 128], strides = [1, 1]} : vector<2x128xf32> to vector<1x128xf32>
    %89 = vector.broadcast %88 : vector<1x128xf32> to vector<32x128xf32>
    %90 = arith.mulf %60, %89 : vector<32x128xf32>
    %91 = vector.extract_strided_slice %87 {offsets = [1, 0], sizes = [1, 128], strides = [1, 1]} : vector<2x128xf32> to vector<1x128xf32>
    %92 = vector.broadcast %91 : vector<1x128xf32> to vector<32x128xf32>
    %93 = arith.addf %90, %92 : vector<32x128xf32>
    %c0_43 = arith.constant 0 : index
    %c0_44 = arith.constant 0 : index
    %94 = vector.load %arg3[%c0_43, %c0_44] : memref<1x8xf32, #tpu.memory_space<vmem>>, vector<1x8xf32>
    %c0_45 = arith.constant 0 : index
    %c0_46 = arith.constant 0 : index
    %95 = vector.load %arg4[%c0_45, %c0_46] : memref<1x8xf32, #tpu.memory_space<vmem>>, vector<1x8xf32>
    %cst_47 = arith.constant dense<0.000000e+00> : vector<128xf32>
    %96 = vector.multi_reduction <add>, %57, %cst_47 [0] : vector<32x128xf32> to vector<128xf32>
    %97 = vector.shape_cast %96 : vector<128xf32> to vector<1x128xf32>
    %98 = arith.mulf %57, %57 : vector<32x128xf32>
    %cst_48 = arith.constant dense<0.000000e+00> : vector<128xf32>
    %99 = vector.multi_reduction <add>, %98, %cst_48 [0] : vector<32x128xf32> to vector<128xf32>
    %100 = vector.shape_cast %99 : vector<128xf32> to vector<1x128xf32>
    %101 = tpu.concatenate %97, %100 in 0 : vector<1x128xf32>, vector<1x128xf32> -> vector<2x128xf32>
    %cst_49 = arith.constant dense<0.000000e+00> : vector<2x8xf32>
    %102 = tpu.matmul %101, %1, %cst_49 {dimension_numbers = #tpu.dot_dimension_numbers<[1], [0], [0], [1], [0, 0, 1, 1], [], []>} : vector<2x128xf32>, vector<128x8xf32>, vector<2x8xf32> -> vector<2x8xf32>
    %103 = vector.extract_strided_slice %102 {offsets = [0, 0], sizes = [1, 8], strides = [1, 1]} : vector<2x8xf32> to vector<1x8xf32>
    %cst_50 = arith.constant 0.001953125 : f32
    %104 = vector.broadcast %cst_50 : f32 to vector<1x8xf32>
    %105 = arith.mulf %103, %104 : vector<1x8xf32>
    %106 = vector.extract_strided_slice %102 {offsets = [1, 0], sizes = [1, 8], strides = [1, 1]} : vector<2x8xf32> to vector<1x8xf32>
    %cst_51 = arith.constant 0.001953125 : f32
    %107 = vector.broadcast %cst_51 : f32 to vector<1x8xf32>
    %108 = arith.mulf %106, %107 : vector<1x8xf32>
    %109 = arith.mulf %105, %105 : vector<1x8xf32>
    %110 = arith.subf %108, %109 : vector<1x8xf32>
    %cst_52 = arith.constant 0.000000e+00 : f32
    %111 = vector.broadcast %cst_52 : f32 to vector<1x8xf32>
    %112 = arith.maximumf %110, %111 : vector<1x8xf32>
    %cst_53 = arith.constant 9.99999974E-6 : f32
    %113 = vector.broadcast %cst_53 : f32 to vector<1x8xf32>
    %114 = arith.addf %112, %113 : vector<1x8xf32>
    %115 = math.rsqrt %114 : vector<1x8xf32>
    %116 = arith.mulf %94, %115 : vector<1x8xf32>
    %117 = arith.mulf %105, %116 : vector<1x8xf32>
    %118 = arith.subf %95, %117 : vector<1x8xf32>
    %119 = tpu.concatenate %116, %118 in 0 : vector<1x8xf32>, vector<1x8xf32> -> vector<2x8xf32>
    %cst_54 = arith.constant dense<0.000000e+00> : vector<2x128xf32>
    %120 = tpu.matmul %119, %2, %cst_54 {dimension_numbers = #tpu.dot_dimension_numbers<[1], [0], [0], [1], [0, 0, 1, 1], [], []>} : vector<2x8xf32>, vector<8x128xf32>, vector<2x128xf32> -> vector<2x128xf32>
    %121 = vector.extract_strided_slice %120 {offsets = [0, 0], sizes = [1, 128], strides = [1, 1]} : vector<2x128xf32> to vector<1x128xf32>
    %122 = vector.broadcast %121 : vector<1x128xf32> to vector<32x128xf32>
    %123 = arith.mulf %57, %122 : vector<32x128xf32>
    %124 = vector.extract_strided_slice %120 {offsets = [1, 0], sizes = [1, 128], strides = [1, 1]} : vector<2x128xf32> to vector<1x128xf32>
    %125 = vector.broadcast %124 : vector<1x128xf32> to vector<32x128xf32>
    %126 = arith.addf %123, %125 : vector<32x128xf32>
    %cst_55 = arith.constant 0.000000e+00 : f32
    %127 = vector.broadcast %cst_55 : f32 to vector<32x128xf32>
    %128 = arith.maximumf %126, %127 : vector<32x128xf32>
    %cst_56 = arith.constant 0.000000e+00 : f32
    %129 = vector.broadcast %cst_56 : f32 to vector<1x128xf32>
    %130 = tpu.iota {dimensions = array<i32: 0>} : vector<32x128xi32>
    %131 = vector.extract_strided_slice %128 {offsets = [0, 0], sizes = [31, 128], strides = [1, 1]} : vector<32x128xf32> to vector<31x128xf32>
    %132 = tpu.concatenate %129, %131 in 0 : vector<1x128xf32>, vector<31x128xf32> -> vector<32x128xf32>
    %c16_i32_57 = arith.constant 16 : i32
    %c0_i32_58 = arith.constant 0 : i32
    %133 = arith.cmpi eq, %c16_i32_57, %c0_i32_58 : i32
    %c1_i32_59 = arith.constant 1 : i32
    %134 = arith.select %133, %c1_i32_59, %c16_i32_57 : i32
    %135 = vector.broadcast %134 : i32 to vector<32x128xi32>
    %136 = arith.remsi %130, %135 : vector<32x128xi32>
    %c0_i32_60 = arith.constant 0 : i32
    %137 = vector.broadcast %c0_i32_60 : i32 to vector<32x128xi32>
    %138 = arith.cmpi ne, %136, %137 : vector<32x128xi32>
    %c0_i32_61 = arith.constant 0 : i32
    %139 = vector.broadcast %c0_i32_61 : i32 to vector<32x128xi32>
    %140 = arith.cmpi slt, %136, %139 : vector<32x128xi32>
    %c0_i32_62 = arith.constant 0 : i32
    %141 = arith.cmpi slt, %134, %c0_i32_62 : i32
    %142 = vector.broadcast %141 : i1 to vector<32x128xi1>
    %143 = vector.broadcast %142 : vector<32x128xi1> to vector<32x128xi1>
    %144 = arith.xori %140, %143 : vector<32x128xi1>
    %145 = arith.andi %144, %138 : vector<32x128xi1>
    %146 = vector.broadcast %134 : i32 to vector<32x128xi32>
    %147 = arith.addi %136, %146 : vector<32x128xi32>
    %148 = arith.select %145, %147, %136 : vector<32x128xi1>, vector<32x128xi32>
    %c0_i32_63 = arith.constant 0 : i32
    %149 = vector.broadcast %c0_i32_63 : i32 to vector<32x128xi32>
    %150 = arith.cmpi eq, %148, %149 : vector<32x128xi32>
    %cst_64 = arith.constant 0.000000e+00 : f32
    %151 = vector.broadcast %cst_64 : f32 to vector<32x128xf32>
    %152 = arith.select %150, %151, %132 : vector<32x128xi1>, vector<32x128xf32>
    %153 = vector.extract_strided_slice %128 {offsets = [1, 0], sizes = [31, 128], strides = [1, 1]} : vector<32x128xf32> to vector<31x128xf32>
    %154 = tpu.concatenate %153, %129 in 0 : vector<31x128xf32>, vector<1x128xf32> -> vector<32x128xf32>
    %c16_i32_65 = arith.constant 16 : i32
    %c0_i32_66 = arith.constant 0 : i32
    %155 = arith.cmpi eq, %c16_i32_65, %c0_i32_66 : i32
    %c1_i32_67 = arith.constant 1 : i32
    %156 = arith.select %155, %c1_i32_67, %c16_i32_65 : i32
    %157 = vector.broadcast %156 : i32 to vector<32x128xi32>
    %158 = arith.remsi %130, %157 : vector<32x128xi32>
    %c0_i32_68 = arith.constant 0 : i32
    %159 = vector.broadcast %c0_i32_68 : i32 to vector<32x128xi32>
    %160 = arith.cmpi ne, %158, %159 : vector<32x128xi32>
    %c0_i32_69 = arith.constant 0 : i32
    %161 = vector.broadcast %c0_i32_69 : i32 to vector<32x128xi32>
    %162 = arith.cmpi slt, %158, %161 : vector<32x128xi32>
    %c0_i32_70 = arith.constant 0 : i32
    %163 = arith.cmpi slt, %156, %c0_i32_70 : i32
    %164 = vector.broadcast %163 : i1 to vector<32x128xi1>
    %165 = vector.broadcast %164 : vector<32x128xi1> to vector<32x128xi1>
    %166 = arith.xori %162, %165 : vector<32x128xi1>
    %167 = arith.andi %166, %160 : vector<32x128xi1>
    %168 = vector.broadcast %156 : i32 to vector<32x128xi32>
    %169 = arith.addi %158, %168 : vector<32x128xi32>
    %170 = arith.select %167, %169, %158 : vector<32x128xi1>, vector<32x128xi32>
    %c15_i32_71 = arith.constant 15 : i32
    %171 = vector.broadcast %c15_i32_71 : i32 to vector<32x128xi32>
    %172 = arith.cmpi eq, %170, %171 : vector<32x128xi32>
    %cst_72 = arith.constant 0.000000e+00 : f32
    %173 = vector.broadcast %cst_72 : f32 to vector<32x128xf32>
    %174 = arith.select %172, %173, %154 : vector<32x128xi1>, vector<32x128xf32>
    %175 = arith.truncf %152 : vector<32x128xf32> to vector<32x128xbf16>
    %c0_73 = arith.constant 0 : index
    %c0_74 = arith.constant 0 : index
    %176 = vector.load %arg22[%c0_73, %c0_74] : memref<32x384xbf16, #tpu.memory_space<vmem>>, vector<32x128xbf16>
    tpu.vector_store %arg22[%c0_73, %c0_74], %175 {strides = array<i32>} : memref<32x384xbf16, #tpu.memory_space<vmem>>, vector<32x128xbf16>,
    %177 = arith.truncf %128 : vector<32x128xf32> to vector<32x128xbf16>
    %c0_75 = arith.constant 0 : index
    %c128_76 = arith.constant 128 : index
    %178 = vector.load %arg22[%c0_75, %c128_76] : memref<32x384xbf16, #tpu.memory_space<vmem>>, vector<32x128xbf16>
    tpu.vector_store %arg22[%c0_75, %c128_76], %177 {strides = array<i32>} : memref<32x384xbf16, #tpu.memory_space<vmem>>, vector<32x128xbf16>,
    %179 = arith.truncf %174 : vector<32x128xf32> to vector<32x128xbf16>
    %c0_77 = arith.constant 0 : index
    %c256 = arith.constant 256 : index
    %180 = vector.load %arg22[%c0_77, %c256] : memref<32x384xbf16, #tpu.memory_space<vmem>>, vector<32x128xbf16>
    tpu.vector_store %arg22[%c0_77, %c256], %179 {strides = array<i32>} : memref<32x384xbf16, #tpu.memory_space<vmem>>, vector<32x128xbf16>,
    %c0_78 = arith.constant 0 : index
    %c0_79 = arith.constant 0 : index
    %181 = vector.load %arg22[%c0_78, %c0_79] : memref<32x384xbf16, #tpu.memory_space<vmem>>, vector<32x384xbf16>
    %c0_80 = arith.constant 0 : index
    %c0_81 = arith.constant 0 : index
    %182 = vector.load %arg5[%c0_80, %c0_81] : memref<384x128xbf16, #tpu.memory_space<vmem>>, vector<384x128xbf16>
    %cst_82 = arith.constant dense<0.000000e+00> : vector<32x128xf32>
    %183 = tpu.matmul %181, %182, %cst_82 {dimension_numbers = #tpu.dot_dimension_numbers<[1], [0], [0], [1], [0, 0, 1, 1], [], []>} : vector<32x384xbf16>, vector<384x128xbf16>, vector<32x128xf32> -> vector<32x128xf32>
    %c0_83 = arith.constant 0 : index
    %c0_84 = arith.constant 0 : index
    %184 = vector.load %arg6[%c0_83, %c0_84] : memref<1x8xf32, #tpu.memory_space<vmem>>, vector<1x8xf32>
    %c0_85 = arith.constant 0 : index
    %c0_86 = arith.constant 0 : index
    %185 = vector.load %arg7[%c0_85, %c0_86] : memref<1x8xf32, #tpu.memory_space<vmem>>, vector<1x8xf32>
    %cst_87 = arith.constant dense<0.000000e+00> : vector<128xf32>
    %186 = vector.multi_reduction <add>, %183, %cst_87 [0] : vector<32x128xf32> to vector<128xf32>
    %187 = vector.shape_cast %186 : vector<128xf32> to vector<1x128xf32>
    %188 = arith.mulf %183, %183 : vector<32x128xf32>
    %cst_88 = arith.constant dense<0.000000e+00> : vector<128xf32>
    %189 = vector.multi_reduction <add>, %188, %cst_88 [0] : vector<32x128xf32> to vector<128xf32>
    %190 = vector.shape_cast %189 : vector<128xf32> to vector<1x128xf32>
    %191 = tpu.concatenate %187, %190 in 0 : vector<1x128xf32>, vector<1x128xf32> -> vector<2x128xf32>
    %cst_89 = arith.constant dense<0.000000e+00> : vector<2x8xf32>
    %192 = tpu.matmul %191, %1, %cst_89 {dimension_numbers = #tpu.dot_dimension_numbers<[1], [0], [0], [1], [0, 0, 1, 1], [], []>} : vector<2x128xf32>, vector<128x8xf32>, vector<2x8xf32> -> vector<2x8xf32>
    %193 = vector.extract_strided_slice %192 {offsets = [0, 0], sizes = [1, 8], strides = [1, 1]} : vector<2x8xf32> to vector<1x8xf32>
    %cst_90 = arith.constant 0.001953125 : f32
    %194 = vector.broadcast %cst_90 : f32 to vector<1x8xf32>
    %195 = arith.mulf %193, %194 : vector<1x8xf32>
    %196 = vector.extract_strided_slice %192 {offsets = [1, 0], sizes = [1, 8], strides = [1, 1]} : vector<2x8xf32> to vector<1x8xf32>
    %cst_91 = arith.constant 0.001953125 : f32
    %197 = vector.broadcast %cst_91 : f32 to vector<1x8xf32>
    %198 = arith.mulf %196, %197 : vector<1x8xf32>
    %199 = arith.mulf %195, %195 : vector<1x8xf32>
    %200 = arith.subf %198, %199 : vector<1x8xf32>
    %cst_92 = arith.constant 0.000000e+00 : f32
    %201 = vector.broadcast %cst_92 : f32 to vector<1x8xf32>
    %202 = arith.maximumf %200, %201 : vector<1x8xf32>
    %cst_93 = arith.constant 9.99999974E-6 : f32
    %203 = vector.broadcast %cst_93 : f32 to vector<1x8xf32>
    %204 = arith.addf %202, %203 : vector<1x8xf32>
    %205 = math.rsqrt %204 : vector<1x8xf32>
    %206 = arith.mulf %184, %205 : vector<1x8xf32>
    %207 = arith.mulf %195, %206 : vector<1x8xf32>
    %208 = arith.subf %185, %207 : vector<1x8xf32>
    %209 = tpu.concatenate %206, %208 in 0 : vector<1x8xf32>, vector<1x8xf32> -> vector<2x8xf32>
    %cst_94 = arith.constant dense<0.000000e+00> : vector<2x128xf32>
    %210 = tpu.matmul %209, %2, %cst_94 {dimension_numbers = #tpu.dot_dimension_numbers<[1], [0], [0], [1], [0, 0, 1, 1], [], []>} : vector<2x8xf32>, vector<8x128xf32>, vector<2x128xf32> -> vector<2x128xf32>
    %211 = vector.extract_strided_slice %210 {offsets = [0, 0], sizes = [1, 128], strides = [1, 1]} : vector<2x128xf32> to vector<1x128xf32>
    %212 = vector.broadcast %211 : vector<1x128xf32> to vector<32x128xf32>
    %213 = arith.mulf %183, %212 : vector<32x128xf32>
    %214 = vector.extract_strided_slice %210 {offsets = [1, 0], sizes = [1, 128], strides = [1, 1]} : vector<2x128xf32> to vector<1x128xf32>
    %215 = vector.broadcast %214 : vector<1x128xf32> to vector<32x128xf32>
    %216 = arith.addf %213, %215 : vector<32x128xf32>
    %217 = arith.addf %216, %93 : vector<32x128xf32>
    %cst_95 = arith.constant 0.000000e+00 : f32
    %218 = vector.broadcast %cst_95 : f32 to vector<32x128xf32>
    %219 = arith.maximumf %217, %218 : vector<32x128xf32>
    %c0_96 = arith.constant 0 : index
    %c0_97 = arith.constant 0 : index
    %220 = vector.load %arg19[%c0_96, %c0_97] : memref<128x8xf32, #tpu.memory_space<vmem>>, vector<128x8xf32>
    %c0_98 = arith.constant 0 : index
    %c0_99 = arith.constant 0 : index
    %221 = vector.load %arg20[%c0_98, %c0_99] : memref<8x128xf32, #tpu.memory_space<vmem>>, vector<8x128xf32>
    %cst_100 = arith.constant 0.000000e+00 : f32
    %222 = vector.broadcast %cst_100 : f32 to vector<1x128xf32>
    %223 = tpu.iota {dimensions = array<i32: 0>} : vector<32x128xi32>
    %224 = vector.extract_strided_slice %219 {offsets = [0, 0], sizes = [31, 128], strides = [1, 1]} : vector<32x128xf32> to vector<31x128xf32>
    %225 = tpu.concatenate %222, %224 in 0 : vector<1x128xf32>, vector<31x128xf32> -> vector<32x128xf32>
    %c16_i32_101 = arith.constant 16 : i32
    %c0_i32_102 = arith.constant 0 : i32
    %226 = arith.cmpi eq, %c16_i32_101, %c0_i32_102 : i32
    %c1_i32_103 = arith.constant 1 : i32
    %227 = arith.select %226, %c1_i32_103, %c16_i32_101 : i32
    %228 = vector.broadcast %227 : i32 to vector<32x128xi32>
    %229 = arith.remsi %223, %228 : vector<32x128xi32>
    %c0_i32_104 = arith.constant 0 : i32
    %230 = vector.broadcast %c0_i32_104 : i32 to vector<32x128xi32>
    %231 = arith.cmpi ne, %229, %230 : vector<32x128xi32>
    %c0_i32_105 = arith.constant 0 : i32
    %232 = vector.broadcast %c0_i32_105 : i32 to vector<32x128xi32>
    %233 = arith.cmpi slt, %229, %232 : vector<32x128xi32>
    %c0_i32_106 = arith.constant 0 : i32
    %234 = arith.cmpi slt, %227, %c0_i32_106 : i32
    %235 = vector.broadcast %234 : i1 to vector<32x128xi1>
    %236 = vector.broadcast %235 : vector<32x128xi1> to vector<32x128xi1>
    %237 = arith.xori %233, %236 : vector<32x128xi1>
    %238 = arith.andi %237, %231 : vector<32x128xi1>
    %239 = vector.broadcast %227 : i32 to vector<32x128xi32>
    %240 = arith.addi %229, %239 : vector<32x128xi32>
    %241 = arith.select %238, %240, %229 : vector<32x128xi1>, vector<32x128xi32>
    %c0_i32_107 = arith.constant 0 : i32
    %242 = vector.broadcast %c0_i32_107 : i32 to vector<32x128xi32>
    %243 = arith.cmpi eq, %241, %242 : vector<32x128xi32>
    %cst_108 = arith.constant 0.000000e+00 : f32
    %244 = vector.broadcast %cst_108 : f32 to vector<32x128xf32>
    %245 = arith.select %243, %244, %225 : vector<32x128xi1>, vector<32x128xf32>
    %246 = vector.extract_strided_slice %219 {offsets = [1, 0], sizes = [31, 128], strides = [1, 1]} : vector<32x128xf32> to vector<31x128xf32>
    %247 = tpu.concatenate %246, %222 in 0 : vector<31x128xf32>, vector<1x128xf32> -> vector<32x128xf32>
    %c16_i32_109 = arith.constant 16 : i32
    %c0_i32_110 = arith.constant 0 : i32
    %248 = arith.cmpi eq, %c16_i32_109, %c0_i32_110 : i32
    %c1_i32_111 = arith.constant 1 : i32
    %249 = arith.select %248, %c1_i32_111, %c16_i32_109 : i32
    %250 = vector.broadcast %249 : i32 to vector<32x128xi32>
    %251 = arith.remsi %223, %250 : vector<32x128xi32>
    %c0_i32_112 = arith.constant 0 : i32
    %252 = vector.broadcast %c0_i32_112 : i32 to vector<32x128xi32>
    %253 = arith.cmpi ne, %251, %252 : vector<32x128xi32>
    %c0_i32_113 = arith.constant 0 : i32
    %254 = vector.broadcast %c0_i32_113 : i32 to vector<32x128xi32>
    %255 = arith.cmpi slt, %251, %254 : vector<32x128xi32>
    %c0_i32_114 = arith.constant 0 : i32
    %256 = arith.cmpi slt, %249, %c0_i32_114 : i32
    %257 = vector.broadcast %256 : i1 to vector<32x128xi1>
    %258 = vector.broadcast %257 : vector<32x128xi1> to vector<32x128xi1>
    %259 = arith.xori %255, %258 : vector<32x128xi1>
    %260 = arith.andi %259, %253 : vector<32x128xi1>
    %261 = vector.broadcast %249 : i32 to vector<32x128xi32>
    %262 = arith.addi %251, %261 : vector<32x128xi32>
    %263 = arith.select %260, %262, %251 : vector<32x128xi1>, vector<32x128xi32>
    %c15_i32_115 = arith.constant 15 : i32
    %264 = vector.broadcast %c15_i32_115 : i32 to vector<32x128xi32>
    %265 = arith.cmpi eq, %263, %264 : vector<32x128xi32>
    %cst_116 = arith.constant 0.000000e+00 : f32
    %266 = vector.broadcast %cst_116 : f32 to vector<32x128xf32>
    %267 = arith.select %265, %266, %247 : vector<32x128xi1>, vector<32x128xf32>
    %268 = arith.truncf %245 : vector<32x128xf32> to vector<32x128xbf16>
    %c0_117 = arith.constant 0 : index
    %c0_118 = arith.constant 0 : index
    %269 = vector.load %arg22[%c0_117, %c0_118] : memref<32x384xbf16, #tpu.memory_space<vmem>>, vector<32x128xbf16>
    tpu.vector_store %arg22[%c0_117, %c0_118], %268 {strides = array<i32>} : memref<32x384xbf16, #tpu.memory_space<vmem>>, vector<32x128xbf16>,
    %270 = arith.truncf %219 : vector<32x128xf32> to vector<32x128xbf16>
    %c0_119 = arith.constant 0 : index
    %c128_120 = arith.constant 128 : index
    %271 = vector.load %arg22[%c0_119, %c128_120] : memref<32x384xbf16, #tpu.memory_space<vmem>>, vector<32x128xbf16>
    tpu.vector_store %arg22[%c0_119, %c128_120], %270 {strides = array<i32>} : memref<32x384xbf16, #tpu.memory_space<vmem>>, vector<32x128xbf16>,
    %272 = arith.truncf %267 : vector<32x128xf32> to vector<32x128xbf16>
    %c0_121 = arith.constant 0 : index
    %c256_122 = arith.constant 256 : index
    %273 = vector.load %arg22[%c0_121, %c256_122] : memref<32x384xbf16, #tpu.memory_space<vmem>>, vector<32x128xbf16>
    tpu.vector_store %arg22[%c0_121, %c256_122], %272 {strides = array<i32>} : memref<32x384xbf16, #tpu.memory_space<vmem>>, vector<32x128xbf16>,
    %c0_123 = arith.constant 0 : index
    %c0_124 = arith.constant 0 : index
    %274 = vector.load %arg22[%c0_123, %c0_124] : memref<32x384xbf16, #tpu.memory_space<vmem>>, vector<32x384xbf16>
    %c0_125 = arith.constant 0 : index
    %c0_126 = arith.constant 0 : index
    %275 = vector.load %arg13[%c0_125, %c0_126] : memref<384x128xbf16, #tpu.memory_space<vmem>>, vector<384x128xbf16>
    %cst_127 = arith.constant dense<0.000000e+00> : vector<32x128xf32>
    %276 = tpu.matmul %274, %275, %cst_127 {dimension_numbers = #tpu.dot_dimension_numbers<[1], [0], [0], [1], [0, 0, 1, 1], [], []>} : vector<32x384xbf16>, vector<384x128xbf16>, vector<32x128xf32> -> vector<32x128xf32>
    %c0_128 = arith.constant 0 : index
    %c0_129 = arith.constant 0 : index
    %277 = vector.load %arg14[%c0_128, %c0_129] : memref<1x8xf32, #tpu.memory_space<vmem>>, vector<1x8xf32>
    %c0_130 = arith.constant 0 : index
    %c0_131 = arith.constant 0 : index
    %278 = vector.load %arg15[%c0_130, %c0_131] : memref<1x8xf32, #tpu.memory_space<vmem>>, vector<1x8xf32>
    %cst_132 = arith.constant dense<0.000000e+00> : vector<128xf32>
    %279 = vector.multi_reduction <add>, %276, %cst_132 [0] : vector<32x128xf32> to vector<128xf32>
    %280 = vector.shape_cast %279 : vector<128xf32> to vector<1x128xf32>
    %281 = arith.mulf %276, %276 : vector<32x128xf32>
    %cst_133 = arith.constant dense<0.000000e+00> : vector<128xf32>
    %282 = vector.multi_reduction <add>, %281, %cst_133 [0] : vector<32x128xf32> to vector<128xf32>
    %283 = vector.shape_cast %282 : vector<128xf32> to vector<1x128xf32>
    %284 = tpu.concatenate %280, %283 in 0 : vector<1x128xf32>, vector<1x128xf32> -> vector<2x128xf32>
    %cst_134 = arith.constant dense<0.000000e+00> : vector<2x8xf32>
    %285 = tpu.matmul %284, %220, %cst_134 {dimension_numbers = #tpu.dot_dimension_numbers<[1], [0], [0], [1], [0, 0, 1, 1], [], []>} : vector<2x128xf32>, vector<128x8xf32>, vector<2x8xf32> -> vector<2x8xf32>
    %286 = vector.extract_strided_slice %285 {offsets = [0, 0], sizes = [1, 8], strides = [1, 1]} : vector<2x8xf32> to vector<1x8xf32>
    %cst_135 = arith.constant 0.001953125 : f32
    %287 = vector.broadcast %cst_135 : f32 to vector<1x8xf32>
    %288 = arith.mulf %286, %287 : vector<1x8xf32>
    %289 = vector.extract_strided_slice %285 {offsets = [1, 0], sizes = [1, 8], strides = [1, 1]} : vector<2x8xf32> to vector<1x8xf32>
    %cst_136 = arith.constant 0.001953125 : f32
    %290 = vector.broadcast %cst_136 : f32 to vector<1x8xf32>
    %291 = arith.mulf %289, %290 : vector<1x8xf32>
    %292 = arith.mulf %288, %288 : vector<1x8xf32>
    %293 = arith.subf %291, %292 : vector<1x8xf32>
    %cst_137 = arith.constant 0.000000e+00 : f32
    %294 = vector.broadcast %cst_137 : f32 to vector<1x8xf32>
    %295 = arith.maximumf %293, %294 : vector<1x8xf32>
    %cst_138 = arith.constant 9.99999974E-6 : f32
    %296 = vector.broadcast %cst_138 : f32 to vector<1x8xf32>
    %297 = arith.addf %295, %296 : vector<1x8xf32>
    %298 = math.rsqrt %297 : vector<1x8xf32>
    %299 = arith.mulf %277, %298 : vector<1x8xf32>
    %300 = arith.mulf %288, %299 : vector<1x8xf32>
    %301 = arith.subf %278, %300 : vector<1x8xf32>
    %302 = tpu.concatenate %299, %301 in 0 : vector<1x8xf32>, vector<1x8xf32> -> vector<2x8xf32>
    %cst_139 = arith.constant dense<0.000000e+00> : vector<2x128xf32>
    %303 = tpu.matmul %302, %221, %cst_139 {dimension_numbers = #tpu.dot_dimension_numbers<[1], [0], [0], [1], [0, 0, 1, 1], [], []>} : vector<2x8xf32>, vector<8x128xf32>, vector<2x128xf32> -> vector<2x128xf32>
    %304 = vector.extract_strided_slice %303 {offsets = [0, 0], sizes = [1, 128], strides = [1, 1]} : vector<2x128xf32> to vector<1x128xf32>
    %305 = vector.broadcast %304 : vector<1x128xf32> to vector<32x128xf32>
    %306 = arith.mulf %276, %305 : vector<32x128xf32>
    %307 = vector.extract_strided_slice %303 {offsets = [1, 0], sizes = [1, 128], strides = [1, 1]} : vector<2x128xf32> to vector<1x128xf32>
    %308 = vector.broadcast %307 : vector<1x128xf32> to vector<32x128xf32>
    %309 = arith.addf %306, %308 : vector<32x128xf32>
    %cst_140 = arith.constant 0.000000e+00 : f32
    %310 = vector.broadcast %cst_140 : f32 to vector<32x128xf32>
    %311 = arith.maximumf %309, %310 : vector<32x128xf32>
    %cst_141 = arith.constant 0.000000e+00 : f32
    %312 = vector.broadcast %cst_141 : f32 to vector<1x128xf32>
    %313 = tpu.iota {dimensions = array<i32: 0>} : vector<32x128xi32>
    %314 = vector.extract_strided_slice %311 {offsets = [0, 0], sizes = [31, 128], strides = [1, 1]} : vector<32x128xf32> to vector<31x128xf32>
    %315 = tpu.concatenate %312, %314 in 0 : vector<1x128xf32>, vector<31x128xf32> -> vector<32x128xf32>
    %c16_i32_142 = arith.constant 16 : i32
    %c0_i32_143 = arith.constant 0 : i32
    %316 = arith.cmpi eq, %c16_i32_142, %c0_i32_143 : i32
    %c1_i32_144 = arith.constant 1 : i32
    %317 = arith.select %316, %c1_i32_144, %c16_i32_142 : i32
    %318 = vector.broadcast %317 : i32 to vector<32x128xi32>
    %319 = arith.remsi %313, %318 : vector<32x128xi32>
    %c0_i32_145 = arith.constant 0 : i32
    %320 = vector.broadcast %c0_i32_145 : i32 to vector<32x128xi32>
    %321 = arith.cmpi ne, %319, %320 : vector<32x128xi32>
    %c0_i32_146 = arith.constant 0 : i32
    %322 = vector.broadcast %c0_i32_146 : i32 to vector<32x128xi32>
    %323 = arith.cmpi slt, %319, %322 : vector<32x128xi32>
    %c0_i32_147 = arith.constant 0 : i32
    %324 = arith.cmpi slt, %317, %c0_i32_147 : i32
    %325 = vector.broadcast %324 : i1 to vector<32x128xi1>
    %326 = vector.broadcast %325 : vector<32x128xi1> to vector<32x128xi1>
    %327 = arith.xori %323, %326 : vector<32x128xi1>
    %328 = arith.andi %327, %321 : vector<32x128xi1>
    %329 = vector.broadcast %317 : i32 to vector<32x128xi32>
    %330 = arith.addi %319, %329 : vector<32x128xi32>
    %331 = arith.select %328, %330, %319 : vector<32x128xi1>, vector<32x128xi32>
    %c0_i32_148 = arith.constant 0 : i32
    %332 = vector.broadcast %c0_i32_148 : i32 to vector<32x128xi32>
    %333 = arith.cmpi eq, %331, %332 : vector<32x128xi32>
    %cst_149 = arith.constant 0.000000e+00 : f32
    %334 = vector.broadcast %cst_149 : f32 to vector<32x128xf32>
    %335 = arith.select %333, %334, %315 : vector<32x128xi1>, vector<32x128xf32>
    %336 = vector.extract_strided_slice %311 {offsets = [1, 0], sizes = [31, 128], strides = [1, 1]} : vector<32x128xf32> to vector<31x128xf32>
    %337 = tpu.concatenate %336, %312 in 0 : vector<31x128xf32>, vector<1x128xf32> -> vector<32x128xf32>
    %c16_i32_150 = arith.constant 16 : i32
    %c0_i32_151 = arith.constant 0 : i32
    %338 = arith.cmpi eq, %c16_i32_150, %c0_i32_151 : i32
    %c1_i32_152 = arith.constant 1 : i32
    %339 = arith.select %338, %c1_i32_152, %c16_i32_150 : i32
    %340 = vector.broadcast %339 : i32 to vector<32x128xi32>
    %341 = arith.remsi %313, %340 : vector<32x128xi32>
    %c0_i32_153 = arith.constant 0 : i32
    %342 = vector.broadcast %c0_i32_153 : i32 to vector<32x128xi32>
    %343 = arith.cmpi ne, %341, %342 : vector<32x128xi32>
    %c0_i32_154 = arith.constant 0 : i32
    %344 = vector.broadcast %c0_i32_154 : i32 to vector<32x128xi32>
    %345 = arith.cmpi slt, %341, %344 : vector<32x128xi32>
    %c0_i32_155 = arith.constant 0 : i32
    %346 = arith.cmpi slt, %339, %c0_i32_155 : i32
    %347 = vector.broadcast %346 : i1 to vector<32x128xi1>
    %348 = vector.broadcast %347 : vector<32x128xi1> to vector<32x128xi1>
    %349 = arith.xori %345, %348 : vector<32x128xi1>
    %350 = arith.andi %349, %343 : vector<32x128xi1>
    %351 = vector.broadcast %339 : i32 to vector<32x128xi32>
    %352 = arith.addi %341, %351 : vector<32x128xi32>
    %353 = arith.select %350, %352, %341 : vector<32x128xi1>, vector<32x128xi32>
    %c15_i32_156 = arith.constant 15 : i32
    %354 = vector.broadcast %c15_i32_156 : i32 to vector<32x128xi32>
    %355 = arith.cmpi eq, %353, %354 : vector<32x128xi32>
    %cst_157 = arith.constant 0.000000e+00 : f32
    %356 = vector.broadcast %cst_157 : f32 to vector<32x128xf32>
    %357 = arith.select %355, %356, %337 : vector<32x128xi1>, vector<32x128xf32>
    %358 = arith.truncf %335 : vector<32x128xf32> to vector<32x128xbf16>
    %c0_158 = arith.constant 0 : index
    %c0_159 = arith.constant 0 : index
    %359 = vector.load %arg22[%c0_158, %c0_159] : memref<32x384xbf16, #tpu.memory_space<vmem>>, vector<32x128xbf16>
    tpu.vector_store %arg22[%c0_158, %c0_159], %358 {strides = array<i32>} : memref<32x384xbf16, #tpu.memory_space<vmem>>, vector<32x128xbf16>,
    %360 = arith.truncf %311 : vector<32x128xf32> to vector<32x128xbf16>
    %c0_160 = arith.constant 0 : index
    %c128_161 = arith.constant 128 : index
    %361 = vector.load %arg22[%c0_160, %c128_161] : memref<32x384xbf16, #tpu.memory_space<vmem>>, vector<32x128xbf16>
    tpu.vector_store %arg22[%c0_160, %c128_161], %360 {strides = array<i32>} : memref<32x384xbf16, #tpu.memory_space<vmem>>, vector<32x128xbf16>,
    %362 = arith.truncf %357 : vector<32x128xf32> to vector<32x128xbf16>
    %c0_162 = arith.constant 0 : index
    %c256_163 = arith.constant 256 : index
    %363 = vector.load %arg22[%c0_162, %c256_163] : memref<32x384xbf16, #tpu.memory_space<vmem>>, vector<32x128xbf16>
    tpu.vector_store %arg22[%c0_162, %c256_163], %362 {strides = array<i32>} : memref<32x384xbf16, #tpu.memory_space<vmem>>, vector<32x128xbf16>,
    %c0_164 = arith.constant 0 : index
    %c0_165 = arith.constant 0 : index
    %364 = vector.load %arg22[%c0_164, %c0_165] : memref<32x384xbf16, #tpu.memory_space<vmem>>, vector<32x384xbf16>
    %c0_166 = arith.constant 0 : index
    %c0_167 = arith.constant 0 : index
    %365 = vector.load %arg16[%c0_166, %c0_167] : memref<384x128xbf16, #tpu.memory_space<vmem>>, vector<384x128xbf16>
    %cst_168 = arith.constant dense<0.000000e+00> : vector<32x128xf32>
    %366 = tpu.matmul %364, %365, %cst_168 {dimension_numbers = #tpu.dot_dimension_numbers<[1], [0], [0], [1], [0, 0, 1, 1], [], []>} : vector<32x384xbf16>, vector<384x128xbf16>, vector<32x128xf32> -> vector<32x128xf32>
    %c0_169 = arith.constant 0 : index
    %c0_170 = arith.constant 0 : index
    %367 = vector.load %arg17[%c0_169, %c0_170] : memref<1x8xf32, #tpu.memory_space<vmem>>, vector<1x8xf32>
    %c0_171 = arith.constant 0 : index
    %c0_172 = arith.constant 0 : index
    %368 = vector.load %arg18[%c0_171, %c0_172] : memref<1x8xf32, #tpu.memory_space<vmem>>, vector<1x8xf32>
    %cst_173 = arith.constant dense<0.000000e+00> : vector<128xf32>
    %369 = vector.multi_reduction <add>, %366, %cst_173 [0] : vector<32x128xf32> to vector<128xf32>
    %370 = vector.shape_cast %369 : vector<128xf32> to vector<1x128xf32>
    %371 = arith.mulf %366, %366 : vector<32x128xf32>
    %cst_174 = arith.constant dense<0.000000e+00> : vector<128xf32>
    %372 = vector.multi_reduction <add>, %371, %cst_174 [0] : vector<32x128xf32> to vector<128xf32>
    %373 = vector.shape_cast %372 : vector<128xf32> to vector<1x128xf32>
    %374 = tpu.concatenate %370, %373 in 0 : vector<1x128xf32>, vector<1x128xf32> -> vector<2x128xf32>
    %cst_175 = arith.constant dense<0.000000e+00> : vector<2x8xf32>
    %375 = tpu.matmul %374, %220, %cst_175 {dimension_numbers = #tpu.dot_dimension_numbers<[1], [0], [0], [1], [0, 0, 1, 1], [], []>} : vector<2x128xf32>, vector<128x8xf32>, vector<2x8xf32> -> vector<2x8xf32>
    %376 = vector.extract_strided_slice %375 {offsets = [0, 0], sizes = [1, 8], strides = [1, 1]} : vector<2x8xf32> to vector<1x8xf32>
    %cst_176 = arith.constant 0.001953125 : f32
    %377 = vector.broadcast %cst_176 : f32 to vector<1x8xf32>
    %378 = arith.mulf %376, %377 : vector<1x8xf32>
    %379 = vector.extract_strided_slice %375 {offsets = [1, 0], sizes = [1, 8], strides = [1, 1]} : vector<2x8xf32> to vector<1x8xf32>
    %cst_177 = arith.constant 0.001953125 : f32
    %380 = vector.broadcast %cst_177 : f32 to vector<1x8xf32>
    %381 = arith.mulf %379, %380 : vector<1x8xf32>
    %382 = arith.mulf %378, %378 : vector<1x8xf32>
    %383 = arith.subf %381, %382 : vector<1x8xf32>
    %cst_178 = arith.constant 0.000000e+00 : f32
    %384 = vector.broadcast %cst_178 : f32 to vector<1x8xf32>
    %385 = arith.maximumf %383, %384 : vector<1x8xf32>
    %cst_179 = arith.constant 9.99999974E-6 : f32
    %386 = vector.broadcast %cst_179 : f32 to vector<1x8xf32>
    %387 = arith.addf %385, %386 : vector<1x8xf32>
    %388 = math.rsqrt %387 : vector<1x8xf32>
    %389 = arith.mulf %367, %388 : vector<1x8xf32>
    %390 = arith.mulf %378, %389 : vector<1x8xf32>
    %391 = arith.subf %368, %390 : vector<1x8xf32>
    %392 = tpu.concatenate %389, %391 in 0 : vector<1x8xf32>, vector<1x8xf32> -> vector<2x8xf32>
    %cst_180 = arith.constant dense<0.000000e+00> : vector<2x128xf32>
    %393 = tpu.matmul %392, %221, %cst_180 {dimension_numbers = #tpu.dot_dimension_numbers<[1], [0], [0], [1], [0, 0, 1, 1], [], []>} : vector<2x8xf32>, vector<8x128xf32>, vector<2x128xf32> -> vector<2x128xf32>
    %394 = vector.extract_strided_slice %393 {offsets = [0, 0], sizes = [1, 128], strides = [1, 1]} : vector<2x128xf32> to vector<1x128xf32>
    %395 = vector.broadcast %394 : vector<1x128xf32> to vector<32x128xf32>
    %396 = arith.mulf %366, %395 : vector<32x128xf32>
    %397 = vector.extract_strided_slice %393 {offsets = [1, 0], sizes = [1, 128], strides = [1, 1]} : vector<2x128xf32> to vector<1x128xf32>
    %398 = vector.broadcast %397 : vector<1x128xf32> to vector<32x128xf32>
    %399 = arith.addf %396, %398 : vector<32x128xf32>
    %400 = arith.addf %399, %219 : vector<32x128xf32>
    %cst_181 = arith.constant 0.000000e+00 : f32
    %401 = vector.broadcast %cst_181 : f32 to vector<32x128xf32>
    %402 = arith.maximumf %400, %401 : vector<32x128xf32>
    %c0_182 = arith.constant 0 : index
    %c0_183 = arith.constant 0 : index
    %403 = vector.load %arg21[%c0_182, %c0_183] : memref<32x128xf32, #tpu.memory_space<vmem>>, vector<32x128xf32>
    tpu.vector_store %arg21[%c0_182, %c0_183], %402 {strides = array<i32>} : memref<32x128xf32, #tpu.memory_space<vmem>>, vector<32x128xf32>,
    return
  }
  func.func @transform_0(%arg0: i32) -> (i32, i32) {
    %c0_i32 = arith.constant 0 : i32
    %c0_i32_0 = arith.constant 0 : i32
    %c0_i32_1 = arith.constant 0 : i32
    return %c0_i32, %c0_i32_0 : i32, i32
  }
  func.func @transform_1(%arg0: i32) -> (i32, i32) {
    %c0_i32 = arith.constant 0 : i32
    %c0_i32_0 = arith.constant 0 : i32
    %c0_i32_1 = arith.constant 0 : i32
    return %c0_i32, %c0_i32_0 : i32, i32
  }
  func.func @transform_2(%arg0: i32) -> (i32, i32) {
    %c0_i32 = arith.constant 0 : i32
    %c0_i32_0 = arith.constant 0 : i32
    %c0_i32_1 = arith.constant 0 : i32
    return %c0_i32, %c0_i32_0 : i32, i32
  }
  func.func @transform_3(%arg0: i32) -> (i32, i32) {
    %c0_i32 = arith.constant 0 : i32
    %c0_i32_0 = arith.constant 0 : i32
    %c0_i32_1 = arith.constant 0 : i32
    return %c0_i32, %c0_i32_0 : i32, i32
  }
  func.func @transform_4(%arg0: i32) -> (i32, i32) {
    %c0_i32 = arith.constant 0 : i32
    %c0_i32_0 = arith.constant 0 : i32
    %c0_i32_1 = arith.constant 0 : i32
    return %c0_i32, %c0_i32_0 : i32, i32
  }
  func.func @transform_5(%arg0: i32) -> (i32, i32) {
    %c0_i32 = arith.constant 0 : i32
    %c0_i32_0 = arith.constant 0 : i32
    %c0_i32_1 = arith.constant 0 : i32
    return %c0_i32, %c0_i32_0 : i32, i32
  }
  func.func @transform_6(%arg0: i32) -> (i32, i32) {
    %c0_i32 = arith.constant 0 : i32
    %c0_i32_0 = arith.constant 0 : i32
    %c0_i32_1 = arith.constant 0 : i32
    return %c0_i32, %c0_i32_0 : i32, i32
  }
  func.func @transform_7(%arg0: i32) -> (i32, i32) {
    %c0_i32 = arith.constant 0 : i32
    %c0_i32_0 = arith.constant 0 : i32
    %c0_i32_1 = arith.constant 0 : i32
    return %c0_i32, %c0_i32_0 : i32, i32
  }
  func.func @transform_8(%arg0: i32) -> (i32, i32) {
    %c0_i32 = arith.constant 0 : i32
    %c0_i32_0 = arith.constant 0 : i32
    %c0_i32_1 = arith.constant 0 : i32
    return %c0_i32, %c0_i32_0 : i32, i32
  }
  func.func @transform_9(%arg0: i32) -> (i32, i32) {
    %c0_i32 = arith.constant 0 : i32
    %c0_i32_0 = arith.constant 0 : i32
    %c0_i32_1 = arith.constant 0 : i32
    return %c0_i32, %c0_i32_0 : i32, i32
  }
  func.func @transform_10(%arg0: i32) -> (i32, i32) {
    %c0_i32 = arith.constant 0 : i32
    %c0_i32_0 = arith.constant 0 : i32
    %c0_i32_1 = arith.constant 0 : i32
    return %c0_i32, %c0_i32_0 : i32, i32
  }
  func.func @transform_11(%arg0: i32) -> (i32, i32) {
    %c0_i32 = arith.constant 0 : i32
    %c0_i32_0 = arith.constant 0 : i32
    %c0_i32_1 = arith.constant 0 : i32
    return %c0_i32, %c0_i32_0 : i32, i32
  }
  func.func @transform_12(%arg0: i32) -> (i32, i32) {
    %c0_i32 = arith.constant 0 : i32
    %c0_i32_0 = arith.constant 0 : i32
    %c0_i32_1 = arith.constant 0 : i32
    return %c0_i32, %c0_i32_0 : i32, i32
  }
  func.func @transform_13(%arg0: i32) -> (i32, i32) {
    %c0_i32 = arith.constant 0 : i32
    %c0_i32_0 = arith.constant 0 : i32
    %c0_i32_1 = arith.constant 0 : i32
    return %c0_i32, %c0_i32_0 : i32, i32
  }
  func.func @transform_14(%arg0: i32) -> (i32, i32) {
    %c0_i32 = arith.constant 0 : i32
    %c0_i32_0 = arith.constant 0 : i32
    %c0_i32_1 = arith.constant 0 : i32
    return %c0_i32, %c0_i32_0 : i32, i32
  }
  func.func @transform_15(%arg0: i32) -> (i32, i32) {
    %c0_i32 = arith.constant 0 : i32
    %c0_i32_0 = arith.constant 0 : i32
    %c0_i32_1 = arith.constant 0 : i32
    return %c0_i32, %c0_i32_0 : i32, i32
  }
  func.func @transform_16(%arg0: i32) -> (i32, i32) {
    %c0_i32 = arith.constant 0 : i32
    %c0_i32_0 = arith.constant 0 : i32
    %c0_i32_1 = arith.constant 0 : i32
    return %c0_i32, %c0_i32_0 : i32, i32
  }
  func.func @transform_17(%arg0: i32) -> (i32, i32) {
    %c0_i32 = arith.constant 0 : i32
    %c0_i32_0 = arith.constant 0 : i32
    %c0_i32_1 = arith.constant 0 : i32
    return %c0_i32, %c0_i32_0 : i32, i32
  }
  func.func @transform_18(%arg0: i32) -> (i32, i32) {
    %c0_i32 = arith.constant 0 : i32
    %c0_i32_0 = arith.constant 0 : i32
    %c0_i32_1 = arith.constant 0 : i32
    return %c0_i32, %c0_i32_0 : i32, i32
  }
  func.func @transform_19(%arg0: i32) -> (i32, i32) {
    %c0_i32 = arith.constant 0 : i32
    %c0_i32_0 = arith.constant 0 : i32
    %c0_i32_1 = arith.constant 0 : i32
    return %c0_i32, %c0_i32_0 : i32, i32
  }
  func.func @transform_20(%arg0: i32) -> (i32, i32) {
    %c0_i32 = arith.constant 0 : i32
    %c0_i32_0 = arith.constant 0 : i32
    %c0_i32_1 = arith.constant 0 : i32
    return %c0_i32, %c0_i32_0 : i32, i32
  }
}

</mosaic_0001>

<llo_original>
// kernel: tpu_custom_call.1
$region0: #{tpu_custom_call.1}
  #allocation0 [shape = 'u32[]', space=smem, size = 0x4, offset = 0x4, fixed_abs, tag = 'smem constant byte address 0x4 - core index']
  #allocation1 [shape = 'u32[144,128]{1,0:T(1,128)}', space=vmem, size = 0x12000, scoped, tag = 'internal scratch']
  #allocation2 [shape = 'bf16[32,384]{1,0:T(8,128)(2,1)}', space=vmem, size = 0x6000, scoped, tag = 'scratch operand']
  %s0 = inlined_call_operand.vmem [shape: f32[32,64], index: 0, kind: input, shape index: {}]
  %s1 = inlined_call_operand.hbm [shape: bf16[192,128], index: 1, kind: input, shape index: {}]
  %s2 = inlined_call_operand.hbm [shape: f32[1,8], index: 2, kind: input, shape index: {}]
  %s3 = inlined_call_operand.hbm [shape: f32[1,8], index: 3, kind: input, shape index: {}]
  %s4 = inlined_call_operand.vmem [shape: bf16[384,128], index: 4, kind: input, shape index: {}]
  %s5 = inlined_call_operand.hbm [shape: f32[1,8], index: 5, kind: input, shape index: {}]
  %s6 = inlined_call_operand.hbm [shape: f32[1,8], index: 6, kind: input, shape index: {}]
  %s7 = inlined_call_operand.vmem [shape: bf16[64,128], index: 7, kind: input, shape index: {}]
  %s8 = inlined_call_operand.hbm [shape: f32[1,8], index: 8, kind: input, shape index: {}]
  %s9 = inlined_call_operand.hbm [shape: f32[1,8], index: 9, kind: input, shape index: {}]
  %s10 = inlined_call_operand.vmem [shape: f32[128,8], index: 10, kind: input, shape index: {}]
  %s11 = inlined_call_operand.vmem [shape: f32[8,128], index: 11, kind: input, shape index: {}]
  %s12 = inlined_call_operand.hbm [shape: bf16[384,128], index: 12, kind: input, shape index: {}]
  %s13 = inlined_call_operand.vmem [shape: f32[1,8], index: 13, kind: input, shape index: {}]
  %s14 = inlined_call_operand.vmem [shape: f32[1,8], index: 14, kind: input, shape index: {}]
  %s15 = inlined_call_operand.hbm [shape: bf16[384,128], index: 15, kind: input, shape index: {}]
  %s16 = inlined_call_operand.vmem [shape: f32[1,8], index: 16, kind: input, shape index: {}]
  %s17 = inlined_call_operand.vmem [shape: f32[1,8], index: 17, kind: input, shape index: {}]
  %s18 = inlined_call_operand.vmem [shape: f32[128,8], index: 18, kind: input, shape index: {}]
  %s19 = inlined_call_operand.vmem [shape: f32[8,128], index: 19, kind: input, shape index: {}]
  %s20 = inlined_call_operand.hbm [shape: f32[32,128], index: 20, kind: output, shape index: {}]
  %s21 = sld [smem:[#allocation0]]
  $region126: #{tpu_custom_call.1} parent=0
    _
  %s23 = ssub.s32 1, %s21
  %s24 = scalar_select 0, %s23, %s21
  $region1: #{tpu_custom_call.1} parent=0
    #allocation3 [shape = 'u8[49152]{0}', space=vmem, size = 0xc000, scoped, tag = 'input window, operand 1, single buffered']
    #allocation4 [shape = 's32[1]{0}', space=sflag, size = 0x4, scoped, tag = 'scoped memory for tpu_custom_call.1']
    #allocation5 [shape = 's32[1]{0}', space=sflag, size = 0x4, scoped, tag = 'scoped memory for tpu_custom_call.1']
    #allocation6 [shape = 'u8[512]{0}', space=vmem, size = 0x400, scoped, tag = 'input window, operand 2, single buffered']
    #allocation7 [shape = 's32[1]{0}', space=sflag, size = 0x4, scoped, tag = 'scoped memory for tpu_custom_call.1']
    #allocation8 [shape = 'u8[512]{0}', space=vmem, size = 0x400, scoped, tag = 'input window, operand 3, single buffered']
    #allocation9 [shape = 'u8[512]{0}', space=vmem, size = 0x400, scoped, tag = 'input window, operand 5, single buffered']
    #allocation10 [shape = 's32[1]{0}', space=sflag, size = 0x4, scoped, tag = 'scoped memory for tpu_custom_call.1']
    #allocation11 [shape = 'u8[512]{0}', space=vmem, size = 0x400, scoped, tag = 'input window, operand 6, single buffered']
    #allocation12 [shape = 'u8[512]{0}', space=vmem, size = 0x400, scoped, tag = 'input window, operand 8, single buffered']
    #allocation13 [shape = 's32[1]{0}', space=sflag, size = 0x4, scoped, tag = 'scoped memory for tpu_custom_call.1']
    #allocation14 [shape = 'u8[512]{0}', space=vmem, size = 0x400, scoped, tag = 'input window, operand 9, single buffered']
    #allocation15 [shape = 'u8[98304]{0}', space=vmem, size = 0x18000, scoped, tag = 'input window, operand 12, single buffered']
    #allocation16 [shape = 's32[1]{0}', space=sflag, size = 0x4, scoped, tag = 'scoped memory for tpu_custom_call.1']
    #allocation17 [shape = 'u8[98304]{0}', space=vmem, size = 0x18000, scoped, tag = 'input window, operand 15, single buffered']
    #allocation18 [shape = 'u8[16384]{0}', space=vmem, size = 0x4000, scoped, tag = 'output window, operand 0, single buffered']
    %25 = vsyncpa [#allocation4], 0
    %26 = vsyncpa [#allocation7], 0
    %27 = vsyncpa [#allocation10], 0
    %28 = vsyncpa [#allocation13], 0
    %29 = vsyncpa [#allocation16], 0
    %30 = vsyncpa [#allocation5], 0
    // Predicated region
    $region2: #{tpu_custom_call.1} parent=1 // pred_check
      _
    $region3: #{tpu_custom_call.1} parent=1 // pred_check_branch
      %32 = sbr.rel (0) target = $region5
    $region4: #{tpu_custom_call.1} parent=1 // pred_region
      _
    $region5: #{tpu_custom_call.1} parent=1 // pred_fallthru
      _
    // Predicated region
    $region6: #{tpu_custom_call.1} parent=1 // pred_check
      _
    $region7: #{tpu_custom_call.1} parent=1 // pred_check_branch
      %34 = sbr.rel (0) target = $region9
    $region8: #{tpu_custom_call.1} parent=1 // pred_region
      %s36 = ssub.s32 1536, 1536
      %37 = vsyncadd [#allocation4], %s36
      %s38 = sshll.u32 [#allocation3], 4
      %s39 = int_to_ptr.vmem [resolvable:$true] %s38
      %44 = dma.hbm_to_vmem [thread:$0]  %s1, 1536, %s39, [#allocation4], 64, 64, 4
    $region9: #{tpu_custom_call.1} parent=1 // pred_fallthru
      _
    // Predicated region
    $region10: #{tpu_custom_call.1} parent=1 // pred_check
      _
    $region11: #{tpu_custom_call.1} parent=1 // pred_check_branch
      %46 = sbr.rel (0) target = $region13
    $region12: #{tpu_custom_call.1} parent=1 // pred_region
      %s48 = ssub.s32 16, 16
      %49 = vsyncadd [#allocation7], %s48
      %s51 = sshll.u32 [#allocation6], 4
      %s52 = int_to_ptr.vmem [resolvable:$true] %s51
      %54 = dma.hbm_to_vmem [thread:$0]  %s2, 16, %s52, [#allocation7]
    $region13: #{tpu_custom_call.1} parent=1 // pred_fallthru
      _
    // Predicated region
    $region14: #{tpu_custom_call.1} parent=1 // pred_check
      _
    $region15: #{tpu_custom_call.1} parent=1 // pred_check_branch
      %56 = sbr.rel (0) target = $region17
    $region16: #{tpu_custom_call.1} parent=1 // pred_region
      %s58 = ssub.s32 16, 16
      %59 = vsyncadd [#allocation7], %s58
      %s61 = sshll.u32 [#allocation8], 4
      %s62 = int_to_ptr.vmem [resolvable:$true] %s61
      %64 = dma.hbm_to_vmem [thread:$0]  %s3, 16, %s62, [#allocation7]
    $region17: #{tpu_custom_call.1} parent=1 // pred_fallthru
      _
    // Predicated region
    $region18: #{tpu_custom_call.1} parent=1 // pred_check
      _
    $region19: #{tpu_custom_call.1} parent=1 // pred_check_branch
      %66 = sbr.rel (0) target = $region21
    $region20: #{tpu_custom_call.1} parent=1 // pred_region
      _
    $region21: #{tpu_custom_call.1} parent=1 // pred_fallthru
      _
    // Predicated region
    $region22: #{tpu_custom_call.1} parent=1 // pred_check
      _
    $region23: #{tpu_custom_call.1} parent=1 // pred_check_branch
      %68 = sbr.rel (0) target = $region25
    $region24: #{tpu_custom_call.1} parent=1 // pred_region
      %s70 = ssub.s32 16, 16
      %71 = vsyncadd [#allocation10], %s70
      %s73 = sshll.u32 [#allocation9], 4
      %s74 = int_to_ptr.vmem [resolvable:$true] %s73
      %76 = dma.hbm_to_vmem [thread:$0]  %s5, 16, %s74, [#allocation10]
    $region25: #{tpu_custom_call.1} parent=1 // pred_fallthru
      _
    // Predicated region
    $region26: #{tpu_custom_call.1} parent=1 // pred_check
      _
    $region27: #{tpu_custom_call.1} parent=1 // pred_check_branch
      %78 = sbr.rel (0) target = $region29
    $region28: #{tpu_custom_call.1} parent=1 // pred_region
      %s80 = ssub.s32 16, 16
      %81 = vsyncadd [#allocation10], %s80
      %s83 = sshll.u32 [#allocation11], 4
      %s84 = int_to_ptr.vmem [resolvable:$true] %s83
      %86 = dma.hbm_to_vmem [thread:$0]  %s6, 16, %s84, [#allocation10]
    $region29: #{tpu_custom_call.1} parent=1 // pred_fallthru
      _
    // Predicated region
    $region30: #{tpu_custom_call.1} parent=1 // pred_check
      _
    $region31: #{tpu_custom_call.1} parent=1 // pred_check_branch
      %88 = sbr.rel (0) target = $region33
    $region32: #{tpu_custom_call.1} parent=1 // pred_region
      _
    $region33: #{tpu_custom_call.1} parent=1 // pred_fallthru
      _
    // Predicated region
    $region34: #{tpu_custom_call.1} parent=1 // pred_check
      _
    $region35: #{tpu_custom_call.1} parent=1 // pred_check_branch
      %90 = sbr.rel (0) target = $region37
    $region36: #{tpu_custom_call.1} parent=1 // pred_region
      %s92 = ssub.s32 16, 16
      %93 = vsyncadd [#allocation13], %s92
      %s95 = sshll.u32 [#allocation12], 4
      %s96 = int_to_ptr.vmem [resolvable:$true] %s95
      %98 = dma.hbm_to_vmem [thread:$0]  %s8, 16, %s96, [#allocation13]
    $region37: #{tpu_custom_call.1} parent=1 // pred_fallthru
      _
    // Predicated region
    $region38: #{tpu_custom_call.1} parent=1 // pred_check
      _
    $region39: #{tpu_custom_call.1} parent=1 // pred_check_branch
      %100 = sbr.rel (0) target = $region41
    $region40: #{tpu_custom_call.1} parent=1 // pred_region
      %s102 = ssub.s32 16, 16
      %103 = vsyncadd [#allocation13], %s102
      %s105 = sshll.u32 [#allocation14], 4
      %s106 = int_to_ptr.vmem [resolvable:$true] %s105
      %108 = dma.hbm_to_vmem [thread:$0]  %s9, 16, %s106, [#allocation13]
    $region41: #{tpu_custom_call.1} parent=1 // pred_fallthru
      _
    // Predicated region
    $region42: #{tpu_custom_call.1} parent=1 // pred_check
      _
    $region43: #{tpu_custom_call.1} parent=1 // pred_check_branch
      %110 = sbr.rel (0) target = $region45
    $region44: #{tpu_custom_call.1} parent=1 // pred_region
      _
    $region45: #{tpu_custom_call.1} parent=1 // pred_fallthru
      _
    // Predicated region
    $region46: #{tpu_custom_call.1} parent=1 // pred_check
      _
    $region47: #{tpu_custom_call.1} parent=1 // pred_check_branch
      %112 = sbr.rel (0) target = $region49
    $region48: #{tpu_custom_call.1} parent=1 // pred_region
      _
    $region49: #{tpu_custom_call.1} parent=1 // pred_fallthru
      _
    // Predicated region
    $region50: #{tpu_custom_call.1} parent=1 // pred_check
      _
    $region51: #{tpu_custom_call.1} parent=1 // pred_check_branch
      %114 = sbr.rel (0) target = $region53
    $region52: #{tpu_custom_call.1} parent=1 // pred_region
      %s116 = ssub.s32 3072, 3072
      %117 = vsyncadd [#allocation16], %s116
      %s118 = sshll.u32 [#allocation15], 4
      %s119 = int_to_ptr.vmem [resolvable:$true] %s118
      %124 = dma.hbm_to_vmem [thread:$0]  %s12, 3072, %s119, [#allocation16], 64, 64, 4
    $region53: #{tpu_custom_call.1} parent=1 // pred_fallthru
      _
    // Predicated region
    $region54: #{tpu_custom_call.1} parent=1 // pred_check
      _
    $region55: #{tpu_custom_call.1} parent=1 // pred_check_branch
      %126 = sbr.rel (0) target = $region57
    $region56: #{tpu_custom_call.1} parent=1 // pred_region
      _
    $region57: #{tpu_custom_call.1} parent=1 // pred_fallthru
      _
    // Predicated region
    $region58: #{tpu_custom_call.1} parent=1 // pred_check
      _
    $region59: #{tpu_custom_call.1} parent=1 // pred_check_branch
      %128 = sbr.rel (0) target = $region61
    $region60: #{tpu_custom_call.1} parent=1 // pred_region
      _
    $region61: #{tpu_custom_call.1} parent=1 // pred_fallthru
      _
    // Predicated region
    $region62: #{tpu_custom_call.1} parent=1 // pred_check
      _
    $region63: #{tpu_custom_call.1} parent=1 // pred_check_branch
      %130 = sbr.rel (0) target = $region65
    $region64: #{tpu_custom_call.1} parent=1 // pred_region
      %s132 = ssub.s32 3072, 3072
      %133 = vsyncadd [#allocation16], %s132
      %s134 = sshll.u32 [#allocation17], 4
      %s135 = int_to_ptr.vmem [resolvable:$true] %s134
      %140 = dma.hbm_to_vmem [thread:$0]  %s15, 3072, %s135, [#allocation16], 64, 64, 4
    $region65: #{tpu_custom_call.1} parent=1 // pred_fallthru
      _
    // Predicated region
    $region66: #{tpu_custom_call.1} parent=1 // pred_check
      _
    $region67: #{tpu_custom_call.1} parent=1 // pred_check_branch
      %142 = sbr.rel (0) target = $region69
    $region68: #{tpu_custom_call.1} parent=1 // pred_region
      _
    $region69: #{tpu_custom_call.1} parent=1 // pred_fallthru
      _
    // Predicated region
    $region70: #{tpu_custom_call.1} parent=1 // pred_check
      _
    $region71: #{tpu_custom_call.1} parent=1 // pred_check_branch
      %144 = sbr.rel (0) target = $region73
    $region72: #{tpu_custom_call.1} parent=1 // pred_region
      _
    $region73: #{tpu_custom_call.1} parent=1 // pred_fallthru
      _
    // Predicated region
    $region74: #{tpu_custom_call.1} parent=1 // pred_check
      _
    $region75: #{tpu_custom_call.1} parent=1 // pred_check_branch
      %146 = sbr.rel (0) target = $region77
    $region76: #{tpu_custom_call.1} parent=1 // pred_region
      _
    $region77: #{tpu_custom_call.1} parent=1 // pred_fallthru
      _
    // Predicated region
    $region78: #{tpu_custom_call.1} parent=1 // pred_check
      _
    $region79: #{tpu_custom_call.1} parent=1 // pred_check_branch
      %148 = sbr.rel (0) target = $region81
    $region80: #{tpu_custom_call.1} parent=1 // pred_region
      _
    $region81: #{tpu_custom_call.1} parent=1 // pred_fallthru
      _
    // Predicated region
    $region82: #{tpu_custom_call.1} parent=1 // pred_check
      _
    $region83: #{tpu_custom_call.1} parent=1 // pred_check_branch
      %150 = sbr.rel (0) target = $region85
    $region84: #{tpu_custom_call.1} parent=1 // pred_region
      %151 = dma.done [#allocation4], 1536
    $region85: #{tpu_custom_call.1} parent=1 // pred_fallthru
      _
    // Predicated region
    $region86: #{tpu_custom_call.1} parent=1 // pred_check
      _
    $region87: #{tpu_custom_call.1} parent=1 // pred_check_branch
      %153 = sbr.rel (0) target = $region89
    $region88: #{tpu_custom_call.1} parent=1 // pred_region
      %154 = dma.done [#allocation7], 16
    $region89: #{tpu_custom_call.1} parent=1 // pred_fallthru
      _
    // Predicated region
    $region90: #{tpu_custom_call.1} parent=1 // pred_check
      _
    $region91: #{tpu_custom_call.1} parent=1 // pred_check_branch
      %156 = sbr.rel (0) target = $region93
    $region92: #{tpu_custom_call.1} parent=1 // pred_region
      %157 = dma.done [#allocation7], 16
    $region93: #{tpu_custom_call.1} parent=1 // pred_fallthru
      _
    // Predicated region
    $region94: #{tpu_custom_call.1} parent=1 // pred_check
      _
    $region95: #{tpu_custom_call.1} parent=1 // pred_check_branch
      %159 = sbr.rel (0) target = $region97
    $region96: #{tpu_custom_call.1} parent=1 // pred_region
      %160 = dma.done [#allocation10], 16
    $region97: #{tpu_custom_call.1} parent=1 // pred_fallthru
      _
    // Predicated region
    $region98: #{tpu_custom_call.1} parent=1 // pred_check
      _
    $region99: #{tpu_custom_call.1} parent=1 // pred_check_branch
      %162 = sbr.rel (0) target = $region101
    $region100: #{tpu_custom_call.1} parent=1 // pred_region
      %163 = dma.done [#allocation10], 16
    $region101: #{tpu_custom_call.1} parent=1 // pred_fallthru
      _
    // Predicated region
    $region102: #{tpu_custom_call.1} parent=1 // pred_check
      _
    $region103: #{tpu_custom_call.1} parent=1 // pred_check_branch
      %165 = sbr.rel (0) target = $region105
    $region104: #{tpu_custom_call.1} parent=1 // pred_region
      %166 = dma.done [#allocation13], 16
    $region105: #{tpu_custom_call.1} parent=1 // pred_fallthru
      _
    // Predicated region
    $region106: #{tpu_custom_call.1} parent=1 // pred_check
      _
    $region107: #{tpu_custom_call.1} parent=1 // pred_check_branch
      %168 = sbr.rel (0) target = $region109
    $region108: #{tpu_custom_call.1} parent=1 // pred_region
      %169 = dma.done [#allocation13], 16
    $region109: #{tpu_custom_call.1} parent=1 // pred_fallthru
      _
    // Predicated region
    $region110: #{tpu_custom_call.1} parent=1 // pred_check
      _
    $region111: #{tpu_custom_call.1} parent=1 // pred_check_branch
      %171 = sbr.rel (0) target = $region113
    $region112: #{tpu_custom_call.1} parent=1 // pred_region
      %172 = dma.done [#allocation16], 3072
    $region113: #{tpu_custom_call.1} parent=1 // pred_fallthru
      _
    // Predicated region
    $region114: #{tpu_custom_call.1} parent=1 // pred_check
      _
    $region115: #{tpu_custom_call.1} parent=1 // pred_check_branch
      %174 = sbr.rel (0) target = $region117
    $region116: #{tpu_custom_call.1} parent=1 // pred_region
      %175 = dma.done [#allocation16], 3072
    $region117: #{tpu_custom_call.1} parent=1 // pred_fallthru
      _
    %v177 = vld [vmem:[%s0] sm:$0xff]
    %v178 = vld [vmem:[%s0 + $0x8] sm:$0xff]
    %v179 = vld [vmem:[%s0 + $0x10] sm:$0xff]
    %v180 = vld [vmem:[%s0 + $0x18] sm:$0xff]
    %v181 = vld [vmem:[%s10] sm:$0xff]
    %v182 = vld [vmem:[%s10 + $0x8] sm:$0xff]
    %v183 = vld [vmem:[%s10 + $0x10] sm:$0xff]
    %v184 = vld [vmem:[%s10 + $0x18] sm:$0xff]
    %v185 = vld [vmem:[%s10 + $0x20] sm:$0xff]
    %v186 = vld [vmem:[%s10 + $0x28] sm:$0xff]
    %v187 = vld [vmem:[%s10 + $0x30] sm:$0xff]
    %v188 = vld [vmem:[%s10 + $0x38] sm:$0xff]
    %v189 = vld [vmem:[%s10 + $0x40] sm:$0xff]
    %v190 = vld [vmem:[%s10 + $0x48] sm:$0xff]
    %v191 = vld [vmem:[%s10 + $0x50] sm:$0xff]
    %v192 = vld [vmem:[%s10 + $0x58] sm:$0xff]
    %v193 = vld [vmem:[%s10 + $0x60] sm:$0xff]
    %v194 = vld [vmem:[%s10 + $0x68] sm:$0xff]
    %v195 = vld [vmem:[%s10 + $0x70] sm:$0xff]
    %v196 = vld [vmem:[%s10 + $0x78] sm:$0xff]
    %v197 = vld [vmem:[%s11] sm:$0xff]
    %v198 = vlaneseq
    %v199 = vshrl.u32 %v198, 7
    %v200 = vadd.s32 %v199, 8
    %v201 = vadd.s32 %v199, 16
    %v202 = vadd.s32 %v199, 24
    %vm207 = vcmask 1040384
    %v208 = vrot.slane %v177, 7
    %v209 = vrot.slane %v178, 7
    %v210 = vsel %vm207, %v208, %v209
    %v211 = vrot.slane %v179, 7
    %v212 = vsel %vm207, %v209, %v211
    %v213 = vrot.slane %v180, 7
    %v214 = vsel %vm207, %v211, %v213
    %v219 = vsel %vm207, 0.0, %v208
    %vm220 = vcmp.lt.s32.totalorder %v199, 0
    %v221 = vsub.s32 0, %v199
    %v222 = vsel %vm220, %v221, %v199
    %v223 = vshrl.u32 %v222, 4
    %v224 = vand.u32 %v222, 15
    %v225 = vsub.s32 0, %v224
    %v226 = vsel %vm220, %v225, %v224
    %vm227 = vcmp.lt.s32.totalorder %v200, 0
    %v228 = vsub.s32 0, %v200
    %v229 = vsel %vm227, %v228, %v200
    %v230 = vshrl.u32 %v229, 4
    %v231 = vand.u32 %v229, 15
    %v232 = vsub.s32 0, %v231
    %v233 = vsel %vm227, %v232, %v231
    %vm234 = vcmp.lt.s32.totalorder %v201, 0
    %v235 = vsub.s32 0, %v201
    %v236 = vsel %vm234, %v235, %v201
    %v237 = vshrl.u32 %v236, 4
    %v238 = vand.u32 %v236, 15
    %v239 = vsub.s32 0, %v238
    %v240 = vsel %vm234, %v239, %v238
    %vm241 = vcmp.lt.s32.totalorder %v202, 0
    %v242 = vsub.s32 0, %v202
    %v243 = vsel %vm241, %v242, %v202
    %v244 = vshrl.u32 %v243, 4
    %v245 = vand.u32 %v243, 15
    %v246 = vsub.s32 0, %v245
    %v247 = vsel %vm241, %v246, %v245
    %vm248 = vcmp.ne.s32.totalorder %v226, 0
    %vm249 = vcmp.ne.s32.totalorder %v233, 0
    %vm250 = vcmp.ne.s32.totalorder %v240, 0
    %vm251 = vcmp.ne.s32.totalorder %v247, 0
    %vm252 = vcmp.lt.s32.totalorder %v226, 0
    %vm253 = vcmp.lt.s32.totalorder %v233, 0
    %vm254 = vcmp.lt.s32.totalorder %v240, 0
    %vm255 = vcmp.lt.s32.totalorder %v247, 0
    %vm256 = vmand %vm252, %vm248
    %vm257 = vmand %vm253, %vm249
    %vm258 = vmand %vm254, %vm250
    %vm259 = vmand %vm255, %vm251
    %v260 = vadd.s32 %v226, 16
    %v261 = vadd.s32 %v233, 16
    %v262 = vadd.s32 %v240, 16
    %v263 = vadd.s32 %v247, 16
    %v264 = vsel %vm256, %v260, %v226
    %v265 = vsel %vm257, %v261, %v233
    %v266 = vsel %vm258, %v262, %v240
    %v267 = vsel %vm259, %v263, %v247
    %vm268 = vcmp.eq.s32.totalorder %v264, 0
    %vm269 = vcmp.eq.s32.totalorder %v265, 0
    %vm270 = vcmp.eq.s32.totalorder %v266, 0
    %vm271 = vcmp.eq.s32.totalorder %v267, 0
    %v272 = vsel %vm268, 0.0, %v219
    %v273 = vsel %vm269, 0.0, %v210
    %v274 = vsel %vm270, 0.0, %v212
    %v275 = vsel %vm271, 0.0, %v214
    %vm276 = vcmask 1046528
    %v277 = vrot.slane %v177, 1
    %v278 = vrot.slane %v178, 1
    %v279 = vsel %vm276, %v277, %v278
    %v280 = vrot.slane %v179, 1
    %v281 = vsel %vm276, %v278, %v280
    %v282 = vrot.slane %v180, 1
    %v283 = vsel %vm276, %v280, %v282
    %v288 = vsel %vm276, %v282, 0.0
    %vm289 = vcmp.eq.s32.totalorder %v264, 15
    %vm290 = vcmp.eq.s32.totalorder %v265, 15
    %vm291 = vcmp.eq.s32.totalorder %v266, 15
    %vm292 = vcmp.eq.s32.totalorder %v267, 15
    %v293 = vsel %vm289, 0.0, %v279
    %v294 = vsel %vm290, 0.0, %v281
    %v295 = vsel %vm291, 0.0, %v283
    %v296 = vsel %vm292, 0.0, %v288
    %v297 = vpack.c.bf16 %v273, %v272
    %v298 = vpack.c.bf16 %v275, %v274
    %v301 = vunpack.c.l.b16 %v297
    %v302 = vunpack.c.h.b16 %v297
    %v303 = vunpack.c.l.b16 %v298
    %v304 = vunpack.c.h.b16 %v298
    %v305 = vpack.c.b16 %v301, %v301
    %v306 = vpack.c.b16 %v302, %v302
    %v307 = vpack.c.b16 %v303, %v303
    %v308 = vpack.c.b16 %v304, %v304
    %vm313 = vcmask 519168
    %314 = vst.msk [vmem:[#allocation2] sm:$0xf] %vm313, %v305
    %315 = vst.msk [vmem:[#allocation2 + $0xc] sm:$0xf] %vm313, %v306
    %316 = vst.msk [vmem:[#allocation2 + $0x18] sm:$0xf] %vm313, %v307
    %317 = vst.msk [vmem:[#allocation2 + $0x24] sm:$0xf] %vm313, %v308
    %v318 = vpack.c.bf16 %v178, %v177
    %v319 = vpack.c.bf16 %v180, %v179
    %v322 = vunpack.c.l.b16 %v318
    %v323 = vunpack.c.h.b16 %v318
    %v324 = vunpack.c.l.b16 %v319
    %v325 = vunpack.c.h.b16 %v319
    %v326 = vpack.c.b16 %v322, %v322
    %v327 = vpack.c.b16 %v323, %v323
    %v328 = vpack.c.b16 %v324, %v324
    %v329 = vpack.c.b16 %v325, %v325
    %330 = vrot.lane.b32.xlu0 %v326, 64
    %v331 = vpop.permute.xlu0 %330
    %332 = vrot.lane.b32.xlu0 %v327, 64
    %v333 = vpop.permute.xlu0 %332
    %334 = vrot.lane.b32.xlu0 %v328, 64
    %v335 = vpop.permute.xlu0 %334
    %336 = vrot.lane.b32.xlu0 %v329, 64
    %v337 = vpop.permute.xlu0 %336
    %vm342 = vcmask 1043968
    %343 = vst.msk [vmem:[#allocation2] sm:$0xf] %vm342, %v331
    %344 = vst.msk [vmem:[#allocation2 + $0xc] sm:$0xf] %vm342, %v333
    %345 = vst.msk [vmem:[#allocation2 + $0x18] sm:$0xf] %vm342, %v335
    %346 = vst.msk [vmem:[#allocation2 + $0x24] sm:$0xf] %vm342, %v337
    %v347 = vpack.c.bf16 %v294, %v293
    %v348 = vpack.c.bf16 %v296, %v295
    %v351 = vunpack.c.l.b16 %v347
    %v352 = vunpack.c.h.b16 %v347
    %v353 = vunpack.c.l.b16 %v348
    %v354 = vunpack.c.h.b16 %v348
    %v355 = vpack.c.b16 %v351, %v351
    %v356 = vpack.c.b16 %v352, %v352
    %v357 = vpack.c.b16 %v353, %v353
    %v358 = vpack.c.b16 %v354, %v354
    %363 = vst.msk [vmem:[#allocation2 + $0x4] sm:$0xf] %vm313, %v355
    %364 = vst.msk [vmem:[#allocation2 + $0x10] sm:$0xf] %vm313, %v356
    %365 = vst.msk [vmem:[#allocation2 + $0x1c] sm:$0xf] %vm313, %v357
    %366 = vst.msk [vmem:[#allocation2 + $0x28] sm:$0xf] %vm313, %v358
    %v367 = vld [vmem:[#allocation2] sm:$0xff]
    %v368 = vld [vmem:[#allocation2 + $0xc] sm:$0xff]
    %v369 = vld [vmem:[#allocation2 + $0x18] sm:$0xff]
    %v370 = vld [vmem:[#allocation2 + $0x24] sm:$0xff]
    %v371 = vld [vmem:[#allocation3] sm:$0xf]
    %v372 = vld [vmem:[#allocation3 + $0x4] sm:$0xf]
    %v373 = vld [vmem:[#allocation3 + $0x8] sm:$0xf]
    %v374 = vld [vmem:[#allocation3 + $0xc] sm:$0xf]
    %v375 = vld [vmem:[#allocation3 + $0x10] sm:$0xf]
    %v376 = vld [vmem:[#allocation3 + $0x14] sm:$0xf]
    %v377 = vld [vmem:[#allocation3 + $0x18] sm:$0xf]
    %v378 = vld [vmem:[#allocation3 + $0x1c] sm:$0xf]
    %v379 = vld [vmem:[#allocation3 + $0x20] sm:$0xf]
    %v380 = vld [vmem:[#allocation3 + $0x24] sm:$0xf]
    %v381 = vld [vmem:[#allocation3 + $0x28] sm:$0xf]
    %v382 = vld [vmem:[#allocation3 + $0x2c] sm:$0xf]
    %v383 = vld [vmem:[#allocation3 + $0x30] sm:$0xf]
    %v384 = vld [vmem:[#allocation3 + $0x34] sm:$0xf]
    %v385 = vld [vmem:[#allocation3 + $0x38] sm:$0xf]
    %v386 = vld [vmem:[#allocation3 + $0x3c] sm:$0xf]
    %v387 = vld [vmem:[#allocation3 + $0x40] sm:$0xf]
    %v388 = vld [vmem:[#allocation3 + $0x44] sm:$0xf]
    %v389 = vld [vmem:[#allocation3 + $0x48] sm:$0xf]
    %v390 = vld [vmem:[#allocation3 + $0x4c] sm:$0xf]
    %v391 = vld [vmem:[#allocation3 + $0x50] sm:$0xf]
    %v392 = vld [vmem:[#allocation3 + $0x54] sm:$0xf]
    %v393 = vld [vmem:[#allocation3 + $0x58] sm:$0xf]
    %v394 = vld [vmem:[#allocation3 + $0x5c] sm:$0xf]
    %v399 = vunpack.c.l.b16 %v367
    %v400 = vunpack.c.h.b16 %v367
    %v401 = vunpack.c.l.b16 %v368
    %v402 = vunpack.c.h.b16 %v368
    %v403 = vunpack.c.l.b16 %v369
    %v404 = vunpack.c.h.b16 %v369
    %v405 = vunpack.c.l.b16 %v370
    %v406 = vunpack.c.h.b16 %v370
    %v407 = vpack.c.b16 %v401, %v399
    %v408 = vpack.c.b16 %v402, %v400
    %v409 = vpack.c.b16 %v405, %v403
    %v410 = vpack.c.b16 %v406, %v404
    %v437 = vunpack.c.l.b16 %v371
    %v438 = vunpack.c.l.b16 %v372
    %v439 = vunpack.c.l.b16 %v373
    %v440 = vunpack.c.l.b16 %v374
    %v441 = vunpack.c.l.b16 %v375
    %v442 = vunpack.c.l.b16 %v376
    %v443 = vunpack.c.l.b16 %v377
    %v444 = vunpack.c.l.b16 %v378
    %v445 = vunpack.c.l.b16 %v379
    %v446 = vunpack.c.l.b16 %v380
    %v447 = vunpack.c.l.b16 %v381
    %v448 = vunpack.c.l.b16 %v382
    %v449 = vunpack.c.l.b16 %v383
    %v450 = vunpack.c.l.b16 %v384
    %v451 = vunpack.c.l.b16 %v385
    %v452 = vunpack.c.l.b16 %v386
    %v453 = vunpack.c.l.b16 %v387
    %v454 = vunpack.c.l.b16 %v388
    %v455 = vunpack.c.l.b16 %v389
    %v456 = vunpack.c.l.b16 %v390
    %v457 = vunpack.c.l.b16 %v391
    %v458 = vunpack.c.l.b16 %v392
    %v459 = vunpack.c.l.b16 %v393
    %v460 = vunpack.c.l.b16 %v394
    %v461 = vpack.c.b16 %v438, %v437
    %v462 = vpack.c.b16 %v440, %v439
    %v463 = vpack.c.b16 %v442, %v441
    %v464 = vpack.c.b16 %v444, %v443
    %v465 = vpack.c.b16 %v446, %v445
    %v466 = vpack.c.b16 %v448, %v447
    %v467 = vpack.c.b16 %v450, %v449
    %v468 = vpack.c.b16 %v452, %v451
    %v469 = vpack.c.b16 %v454, %v453
    %v470 = vpack.c.b16 %v456, %v455
    %v471 = vpack.c.b16 %v458, %v457
    %v472 = vpack.c.b16 %v460, %v459
    %vm485 = vcmask 523264
    %v487 = vsel %vm485, %v408, 0
    %v490 = vsel %vm485, %v410, 0
    %492 = vmatprep.subr.bf16.mxu0 0
    %493 = vmatpush1.bf16.msra.mxu0 %v468
    %494 = vmatprep.subr.bf16.mxu0 0
    %495 = vmatpush1.bf16.msra.mxu0 %v467
    %496 = vmatprep.subr.bf16.mxu0 0
    %497 = vmatpush1.bf16.msra.mxu0 %v466
    %498 = vmatprep.subr.bf16.mxu0 0
    %499 = vmatpush1.bf16.msra.mxu0 %v465
    %500 = vmatprep.subr.bf16.mxu0 0
    %501 = vmatpush1.bf16.msra.mxu0 %v464
    %502 = vmatprep.subr.bf16.mxu0 0
    %503 = vmatpush1.bf16.msra.mxu0 %v463
    %504 = vmatprep.subr.bf16.mxu0 0
    %505 = vmatpush1.bf16.msra.mxu0 %v462
    %506 = vmatprep.subr.bf16.mxu0 0
    %507 = vmatpush1.bf16.msra.mxu0 %v461
    %508 = vmatprep.subr.bf16.mxu0 0
    %509 = vmatpush2.bf16.msra.mxu0 0
    %510 = vmatprep.subr.bf16.mxu0 0
    %511 = vmatpush2.bf16.msra.mxu0 0
    %512 = vmatprep.subr.bf16.mxu0 0
    %513 = vmatpush2.bf16.msra.mxu0 0
    %514 = vmatprep.subr.bf16.mxu0 0
    %515 = vmatpush2.bf16.msra.mxu0 0
    %516 = vmatprep.subr.bf16.mxu0 0
    %517 = vmatpush2.bf16.msra.mxu0 %v472
    %518 = vmatprep.subr.bf16.mxu0 0
    %519 = vmatpush2.bf16.msra.mxu0 %v471
    %520 = vmatprep.subr.bf16.mxu0 0
    %521 = vmatpush2.bf16.msra.mxu0 %v470
    %522 = vmatprep.subr.bf16.mxu0 0
    %523 = vmatpush2.bf16.msra.mxu0 %v469
    %524 = vmatprep.mubr.bf16.mxu0 %v487
    %525 = vmatmul.mubr.bf16.gmra.mxu0 %v407
    %v526 = vpop.f32.mrf.mxu0
    %v527 = vadd.f32 0.0, %v526
    %v528 = vpop.f32.mrf.mxu0
    %v529 = vpop.f32.mrf.mxu0
    %v530 = vadd.f32 0.0, %v529
    %v531 = vpop.f32.mrf.mxu0
    %532 = vmatprep.mubr.bf16.mxu0 %v490
    %533 = vmatmul.mubr.bf16.gmra.mxu0 %v409
    %v534 = vpop.f32.mrf.mxu0
    %v535 = vadd.f32 0.0, %v534
    %v536 = vpop.f32.mrf.mxu0
    %v537 = vpop.f32.mrf.mxu0
    %v538 = vadd.f32 0.0, %v537
    %v539 = vpop.f32.mrf.mxu0
    %540 = vdwg.mxu0
    %v541 = vld [vmem:[#allocation2] sm:$0xf]
    %v542 = vld [vmem:[#allocation2 + $0xc] sm:$0xf]
    %v543 = vld [vmem:[#allocation2 + $0x18] sm:$0xf]
    %v544 = vld [vmem:[#allocation2 + $0x24] sm:$0xf]
    %v545 = vld [vmem:[%s7] sm:$0xf]
    %v546 = vld [vmem:[%s7 + $0x4] sm:$0xf]
    %v547 = vld [vmem:[%s7 + $0x8] sm:$0xf]
    %v548 = vld [vmem:[%s7 + $0xc] sm:$0xf]
    %v549 = vld [vmem:[%s7 + $0x10] sm:$0xf]
    %v550 = vld [vmem:[%s7 + $0x14] sm:$0xf]
    %v551 = vld [vmem:[%s7 + $0x18] sm:$0xf]
    %v552 = vld [vmem:[%s7 + $0x1c] sm:$0xf]
    %v557 = vunpack.c.l.b16 %v541
    %v558 = vunpack.c.l.b16 %v542
    %v559 = vunpack.c.l.b16 %v543
    %v560 = vunpack.c.l.b16 %v544
    %v561 = vpack.c.b16 %v558, %v557
    %v562 = vpack.c.b16 %v560, %v559
    %563 = vrot.lane.b32.xlu0 %v561, 64
    %v564 = vpop.permute.xlu0 %563
    %565 = vrot.lane.b32.xlu0 %v562, 64
    %v566 = vpop.permute.xlu0 %565
    %v575 = vunpack.c.l.b16 %v545
    %v576 = vunpack.c.l.b16 %v546
    %v577 = vunpack.c.l.b16 %v547
    %v578 = vunpack.c.l.b16 %v548
    %v579 = vunpack.c.l.b16 %v549
    %v580 = vunpack.c.l.b16 %v550
    %v581 = vunpack.c.l.b16 %v551
    %v582 = vunpack.c.l.b16 %v552
    %v583 = vpack.c.b16 %v576, %v575
    %v584 = vpack.c.b16 %v578, %v577
    %v585 = vpack.c.b16 %v580, %v579
    %v586 = vpack.c.b16 %v582, %v581
    %v592 = vsel %vm485, %v564, 0
    %v595 = vsel %vm485, %v566, 0
    %597 = vmatprep.subr.bf16.mxu0 0
    %598 = vmatpush1.bf16.msra.mxu0 0
    %599 = vmatprep.subr.bf16.mxu0 0
    %600 = vmatpush1.bf16.msra.mxu0 0
    %601 = vmatprep.subr.bf16.mxu0 0
    %602 = vmatpush1.bf16.msra.mxu0 0
    %603 = vmatprep.subr.bf16.mxu0 0
    %604 = vmatpush1.bf16.msra.mxu0 0
    %605 = vmatprep.subr.bf16.mxu0 0
    %606 = vmatpush1.bf16.msra.mxu0 %v586
    %607 = vmatprep.subr.bf16.mxu0 0
    %608 = vmatpush1.bf16.msra.mxu0 %v585
    %609 = vmatprep.subr.bf16.mxu0 0
    %610 = vmatpush1.bf16.msra.mxu0 %v584
    %611 = vmatprep.subr.bf16.mxu0 0
    %612 = vmatpush1.bf16.msra.mxu0 %v583
    %613 = vmatprep.subr.bf16.mxu0 0
    %614 = vmatpush2.bf16.msra.mxu0 0
    %615 = vmatprep.subr.bf16.mxu0 0
    %616 = vmatpush2.bf16.msra.mxu0 0
    %617 = vmatprep.subr.bf16.mxu0 0
    %618 = vmatpush2.bf16.msra.mxu0 0
    %619 = vmatprep.subr.bf16.mxu0 0
    %620 = vmatpush2.bf16.msra.mxu0 0
    %621 = vmatprep.subr.bf16.mxu0 0
    %622 = vmatpush2.bf16.msra.mxu0 0
    %623 = vmatprep.subr.bf16.mxu0 0
    %624 = vmatpush2.bf16.msra.mxu0 0
    %625 = vmatprep.subr.bf16.mxu0 0
    %626 = vmatpush2.bf16.msra.mxu0 0
    %627 = vmatprep.subr.bf16.mxu0 0
    %628 = vmatpush2.bf16.msra.mxu0 0
    %629 = vmatprep.mubr.bf16.mxu0 0
    %630 = vmatmul.mubr.bf16.gmra.mxu0 %v592
    %v631 = vpop.f32.mrf.mxu0
    %v632 = vadd.f32 0.0, %v631
    %v633 = vpop.f32.mrf.mxu0
    %v634 = vpop.f32.mrf.mxu0
    %v635 = vadd.f32 0.0, %v634
    %v636 = vpop.f32.mrf.mxu0
    %637 = vmatprep.mubr.bf16.mxu0 0
    %638 = vmatmul.mubr.bf16.gmra.mxu0 %v595
    %v639 = vpop.f32.mrf.mxu0
    %v640 = vadd.f32 0.0, %v639
    %v641 = vpop.f32.mrf.mxu0
    %v642 = vpop.f32.mrf.mxu0
    %v643 = vadd.f32 0.0, %v642
    %v644 = vpop.f32.mrf.mxu0
    %645 = vdwg.mxu0
    %v646 = vld [vmem:[#allocation12] sm:$0x1]
    %v647 = vld [vmem:[#allocation14] sm:$0x1]
    %v648 = vadd.f32 %v632, %v635
    %v649 = vadd.f32 %v648, %v640
    %v650 = vadd.f32 %v649, %v643
    %v651 = vrot.slane %v650, 4
    %v652 = vadd.f32 %v650, %v651
    %v653 = vrot.slane %v652, 2
    %v654 = vadd.f32 %v652, %v653
    %v655 = vrot.slane %v654, 1
    %v656 = vadd.f32 %v654, %v655
    %v657 = vmul.f32 %v632, %v632
    %v658 = vmul.f32 %v635, %v635
    %v659 = vmul.f32 %v640, %v640
    %v660 = vmul.f32 %v643, %v643
    %v661 = vadd.f32 %v657, %v658
    %v662 = vadd.f32 %v661, %v659
    %v663 = vadd.f32 %v662, %v660
    %v664 = vrot.slane %v663, 4
    %v665 = vadd.f32 %v663, %v664
    %v666 = vrot.slane %v665, 2
    %v667 = vadd.f32 %v665, %v666
    %v668 = vrot.slane %v667, 1
    %v669 = vadd.f32 %v667, %v668
    %v670 = vsel %vm207, %v656, %v669
    %671 = vmatprep.subr.mxu0 0.0
    %672 = vmatpush1.msra.mxu0 %v196
    %673 = vmatprep.subr.mxu0 0.0
    %674 = vmatpush1.msra.mxu0 %v195
    %675 = vmatprep.subr.mxu0 0.0
    %676 = vmatpush1.msra.mxu0 %v194
    %677 = vmatprep.subr.mxu0 0.0
    %678 = vmatpush1.msra.mxu0 %v193
    %679 = vmatprep.subr.mxu0 0.0
    %680 = vmatpush1.msra.mxu0 %v192
    %681 = vmatprep.subr.mxu0 0.0
    %682 = vmatpush1.msra.mxu0 %v191
    %683 = vmatprep.subr.mxu0 0.0
    %684 = vmatpush1.msra.mxu0 %v190
    %685 = vmatprep.subr.mxu0 0.0
    %686 = vmatpush1.msra.mxu0 %v189
    %687 = vmatprep.subr.mxu0 0.0
    %688 = vmatpush1.msra.mxu0 %v188
    %689 = vmatprep.subr.mxu0 0.0
    %690 = vmatpush1.msra.mxu0 %v187
    %691 = vmatprep.subr.mxu0 0.0
    %692 = vmatpush1.msra.mxu0 %v186
    %693 = vmatprep.subr.mxu0 0.0
    %694 = vmatpush1.msra.mxu0 %v185
    %695 = vmatprep.subr.mxu0 0.0
    %696 = vmatpush1.msra.mxu0 %v184
    %697 = vmatprep.subr.mxu0 0.0
    %698 = vmatpush1.msra.mxu0 %v183
    %699 = vmatprep.subr.mxu0 0.0
    %700 = vmatpush1.msra.mxu0 %v182
    %701 = vmatprep.subr.mxu0 0.0
    %702 = vmatpush1.msra.mxu0 %v181
    %703 = vmatprep.subr.mxu0 0.0
    %704 = vmatpush2.msra.mxu0 0.0
    %705 = vmatprep.subr.mxu0 0.0
    %706 = vmatpush2.msra.mxu0 0.0
    %707 = vmatprep.subr.mxu0 0.0
    %708 = vmatpush2.msra.mxu0 0.0
    %709 = vmatprep.subr.mxu0 0.0
    %710 = vmatpush2.msra.mxu0 0.0
    %711 = vmatprep.subr.mxu0 0.0
    %712 = vmatpush2.msra.mxu0 0.0
    %713 = vmatprep.subr.mxu0 0.0
    %714 = vmatpush2.msra.mxu0 0.0
    %715 = vmatprep.subr.mxu0 0.0
    %716 = vmatpush2.msra.mxu0 0.0
    %717 = vmatprep.subr.mxu0 0.0
    %718 = vmatpush2.msra.mxu0 0.0
    %719 = vmatprep.subr.mxu0 0.0
    %720 = vmatpush2.msra.mxu0 0.0
    %721 = vmatprep.subr.mxu0 0.0
    %722 = vmatpush2.msra.mxu0 0.0
    %723 = vmatprep.subr.mxu0 0.0
    %724 = vmatpush2.msra.mxu0 0.0
    %725 = vmatprep.subr.mxu0 0.0
    %726 = vmatpush2.msra.mxu0 0.0
    %727 = vmatprep.subr.mxu0 0.0
    %728 = vmatpush2.msra.mxu0 0.0
    %729 = vmatprep.subr.mxu0 0.0
    %730 = vmatpush2.msra.mxu0 0.0
    %731 = vmatprep.subr.mxu0 0.0
    %732 = vmatpush2.msra.mxu0 0.0
    %733 = vmatprep.subr.mxu0 0.0
    %734 = vmatpush2.msra.mxu0 0.0
    %735 = vmatprep.mubr.f32.mxu0 0.0
    %736 = vmatmul.mubr.f32.gmra.mxu0 %v670
    %v737 = vpop.f32.mrf.mxu0
    %v738 = vadd.f32 0.0, %v737
    %v739 = vpop.f32.mrf.mxu0
    %740 = vdwg.mxu0
    %v741 = vmul.f32 %v738, 0.001953125
    %v742 = vmul.f32 %v741, %v741
    %v744 = vrot.slane %v742, 7
    %v746 = vsub.f32 %v741, %v744
    %v747 = vmax.f32 %v746, 0.0
    %v748 = vadd.f32 %v747, 1e-05
    %v749 = vrsqrt.pop %v748
    %v752 = vunpack.c.l.s4 1966171168
    %v753 = vunpack.c.0.s8 %v752
    %v754 = vlaneseq
    %v755 = vshrl.u32 %v754, 7
    %v756 = vsub.s32 %v753, %v755
    %v757 = vrot.slane %v749, %v756
    %v758 = vcombine.high %v757, %v757
    %v760 = vunpack.c.l.s4 1966171168
    %v761 = vunpack.c.0.s8 %v760
    %v762 = vlaneseq
    %v763 = vshrl.u32 %v762, 7
    %v764 = vsub.s32 %v761, %v763
    %v765 = vrot.slane %v758, %v764
    %v767 = vmul.f32 %v646, %v765
    %v768 = vmul.f32 %v741, %v767
    %v769 = vsub.f32 %v647, %v768
    %v771 = vlaneseq
    %v772 = vshrl.u32 %v771, 7
    %v773 = vsub.s32 0, %v772
    %v774 = vrot.slane %v769, %v773
    %v776 = vsel %vm207, %v767, %v774
    %vm777 = vcmask 64512
    %v779 = vsel %vm777, %v776, 0
    %781 = vmatprep.subr.mxu0 0.0
    %782 = vmatpush1.msra.mxu0 0.0
    %783 = vmatprep.subr.mxu0 0.0
    %784 = vmatpush1.msra.mxu0 0.0
    %785 = vmatprep.subr.mxu0 0.0
    %786 = vmatpush1.msra.mxu0 0.0
    %787 = vmatprep.subr.mxu0 0.0
    %788 = vmatpush1.msra.mxu0 0.0
    %789 = vmatprep.subr.mxu0 0.0
    %790 = vmatpush1.msra.mxu0 0.0
    %791 = vmatprep.subr.mxu0 0.0
    %792 = vmatpush1.msra.mxu0 0.0
    %793 = vmatprep.subr.mxu0 0.0
    %794 = vmatpush1.msra.mxu0 0.0
    %795 = vmatprep.subr.mxu0 0.0
    %796 = vmatpush1.msra.mxu0 0.0
    %797 = vmatprep.subr.mxu0 0.0
    %798 = vmatpush1.msra.mxu0 0.0
    %799 = vmatprep.subr.mxu0 0.0
    %800 = vmatpush1.msra.mxu0 0.0
    %801 = vmatprep.subr.mxu0 0.0
    %802 = vmatpush1.msra.mxu0 0.0
    %803 = vmatprep.subr.mxu0 0.0
    %804 = vmatpush1.msra.mxu0 0.0
    %805 = vmatprep.subr.mxu0 0.0
    %806 = vmatpush1.msra.mxu0 0.0
    %807 = vmatprep.subr.mxu0 0.0
    %808 = vmatpush1.msra.mxu0 0.0
    %809 = vmatprep.subr.mxu0 0.0
    %810 = vmatpush1.msra.mxu0 0.0
    %811 = vmatprep.subr.mxu0 0.0
    %812 = vmatpush1.msra.mxu0 %v197
    %813 = vmatprep.subr.mxu0 0.0
    %814 = vmatpush2.msra.mxu0 0.0
    %815 = vmatprep.subr.mxu0 0.0
    %816 = vmatpush2.msra.mxu0 0.0
    %817 = vmatprep.subr.mxu0 0.0
    %818 = vmatpush2.msra.mxu0 0.0
    %819 = vmatprep.subr.mxu0 0.0
    %820 = vmatpush2.msra.mxu0 0.0
    %821 = vmatprep.subr.mxu0 0.0
    %822 = vmatpush2.msra.mxu0 0.0
    %823 = vmatprep.subr.mxu0 0.0
    %824 = vmatpush2.msra.mxu0 0.0
    %825 = vmatprep.subr.mxu0 0.0
    %826 = vmatpush2.msra.mxu0 0.0
    %827 = vmatprep.subr.mxu0 0.0
    %828 = vmatpush2.msra.mxu0 0.0
    %829 = vmatprep.subr.mxu0 0.0
    %830 = vmatpush2.msra.mxu0 0.0
    %831 = vmatprep.subr.mxu0 0.0
    %832 = vmatpush2.msra.mxu0 0.0
    %833 = vmatprep.subr.mxu0 0.0
    %834 = vmatpush2.msra.mxu0 0.0
    %835 = vmatprep.subr.mxu0 0.0
    %836 = vmatpush2.msra.mxu0 0.0
    %837 = vmatprep.subr.mxu0 0.0
    %838 = vmatpush2.msra.mxu0 0.0
    %839 = vmatprep.subr.mxu0 0.0
    %840 = vmatpush2.msra.mxu0 0.0
    %841 = vmatprep.subr.mxu0 0.0
    %842 = vmatpush2.msra.mxu0 0.0
    %843 = vmatprep.subr.mxu0 0.0
    %844 = vmatpush2.msra.mxu0 0.0
    %845 = vmatprep.mubr.f32.mxu0 0.0
    %846 = vmatmul.mubr.f32.gmra.mxu0 %v779
    %v847 = vpop.f32.mrf.mxu0
    %v848 = vadd.f32 0.0, %v847
    %v849 = vpop.f32.mrf.mxu0
    %850 = vdwg.mxu0
    %v851 = vlaneseq
    %v852 = vshrl.u32 %v851, 7
    %v853 = vsub.s32 0, %v852
    %v854 = vrot.slane %v848, %v853
    %v855 = vmul.f32 %v632, %v854
    %v856 = vmul.f32 %v635, %v854
    %v857 = vmul.f32 %v640, %v854
    %v858 = vmul.f32 %v643, %v854
    %v859 = vlaneseq
    %v860 = vshrl.u32 %v859, 7
    %v861 = vsub.s32 1, %v860
    %v862 = vrot.slane %v848, %v861
    %v863 = vadd.f32 %v855, %v862
    %v864 = vadd.f32 %v856, %v862
    %v865 = vadd.f32 %v857, %v862
    %v866 = vadd.f32 %v858, %v862
    %v867 = vld [vmem:[#allocation6] sm:$0x1]
    %v868 = vld [vmem:[#allocation8] sm:$0x1]
    %v869 = vadd.f32 %v527, %v530
    %v870 = vadd.f32 %v869, %v535
    %v871 = vadd.f32 %v870, %v538
    %v872 = vrot.slane %v871, 4
    %v873 = vadd.f32 %v871, %v872
    %v874 = vrot.slane %v873, 2
    %v875 = vadd.f32 %v873, %v874
    %v876 = vrot.slane %v875, 1
    %v877 = vadd.f32 %v875, %v876
    %v878 = vmul.f32 %v527, %v527
    %v879 = vmul.f32 %v530, %v530
    %v880 = vmul.f32 %v535, %v535
    %v881 = vmul.f32 %v538, %v538
    %v882 = vadd.f32 %v878, %v879
    %v883 = vadd.f32 %v882, %v880
    %v884 = vadd.f32 %v883, %v881
    %v885 = vrot.slane %v884, 4
    %v886 = vadd.f32 %v884, %v885
    %v887 = vrot.slane %v886, 2
    %v888 = vadd.f32 %v886, %v887
    %v889 = vrot.slane %v888, 1
    %v890 = vadd.f32 %v888, %v889
    %v891 = vsel %vm207, %v877, %v890
    %892 = vmatprep.subr.mxu0 0.0
    %893 = vmatpush1.msra.mxu0 %v196
    %894 = vmatprep.subr.mxu0 0.0
    %895 = vmatpush1.msra.mxu0 %v195
    %896 = vmatprep.subr.mxu0 0.0
    %897 = vmatpush1.msra.mxu0 %v194
    %898 = vmatprep.subr.mxu0 0.0
    %899 = vmatpush1.msra.mxu0 %v193
    %900 = vmatprep.subr.mxu0 0.0
    %901 = vmatpush1.msra.mxu0 %v192
    %902 = vmatprep.subr.mxu0 0.0
    %903 = vmatpush1.msra.mxu0 %v191
    %904 = vmatprep.subr.mxu0 0.0
    %905 = vmatpush1.msra.mxu0 %v190
    %906 = vmatprep.subr.mxu0 0.0
    %907 = vmatpush1.msra.mxu0 %v189
    %908 = vmatprep.subr.mxu0 0.0
    %909 = vmatpush1.msra.mxu0 %v188
    %910 = vmatprep.subr.mxu0 0.0
    %911 = vmatpush1.msra.mxu0 %v187
    %912 = vmatprep.subr.mxu0 0.0
    %913 = vmatpush1.msra.mxu0 %v186
    %914 = vmatprep.subr.mxu0 0.0
    %915 = vmatpush1.msra.mxu0 %v185
    %916 = vmatprep.subr.mxu0 0.0
    %917 = vmatpush1.msra.mxu0 %v184
    %918 = vmatprep.subr.mxu0 0.0
    %919 = vmatpush1.msra.mxu0 %v183
    %920 = vmatprep.subr.mxu0 0.0
    %921 = vmatpush1.msra.mxu0 %v182
    %922 = vmatprep.subr.mxu0 0.0
    %923 = vmatpush1.msra.mxu0 %v181
    %924 = vmatprep.subr.mxu0 0.0
    %925 = vmatpush2.msra.mxu0 0.0
    %926 = vmatprep.subr.mxu0 0.0
    %927 = vmatpush2.msra.mxu0 0.0
    %928 = vmatprep.subr.mxu0 0.0
    %929 = vmatpush2.msra.mxu0 0.0
    %930 = vmatprep.subr.mxu0 0.0
    %931 = vmatpush2.msra.mxu0 0.0
    %932 = vmatprep.subr.mxu0 0.0
    %933 = vmatpush2.msra.mxu0 0.0
    %934 = vmatprep.subr.mxu0 0.0
    %935 = vmatpush2.msra.mxu0 0.0
    %936 = vmatprep.subr.mxu0 0.0
    %937 = vmatpush2.msra.mxu0 0.0
    %938 = vmatprep.subr.mxu0 0.0
    %939 = vmatpush2.msra.mxu0 0.0
    %940 = vmatprep.subr.mxu0 0.0
    %941 = vmatpush2.msra.mxu0 0.0
    %942 = vmatprep.subr.mxu0 0.0
    %943 = vmatpush2.msra.mxu0 0.0
    %944 = vmatprep.subr.mxu0 0.0
    %945 = vmatpush2.msra.mxu0 0.0
    %946 = vmatprep.subr.mxu0 0.0
    %947 = vmatpush2.msra.mxu0 0.0
    %948 = vmatprep.subr.mxu0 0.0
    %949 = vmatpush2.msra.mxu0 0.0
    %950 = vmatprep.subr.mxu0 0.0
    %951 = vmatpush2.msra.mxu0 0.0
    %952 = vmatprep.subr.mxu0 0.0
    %953 = vmatpush2.msra.mxu0 0.0
    %954 = vmatprep.subr.mxu0 0.0
    %955 = vmatpush2.msra.mxu0 0.0
    %956 = vmatprep.mubr.f32.mxu0 0.0
    %957 = vmatmul.mubr.f32.gmra.mxu0 %v891
    %v958 = vpop.f32.mrf.mxu0
    %v959 = vadd.f32 0.0, %v958
    %v960 = vpop.f32.mrf.mxu0
    %961 = vdwg.mxu0
    %v962 = vmul.f32 %v959, 0.001953125
    %v963 = vmul.f32 %v962, %v962
    %v965 = vrot.slane %v963, 7
    %v967 = vsub.f32 %v962, %v965
    %v968 = vmax.f32 %v967, 0.0
    %v969 = vadd.f32 %v968, 1e-05
    %v970 = vrsqrt.pop %v969
    %v973 = vunpack.c.l.s4 1966171168
    %v974 = vunpack.c.0.s8 %v973
    %v975 = vlaneseq
    %v976 = vshrl.u32 %v975, 7
    %v977 = vsub.s32 %v974, %v976
    %v978 = vrot.slane %v970, %v977
    %v979 = vcombine.high %v978, %v978
    %v981 = vunpack.c.l.s4 1966171168
    %v982 = vunpack.c.0.s8 %v981
    %v983 = vlaneseq
    %v984 = vshrl.u32 %v983, 7
    %v985 = vsub.s32 %v982, %v984
    %v986 = vrot.slane %v979, %v985
    %v988 = vmul.f32 %v867, %v986
    %v989 = vmul.f32 %v962, %v988
    %v990 = vsub.f32 %v868, %v989
    %v992 = vlaneseq
    %v993 = vshrl.u32 %v992, 7
    %v994 = vsub.s32 0, %v993
    %v995 = vrot.slane %v990, %v994
    %v997 = vsel %vm207, %v988, %v995
    %v999 = vsel %vm777, %v997, 0
    %1001 = vmatprep.subr.mxu0 0.0
    %1002 = vmatpush1.msra.mxu0 0.0
    %1003 = vmatprep.subr.mxu0 0.0
    %1004 = vmatpush1.msra.mxu0 0.0
    %1005 = vmatprep.subr.mxu0 0.0
    %1006 = vmatpush1.msra.mxu0 0.0
    %1007 = vmatprep.subr.mxu0 0.0
    %1008 = vmatpush1.msra.mxu0 0.0
    %1009 = vmatprep.subr.mxu0 0.0
    %1010 = vmatpush1.msra.mxu0 0.0
    %1011 = vmatprep.subr.mxu0 0.0
    %1012 = vmatpush1.msra.mxu0 0.0
    %1013 = vmatprep.subr.mxu0 0.0
    %1014 = vmatpush1.msra.mxu0 0.0
    %1015 = vmatprep.subr.mxu0 0.0
    %1016 = vmatpush1.msra.mxu0 0.0
    %1017 = vmatprep.subr.mxu0 0.0
    %1018 = vmatpush1.msra.mxu0 0.0
    %1019 = vmatprep.subr.mxu0 0.0
    %1020 = vmatpush1.msra.mxu0 0.0
    %1021 = vmatprep.subr.mxu0 0.0
    %1022 = vmatpush1.msra.mxu0 0.0
    %1023 = vmatprep.subr.mxu0 0.0
    %1024 = vmatpush1.msra.mxu0 0.0
    %1025 = vmatprep.subr.mxu0 0.0
    %1026 = vmatpush1.msra.mxu0 0.0
    %1027 = vmatprep.subr.mxu0 0.0
    %1028 = vmatpush1.msra.mxu0 0.0
    %1029 = vmatprep.subr.mxu0 0.0
    %1030 = vmatpush1.msra.mxu0 0.0
    %1031 = vmatprep.subr.mxu0 0.0
    %1032 = vmatpush1.msra.mxu0 %v197
    %1033 = vmatprep.subr.mxu0 0.0
    %1034 = vmatpush2.msra.mxu0 0.0
    %1035 = vmatprep.subr.mxu0 0.0
    %1036 = vmatpush2.msra.mxu0 0.0
    %1037 = vmatprep.subr.mxu0 0.0
    %1038 = vmatpush2.msra.mxu0 0.0
    %1039 = vmatprep.subr.mxu0 0.0
    %1040 = vmatpush2.msra.mxu0 0.0
    %1041 = vmatprep.subr.mxu0 0.0
    %1042 = vmatpush2.msra.mxu0 0.0
    %1043 = vmatprep.subr.mxu0 0.0
    %1044 = vmatpush2.msra.mxu0 0.0
    %1045 = vmatprep.subr.mxu0 0.0
    %1046 = vmatpush2.msra.mxu0 0.0
    %1047 = vmatprep.subr.mxu0 0.0
    %1048 = vmatpush2.msra.mxu0 0.0
    %1049 = vmatprep.subr.mxu0 0.0
    %1050 = vmatpush2.msra.mxu0 0.0
    %1051 = vmatprep.subr.mxu0 0.0
    %1052 = vmatpush2.msra.mxu0 0.0
    %1053 = vmatprep.subr.mxu0 0.0
    %1054 = vmatpush2.msra.mxu0 0.0
    %1055 = vmatprep.subr.mxu0 0.0
    %1056 = vmatpush2.msra.mxu0 0.0
    %1057 = vmatprep.subr.mxu0 0.0
    %1058 = vmatpush2.msra.mxu0 0.0
    %1059 = vmatprep.subr.mxu0 0.0
    %1060 = vmatpush2.msra.mxu0 0.0
    %1061 = vmatprep.subr.mxu0 0.0
    %1062 = vmatpush2.msra.mxu0 0.0
    %1063 = vmatprep.subr.mxu0 0.0
    %1064 = vmatpush2.msra.mxu0 0.0
    %1065 = vmatprep.mubr.f32.mxu0 0.0
    %1066 = vmatmul.mubr.f32.gmra.mxu0 %v999
    %v1067 = vpop.f32.mrf.mxu0
    %v1068 = vadd.f32 0.0, %v1067
    %v1069 = vpop.f32.mrf.mxu0
    %1070 = vdwg.mxu0
    %v1071 = vlaneseq
    %v1072 = vshrl.u32 %v1071, 7
    %v1073 = vsub.s32 0, %v1072
    %v1074 = vrot.slane %v1068, %v1073
    %v1075 = vmul.f32 %v527, %v1074
    %v1076 = vmul.f32 %v530, %v1074
    %v1077 = vmul.f32 %v535, %v1074
    %v1078 = vmul.f32 %v538, %v1074
    %v1079 = vlaneseq
    %v1080 = vshrl.u32 %v1079, 7
    %v1081 = vsub.s32 1, %v1080
    %v1082 = vrot.slane %v1068, %v1081
    %v1083 = vadd.f32 %v1075, %v1082
    %v1084 = vadd.f32 %v1076, %v1082
    %v1085 = vadd.f32 %v1077, %v1082
    %v1086 = vadd.f32 %v1078, %v1082
    %v1087 = vmax.f32 %v1083, 0.0
    %v1088 = vmax.f32 %v1084, 0.0
    %v1089 = vmax.f32 %v1085, 0.0
    %v1090 = vmax.f32 %v1086, 0.0
    %v1095 = vrot.slane %v1087, 7
    %v1096 = vrot.slane %v1088, 7
    %v1097 = vsel %vm207, %v1095, %v1096
    %v1098 = vrot.slane %v1089, 7
    %v1099 = vsel %vm207, %v1096, %v1098
    %v1100 = vrot.slane %v1090, 7
    %v1101 = vsel %vm207, %v1098, %v1100
    %v1106 = vsel %vm207, 0.0, %v1095
    %v1107 = vsel %vm268, 0.0, %v1106
    %v1108 = vsel %vm269, 0.0, %v1097
    %v1109 = vsel %vm270, 0.0, %v1099
    %v1110 = vsel %vm271, 0.0, %v1101
    %v1111 = vrot.slane %v1087, 1
    %v1112 = vrot.slane %v1088, 1
    %v1113 = vsel %vm276, %v1111, %v1112
    %v1114 = vrot.slane %v1089, 1
    %v1115 = vsel %vm276, %v1112, %v1114
    %v1116 = vrot.slane %v1090, 1
    %v1117 = vsel %vm276, %v1114, %v1116
    %v1122 = vsel %vm276, %v1116, 0.0
    %v1123 = vsel %vm289, 0.0, %v1113
    %v1124 = vsel %vm290, 0.0, %v1115
    %v1125 = vsel %vm291, 0.0, %v1117
    %v1126 = vsel %vm292, 0.0, %v1122
    %v1127 = vpack.c.bf16 %v1108, %v1107
    %v1128 = vpack.c.bf16 %v1110, %v1109
    %v1131 = vunpack.c.l.b16 %v1127
    %v1132 = vunpack.c.h.b16 %v1127
    %v1133 = vunpack.c.l.b16 %v1128
    %v1134 = vunpack.c.h.b16 %v1128
    %v1135 = vpack.c.b16 %v1131, %v1131
    %v1136 = vpack.c.b16 %v1132, %v1132
    %v1137 = vpack.c.b16 %v1133, %v1133
    %v1138 = vpack.c.b16 %v1134, %v1134
    %1143 = vst [vmem:[#allocation2] sm:$0xf] %v1135
    %1144 = vst [vmem:[#allocation2 + $0xc] sm:$0xf] %v1136
    %1145 = vst [vmem:[#allocation2 + $0x18] sm:$0xf] %v1137
    %1146 = vst [vmem:[#allocation2 + $0x24] sm:$0xf] %v1138
    %v1147 = vpack.c.bf16 %v1088, %v1087
    %v1148 = vpack.c.bf16 %v1090, %v1089
    %v1151 = vunpack.c.l.b16 %v1147
    %v1152 = vunpack.c.h.b16 %v1147
    %v1153 = vunpack.c.l.b16 %v1148
    %v1154 = vunpack.c.h.b16 %v1148
    %v1155 = vpack.c.b16 %v1151, %v1151
    %v1156 = vpack.c.b16 %v1152, %v1152
    %v1157 = vpack.c.b16 %v1153, %v1153
    %v1158 = vpack.c.b16 %v1154, %v1154
    %1163 = vst [vmem:[#allocation2 + $0x4] sm:$0xf] %v1155
    %1164 = vst [vmem:[#allocation2 + $0x10] sm:$0xf] %v1156
    %1165 = vst [vmem:[#allocation2 + $0x1c] sm:$0xf] %v1157
    %1166 = vst [vmem:[#allocation2 + $0x28] sm:$0xf] %v1158
    %v1167 = vpack.c.bf16 %v1124, %v1123
    %v1168 = vpack.c.bf16 %v1126, %v1125
    %v1171 = vunpack.c.l.b16 %v1167
    %v1172 = vunpack.c.h.b16 %v1167
    %v1173 = vunpack.c.l.b16 %v1168
    %v1174 = vunpack.c.h.b16 %v1168
    %v1175 = vpack.c.b16 %v1171, %v1171
    %v1176 = vpack.c.b16 %v1172, %v1172
    %v1177 = vpack.c.b16 %v1173, %v1173
    %v1178 = vpack.c.b16 %v1174, %v1174
    %1183 = vst [vmem:[#allocation2 + $0x8] sm:$0xf] %v1175
    %1184 = vst [vmem:[#allocation2 + $0x14] sm:$0xf] %v1176
    %1185 = vst [vmem:[#allocation2 + $0x20] sm:$0xf] %v1177
    %1186 = vst [vmem:[#allocation2 + $0x2c] sm:$0xf] %v1178
    %v1187 = vld [vmem:[#allocation2] sm:$0xff]
    %v1188 = vld [vmem:[#allocation2 + $0x8] sm:$0xf]
    %v1189 = vld [vmem:[#allocation2 + $0xc] sm:$0xff]
    %v1190 = vld [vmem:[#allocation2 + $0x14] sm:$0xf]
    %v1191 = vld [vmem:[#allocation2 + $0x18] sm:$0xff]
    %v1192 = vld [vmem:[#allocation2 + $0x20] sm:$0xf]
    %v1193 = vld [vmem:[#allocation2 + $0x24] sm:$0xff]
    %v1194 = vld [vmem:[#allocation2 + $0x2c] sm:$0xf]
    %v1195 = vld [vmem:[%s4] sm:$0xf]
    %v1196 = vld [vmem:[%s4 + $0x4] sm:$0xf]
    %v1197 = vld [vmem:[%s4 + $0x8] sm:$0xf]
    %v1198 = vld [vmem:[%s4 + $0xc] sm:$0xf]
    %v1199 = vld [vmem:[%s4 + $0x10] sm:$0xf]
    %v1200 = vld [vmem:[%s4 + $0x14] sm:$0xf]
    %v1201 = vld [vmem:[%s4 + $0x18] sm:$0xf]
    %v1202 = vld [vmem:[%s4 + $0x1c] sm:$0xf]
    %v1203 = vld [vmem:[%s4 + $0x20] sm:$0xf]
    %v1204 = vld [vmem:[%s4 + $0x24] sm:$0xf]
    %v1205 = vld [vmem:[%s4 + $0x28] sm:$0xf]
    %v1206 = vld [vmem:[%s4 + $0x2c] sm:$0xf]
    %v1207 = vld [vmem:[%s4 + $0x30] sm:$0xf]
    %v1208 = vld [vmem:[%s4 + $0x34] sm:$0xf]
    %v1209 = vld [vmem:[%s4 + $0x38] sm:$0xf]
    %v1210 = vld [vmem:[%s4 + $0x3c] sm:$0xf]
    %v1211 = vld [vmem:[%s4 + $0x40] sm:$0xf]
    %v1212 = vld [vmem:[%s4 + $0x44] sm:$0xf]
    %v1213 = vld [vmem:[%s4 + $0x48] sm:$0xf]
    %v1214 = vld [vmem:[%s4 + $0x4c] sm:$0xf]
    %v1215 = vld [vmem:[%s4 + $0x50] sm:$0xf]
    %v1216 = vld [vmem:[%s4 + $0x54] sm:$0xf]
    %v1217 = vld [vmem:[%s4 + $0x58] sm:$0xf]
    %v1218 = vld [vmem:[%s4 + $0x5c] sm:$0xf]
    %v1219 = vld [vmem:[%s4 + $0x60] sm:$0xf]
    %v1220 = vld [vmem:[%s4 + $0x64] sm:$0xf]
    %v1221 = vld [vmem:[%s4 + $0x68] sm:$0xf]
    %v1222 = vld [vmem:[%s4 + $0x6c] sm:$0xf]
    %v1223 = vld [vmem:[%s4 + $0x70] sm:$0xf]
    %v1224 = vld [vmem:[%s4 + $0x74] sm:$0xf]
    %v1225 = vld [vmem:[%s4 + $0x78] sm:$0xf]
    %v1226 = vld [vmem:[%s4 + $0x7c] sm:$0xf]
    %v1227 = vld [vmem:[%s4 + $0x80] sm:$0xf]
    %v1228 = vld [vmem:[%s4 + $0x84] sm:$0xf]
    %v1229 = vld [vmem:[%s4 + $0x88] sm:$0xf]
    %v1230 = vld [vmem:[%s4 + $0x8c] sm:$0xf]
    %v1231 = vld [vmem:[%s4 + $0x90] sm:$0xf]
    %v1232 = vld [vmem:[%s4 + $0x94] sm:$0xf]
    %v1233 = vld [vmem:[%s4 + $0x98] sm:$0xf]
    %v1234 = vld [vmem:[%s4 + $0x9c] sm:$0xf]
    %v1235 = vld [vmem:[%s4 + $0xa0] sm:$0xf]
    %v1236 = vld [vmem:[%s4 + $0xa4] sm:$0xf]
    %v1237 = vld [vmem:[%s4 + $0xa8] sm:$0xf]
    %v1238 = vld [vmem:[%s4 + $0xac] sm:$0xf]
    %v1239 = vld [vmem:[%s4 + $0xb0] sm:$0xf]
    %v1240 = vld [vmem:[%s4 + $0xb4] sm:$0xf]
    %v1241 = vld [vmem:[%s4 + $0xb8] sm:$0xf]
    %v1242 = vld [vmem:[%s4 + $0xbc] sm:$0xf]
    %v1251 = vunpack.c.l.b16 %v1187
    %v1252 = vunpack.c.h.b16 %v1187
    %v1253 = vunpack.c.l.b16 %v1188
    %v1254 = vunpack.c.l.b16 %v1189
    %v1255 = vunpack.c.h.b16 %v1189
    %v1256 = vunpack.c.l.b16 %v1190
    %v1257 = vunpack.c.l.b16 %v1191
    %v1258 = vunpack.c.h.b16 %v1191
    %v1259 = vunpack.c.l.b16 %v1192
    %v1260 = vunpack.c.l.b16 %v1193
    %v1261 = vunpack.c.h.b16 %v1193
    %v1262 = vunpack.c.l.b16 %v1194
    %v1263 = vpack.c.b16 %v1254, %v1251
    %v1264 = vpack.c.b16 %v1255, %v1252
    %v1265 = vpack.c.b16 %v1256, %v1253
    %v1266 = vpack.c.b16 %v1260, %v1257
    %v1267 = vpack.c.b16 %v1261, %v1258
    %v1268 = vpack.c.b16 %v1262, %v1259
    %v1323 = vunpack.c.l.b16 %v1195
    %v1324 = vunpack.c.l.b16 %v1196
    %v1325 = vunpack.c.l.b16 %v1197
    %v1326 = vunpack.c.l.b16 %v1198
    %v1327 = vunpack.c.l.b16 %v1199
    %v1328 = vunpack.c.l.b16 %v1200
    %v1329 = vunpack.c.l.b16 %v1201
    %v1330 = vunpack.c.l.b16 %v1202
    %v1331 = vunpack.c.l.b16 %v1203
    %v1332 = vunpack.c.l.b16 %v1204
    %v1333 = vunpack.c.l.b16 %v1205
    %v1334 = vunpack.c.l.b16 %v1206
    %v1335 = vunpack.c.l.b16 %v1207
    %v1336 = vunpack.c.l.b16 %v1208
    %v1337 = vunpack.c.l.b16 %v1209
    %v1338 = vunpack.c.l.b16 %v1210
    %v1339 = vunpack.c.l.b16 %v1211
    %v1340 = vunpack.c.l.b16 %v1212
    %v1341 = vunpack.c.l.b16 %v1213
    %v1342 = vunpack.c.l.b16 %v1214
    %v1343 = vunpack.c.l.b16 %v1215
    %v1344 = vunpack.c.l.b16 %v1216
    %v1345 = vunpack.c.l.b16 %v1217
    %v1346 = vunpack.c.l.b16 %v1218
    %v1347 = vunpack.c.l.b16 %v1219
    %v1348 = vunpack.c.l.b16 %v1220
    %v1349 = vunpack.c.l.b16 %v1221
    %v1350 = vunpack.c.l.b16 %v1222
    %v1351 = vunpack.c.l.b16 %v1223
    %v1352 = vunpack.c.l.b16 %v1224
    %v1353 = vunpack.c.l.b16 %v1225
    %v1354 = vunpack.c.l.b16 %v1226
    %v1355 = vunpack.c.l.b16 %v1227
    %v1356 = vunpack.c.l.b16 %v1228
    %v1357 = vunpack.c.l.b16 %v1229
    %v1358 = vunpack.c.l.b16 %v1230
    %v1359 = vunpack.c.l.b16 %v1231
    %v1360 = vunpack.c.l.b16 %v1232
    %v1361 = vunpack.c.l.b16 %v1233
    %v1362 = vunpack.c.l.b16 %v1234
    %v1363 = vunpack.c.l.b16 %v1235
    %v1364 = vunpack.c.l.b16 %v1236
    %v1365 = vunpack.c.l.b16 %v1237
    %v1366 = vunpack.c.l.b16 %v1238
    %v1367 = vunpack.c.l.b16 %v1239
    %v1368 = vunpack.c.l.b16 %v1240
    %v1369 = vunpack.c.l.b16 %v1241
    %v1370 = vunpack.c.l.b16 %v1242
    %v1371 = vpack.c.b16 %v1324, %v1323
    %v1372 = vpack.c.b16 %v1326, %v1325
    %v1373 = vpack.c.b16 %v1328, %v1327
    %v1374 = vpack.c.b16 %v1330, %v1329
    %v1375 = vpack.c.b16 %v1332, %v1331
    %v1376 = vpack.c.b16 %v1334, %v1333
    %v1377 = vpack.c.b16 %v1336, %v1335
    %v1378 = vpack.c.b16 %v1338, %v1337
    %v1379 = vpack.c.b16 %v1340, %v1339
    %v1380 = vpack.c.b16 %v1342, %v1341
    %v1381 = vpack.c.b16 %v1344, %v1343
    %v1382 = vpack.c.b16 %v1346, %v1345
    %v1383 = vpack.c.b16 %v1348, %v1347
    %v1384 = vpack.c.b16 %v1350, %v1349
    %v1385 = vpack.c.b16 %v1352, %v1351
    %v1386 = vpack.c.b16 %v1354, %v1353
    %v1387 = vpack.c.b16 %v1356, %v1355
    %v1388 = vpack.c.b16 %v1358, %v1357
    %v1389 = vpack.c.b16 %v1360, %v1359
    %v1390 = vpack.c.b16 %v1362, %v1361
    %v1391 = vpack.c.b16 %v1364, %v1363
    %v1392 = vpack.c.b16 %v1366, %v1365
    %v1393 = vpack.c.b16 %v1368, %v1367
    %v1394 = vpack.c.b16 %v1370, %v1369
    %1419 = vmatprep.subr.bf16.mxu0 0
    %1420 = vmatpush1.bf16.msra.mxu0 %v1378
    %1421 = vmatprep.subr.bf16.mxu0 0
    %1422 = vmatpush1.bf16.msra.mxu0 %v1377
    %1423 = vmatprep.subr.bf16.mxu0 0
    %1424 = vmatpush1.bf16.msra.mxu0 %v1376
    %1425 = vmatprep.subr.bf16.mxu0 0
    %1426 = vmatpush1.bf16.msra.mxu0 %v1375
    %1427 = vmatprep.subr.bf16.mxu0 0
    %1428 = vmatpush1.bf16.msra.mxu0 %v1374
    %1429 = vmatprep.subr.bf16.mxu0 0
    %1430 = vmatpush1.bf16.msra.mxu0 %v1373
    %1431 = vmatprep.subr.bf16.mxu0 0
    %1432 = vmatpush1.bf16.msra.mxu0 %v1372
    %1433 = vmatprep.subr.bf16.mxu0 0
    %1434 = vmatpush1.bf16.msra.mxu0 %v1371
    %1435 = vmatprep.subr.bf16.mxu0 0
    %1436 = vmatpush2.bf16.msra.mxu0 %v1386
    %1437 = vmatprep.subr.bf16.mxu0 0
    %1438 = vmatpush2.bf16.msra.mxu0 %v1385
    %1439 = vmatprep.subr.bf16.mxu0 0
    %1440 = vmatpush2.bf16.msra.mxu0 %v1384
    %1441 = vmatprep.subr.bf16.mxu0 0
    %1442 = vmatpush2.bf16.msra.mxu0 %v1383
    %1443 = vmatprep.subr.bf16.mxu0 0
    %1444 = vmatpush2.bf16.msra.mxu0 %v1382
    %1445 = vmatprep.subr.bf16.mxu0 0
    %1446 = vmatpush2.bf16.msra.mxu0 %v1381
    %1447 = vmatprep.subr.bf16.mxu0 0
    %1448 = vmatpush2.bf16.msra.mxu0 %v1380
    %1449 = vmatprep.subr.bf16.mxu0 0
    %1450 = vmatpush2.bf16.msra.mxu0 %v1379
    %1451 = vmatprep.mubr.bf16.mxu0 %v1264
    %1452 = vmatmul.mubr.bf16.gmra.mxu0 %v1263
    %v1453 = vpop.f32.mrf.mxu0
    %v1454 = vadd.f32 0.0, %v1453
    %v1455 = vpop.f32.mrf.mxu0
    %v1456 = vpop.f32.mrf.mxu0
    %v1457 = vadd.f32 0.0, %v1456
    %v1458 = vpop.f32.mrf.mxu0
    %1459 = vmatprep.mubr.bf16.mxu0 %v1267
    %1460 = vmatmul.mubr.bf16.gmra.mxu0 %v1266
    %v1461 = vpop.f32.mrf.mxu0
    %v1462 = vadd.f32 0.0, %v1461
    %v1463 = vpop.f32.mrf.mxu0
    %v1464 = vpop.f32.mrf.mxu0
    %v1465 = vadd.f32 0.0, %v1464
    %v1466 = vpop.f32.mrf.mxu0
    %1467 = vdwg.mxu0
    %1468 = vmatprep.subr.bf16.mxu0 0
    %1469 = vmatpush1.bf16.msra.mxu0 %v1394
    %1470 = vmatprep.subr.bf16.mxu0 0
    %1471 = vmatpush1.bf16.msra.mxu0 %v1393
    %1472 = vmatprep.subr.bf16.mxu0 0
    %1473 = vmatpush1.bf16.msra.mxu0 %v1392
    %1474 = vmatprep.subr.bf16.mxu0 0
    %1475 = vmatpush1.bf16.msra.mxu0 %v1391
    %1476 = vmatprep.subr.bf16.mxu0 0
    %1477 = vmatpush1.bf16.msra.mxu0 %v1390
    %1478 = vmatprep.subr.bf16.mxu0 0
    %1479 = vmatpush1.bf16.msra.mxu0 %v1389
    %1480 = vmatprep.subr.bf16.mxu0 0
    %1481 = vmatpush1.bf16.msra.mxu0 %v1388
    %1482 = vmatprep.subr.bf16.mxu0 0
    %1483 = vmatpush1.bf16.msra.mxu0 %v1387
    %1484 = vmatprep.subr.bf16.mxu0 0
    %1485 = vmatpush2.bf16.msra.mxu0 0
    %1486 = vmatprep.subr.bf16.mxu0 0
    %1487 = vmatpush2.bf16.msra.mxu0 0
    %1488 = vmatprep.subr.bf16.mxu0 0
    %1489 = vmatpush2.bf16.msra.mxu0 0
    %1490 = vmatprep.subr.bf16.mxu0 0
    %1491 = vmatpush2.bf16.msra.mxu0 0
    %1492 = vmatprep.subr.bf16.mxu0 0
    %1493 = vmatpush2.bf16.msra.mxu0 0
    %1494 = vmatprep.subr.bf16.mxu0 0
    %1495 = vmatpush2.bf16.msra.mxu0 0
    %1496 = vmatprep.subr.bf16.mxu0 0
    %1497 = vmatpush2.bf16.msra.mxu0 0
    %1498 = vmatprep.subr.bf16.mxu0 0
    %1499 = vmatpush2.bf16.msra.mxu0 0
    %1500 = vmatprep.mubr.bf16.mxu0 0
    %1501 = vmatmul.mubr.bf16.gmra.mxu0 %v1265
    %v1502 = vpop.f32.mrf.mxu0
    %v1503 = vadd.f32 %v1454, %v1502
    %v1504 = vpop.f32.mrf.mxu0
    %v1505 = vpop.f32.mrf.mxu0
    %v1506 = vadd.f32 %v1457, %v1505
    %v1507 = vpop.f32.mrf.mxu0
    %1508 = vmatprep.mubr.bf16.mxu0 0
    %1509 = vmatmul.mubr.bf16.gmra.mxu0 %v1268
    %v1510 = vpop.f32.mrf.mxu0
    %v1511 = vadd.f32 %v1462, %v1510
    %v1512 = vpop.f32.mrf.mxu0
    %v1513 = vpop.f32.mrf.mxu0
    %v1514 = vadd.f32 %v1465, %v1513
    %v1515 = vpop.f32.mrf.mxu0
    %1516 = vdwg.mxu0
    %v1517 = vld [vmem:[#allocation9] sm:$0x1]
    %v1518 = vld [vmem:[#allocation11] sm:$0x1]
    %v1519 = vadd.f32 %v1503, %v1506
    %v1520 = vadd.f32 %v1519, %v1511
    %v1521 = vadd.f32 %v1520, %v1514
    %v1522 = vrot.slane %v1521, 4
    %v1523 = vadd.f32 %v1521, %v1522
    %v1524 = vrot.slane %v1523, 2
    %v1525 = vadd.f32 %v1523, %v1524
    %v1526 = vrot.slane %v1525, 1
    %v1527 = vadd.f32 %v1525, %v1526
    %v1528 = vmul.f32 %v1503, %v1503
    %v1529 = vmul.f32 %v1506, %v1506
    %v1530 = vmul.f32 %v1511, %v1511
    %v1531 = vmul.f32 %v1514, %v1514
    %v1532 = vadd.f32 %v1528, %v1529
    %v1533 = vadd.f32 %v1532, %v1530
    %v1534 = vadd.f32 %v1533, %v1531
    %v1535 = vrot.slane %v1534, 4
    %v1536 = vadd.f32 %v1534, %v1535
    %v1537 = vrot.slane %v1536, 2
    %v1538 = vadd.f32 %v1536, %v1537
    %v1539 = vrot.slane %v1538, 1
    %v1540 = vadd.f32 %v1538, %v1539
    %v1541 = vsel %vm207, %v1527, %v1540
    %1542 = vmatprep.subr.mxu0 0.0
    %1543 = vmatpush1.msra.mxu0 %v196
    %1544 = vmatprep.subr.mxu0 0.0
    %1545 = vmatpush1.msra.mxu0 %v195
    %1546 = vmatprep.subr.mxu0 0.0
    %1547 = vmatpush1.msra.mxu0 %v194
    %1548 = vmatprep.subr.mxu0 0.0
    %1549 = vmatpush1.msra.mxu0 %v193
    %1550 = vmatprep.subr.mxu0 0.0
    %1551 = vmatpush1.msra.mxu0 %v192
    %1552 = vmatprep.subr.mxu0 0.0
    %1553 = vmatpush1.msra.mxu0 %v191
    %1554 = vmatprep.subr.mxu0 0.0
    %1555 = vmatpush1.msra.mxu0 %v190
    %1556 = vmatprep.subr.mxu0 0.0
    %1557 = vmatpush1.msra.mxu0 %v189
    %1558 = vmatprep.subr.mxu0 0.0
    %1559 = vmatpush1.msra.mxu0 %v188
    %1560 = vmatprep.subr.mxu0 0.0
    %1561 = vmatpush1.msra.mxu0 %v187
    %1562 = vmatprep.subr.mxu0 0.0
    %1563 = vmatpush1.msra.mxu0 %v186
    %1564 = vmatprep.subr.mxu0 0.0
    %1565 = vmatpush1.msra.mxu0 %v185
    %1566 = vmatprep.subr.mxu0 0.0
    %1567 = vmatpush1.msra.mxu0 %v184
    %1568 = vmatprep.subr.mxu0 0.0
    %1569 = vmatpush1.msra.mxu0 %v183
    %1570 = vmatprep.subr.mxu0 0.0
    %1571 = vmatpush1.msra.mxu0 %v182
    %1572 = vmatprep.subr.mxu0 0.0
    %1573 = vmatpush1.msra.mxu0 %v181
    %1574 = vmatprep.subr.mxu0 0.0
    %1575 = vmatpush2.msra.mxu0 0.0
    %1576 = vmatprep.subr.mxu0 0.0
    %1577 = vmatpush2.msra.mxu0 0.0
    %1578 = vmatprep.subr.mxu0 0.0
    %1579 = vmatpush2.msra.mxu0 0.0
    %1580 = vmatprep.subr.mxu0 0.0
    %1581 = vmatpush2.msra.mxu0 0.0
    %1582 = vmatprep.subr.mxu0 0.0
    %1583 = vmatpush2.msra.mxu0 0.0
    %1584 = vmatprep.subr.mxu0 0.0
    %1585 = vmatpush2.msra.mxu0 0.0
    %1586 = vmatprep.subr.mxu0 0.0
    %1587 = vmatpush2.msra.mxu0 0.0
    %1588 = vmatprep.subr.mxu0 0.0
    %1589 = vmatpush2.msra.mxu0 0.0
    %1590 = vmatprep.subr.mxu0 0.0
    %1591 = vmatpush2.msra.mxu0 0.0
    %1592 = vmatprep.subr.mxu0 0.0
    %1593 = vmatpush2.msra.mxu0 0.0
    %1594 = vmatprep.subr.mxu0 0.0
    %1595 = vmatpush2.msra.mxu0 0.0
    %1596 = vmatprep.subr.mxu0 0.0
    %1597 = vmatpush2.msra.mxu0 0.0
    %1598 = vmatprep.subr.mxu0 0.0
    %1599 = vmatpush2.msra.mxu0 0.0
    %1600 = vmatprep.subr.mxu0 0.0
    %1601 = vmatpush2.msra.mxu0 0.0
    %1602 = vmatprep.subr.mxu0 0.0
    %1603 = vmatpush2.msra.mxu0 0.0
    %1604 = vmatprep.subr.mxu0 0.0
    %1605 = vmatpush2.msra.mxu0 0.0
    %1606 = vmatprep.mubr.f32.mxu0 0.0
    %1607 = vmatmul.mubr.f32.gmra.mxu0 %v1541
    %v1608 = vpop.f32.mrf.mxu0
    %v1609 = vadd.f32 0.0, %v1608
    %v1610 = vpop.f32.mrf.mxu0
    %1611 = vdwg.mxu0
    %v1612 = vmul.f32 %v1609, 0.001953125
    %v1613 = vmul.f32 %v1612, %v1612
    %v1615 = vrot.slane %v1613, 7
    %v1617 = vsub.f32 %v1612, %v1615
    %v1618 = vmax.f32 %v1617, 0.0
    %v1619 = vadd.f32 %v1618, 1e-05
    %v1620 = vrsqrt.pop %v1619
    %v1623 = vunpack.c.l.s4 1966171168
    %v1624 = vunpack.c.0.s8 %v1623
    %v1625 = vlaneseq
    %v1626 = vshrl.u32 %v1625, 7
    %v1627 = vsub.s32 %v1624, %v1626
    %v1628 = vrot.slane %v1620, %v1627
    %v1629 = vcombine.high %v1628, %v1628
    %v1631 = vunpack.c.l.s4 1966171168
    %v1632 = vunpack.c.0.s8 %v1631
    %v1633 = vlaneseq
    %v1634 = vshrl.u32 %v1633, 7
    %v1635 = vsub.s32 %v1632, %v1634
    %v1636 = vrot.slane %v1629, %v1635
    %v1638 = vmul.f32 %v1517, %v1636
    %v1639 = vmul.f32 %v1612, %v1638
    %v1640 = vsub.f32 %v1518, %v1639
    %v1642 = vlaneseq
    %v1643 = vshrl.u32 %v1642, 7
    %v1644 = vsub.s32 0, %v1643
    %v1645 = vrot.slane %v1640, %v1644
    %v1647 = vsel %vm207, %v1638, %v1645
    %v1649 = vsel %vm777, %v1647, 0
    %1651 = vmatprep.subr.mxu0 0.0
    %1652 = vmatpush1.msra.mxu0 0.0
    %1653 = vmatprep.subr.mxu0 0.0
    %1654 = vmatpush1.msra.mxu0 0.0
    %1655 = vmatprep.subr.mxu0 0.0
    %1656 = vmatpush1.msra.mxu0 0.0
    %1657 = vmatprep.subr.mxu0 0.0
    %1658 = vmatpush1.msra.mxu0 0.0
    %1659 = vmatprep.subr.mxu0 0.0
    %1660 = vmatpush1.msra.mxu0 0.0
    %1661 = vmatprep.subr.mxu0 0.0
    %1662 = vmatpush1.msra.mxu0 0.0
    %1663 = vmatprep.subr.mxu0 0.0
    %1664 = vmatpush1.msra.mxu0 0.0
    %1665 = vmatprep.subr.mxu0 0.0
    %1666 = vmatpush1.msra.mxu0 0.0
    %1667 = vmatprep.subr.mxu0 0.0
    %1668 = vmatpush1.msra.mxu0 0.0
    %1669 = vmatprep.subr.mxu0 0.0
    %1670 = vmatpush1.msra.mxu0 0.0
    %1671 = vmatprep.subr.mxu0 0.0
    %1672 = vmatpush1.msra.mxu0 0.0
    %1673 = vmatprep.subr.mxu0 0.0
    %1674 = vmatpush1.msra.mxu0 0.0
    %1675 = vmatprep.subr.mxu0 0.0
    %1676 = vmatpush1.msra.mxu0 0.0
    %1677 = vmatprep.subr.mxu0 0.0
    %1678 = vmatpush1.msra.mxu0 0.0
    %1679 = vmatprep.subr.mxu0 0.0
    %1680 = vmatpush1.msra.mxu0 0.0
    %1681 = vmatprep.subr.mxu0 0.0
    %1682 = vmatpush1.msra.mxu0 %v197
    %1683 = vmatprep.subr.mxu0 0.0
    %1684 = vmatpush2.msra.mxu0 0.0
    %1685 = vmatprep.subr.mxu0 0.0
    %1686 = vmatpush2.msra.mxu0 0.0
    %1687 = vmatprep.subr.mxu0 0.0
    %1688 = vmatpush2.msra.mxu0 0.0
    %1689 = vmatprep.subr.mxu0 0.0
    %1690 = vmatpush2.msra.mxu0 0.0
    %1691 = vmatprep.subr.mxu0 0.0
    %1692 = vmatpush2.msra.mxu0 0.0
    %1693 = vmatprep.subr.mxu0 0.0
    %1694 = vmatpush2.msra.mxu0 0.0
    %1695 = vmatprep.subr.mxu0 0.0
    %1696 = vmatpush2.msra.mxu0 0.0
    %1697 = vmatprep.subr.mxu0 0.0
    %1698 = vmatpush2.msra.mxu0 0.0
    %1699 = vmatprep.subr.mxu0 0.0
    %1700 = vmatpush2.msra.mxu0 0.0
    %1701 = vmatprep.subr.mxu0 0.0
    %1702 = vmatpush2.msra.mxu0 0.0
    %1703 = vmatprep.subr.mxu0 0.0
    %1704 = vmatpush2.msra.mxu0 0.0
    %1705 = vmatprep.subr.mxu0 0.0
    %1706 = vmatpush2.msra.mxu0 0.0
    %1707 = vmatprep.subr.mxu0 0.0
    %1708 = vmatpush2.msra.mxu0 0.0
    %1709 = vmatprep.subr.mxu0 0.0
    %1710 = vmatpush2.msra.mxu0 0.0
    %1711 = vmatprep.subr.mxu0 0.0
    %1712 = vmatpush2.msra.mxu0 0.0
    %1713 = vmatprep.subr.mxu0 0.0
    %1714 = vmatpush2.msra.mxu0 0.0
    %1715 = vmatprep.mubr.f32.mxu0 0.0
    %1716 = vmatmul.mubr.f32.gmra.mxu0 %v1649
    %v1717 = vpop.f32.mrf.mxu0
    %v1718 = vadd.f32 0.0, %v1717
    %v1719 = vpop.f32.mrf.mxu0
    %1720 = vdwg.mxu0
    %v1721 = vlaneseq
    %v1722 = vshrl.u32 %v1721, 7
    %v1723 = vsub.s32 0, %v1722
    %v1724 = vrot.slane %v1718, %v1723
    %v1725 = vmul.f32 %v1503, %v1724
    %v1726 = vmul.f32 %v1506, %v1724
    %v1727 = vmul.f32 %v1511, %v1724
    %v1728 = vmul.f32 %v1514, %v1724
    %v1729 = vlaneseq
    %v1730 = vshrl.u32 %v1729, 7
    %v1731 = vsub.s32 1, %v1730
    %v1732 = vrot.slane %v1718, %v1731
    %v1733 = vadd.f32 %v1725, %v1732
    %v1734 = vadd.f32 %v1726, %v1732
    %v1735 = vadd.f32 %v1727, %v1732
    %v1736 = vadd.f32 %v1728, %v1732
    %v1737 = vadd.f32 %v1733, %v863
    %v1738 = vadd.f32 %v1734, %v864
    %v1739 = vadd.f32 %v1735, %v865
    %v1740 = vadd.f32 %v1736, %v866
    %v1741 = vmax.f32 %v1737, 0.0
    %v1742 = vmax.f32 %v1738, 0.0
    %v1743 = vmax.f32 %v1739, 0.0
    %v1744 = vmax.f32 %v1740, 0.0
    %v1745 = vld [vmem:[%s18] sm:$0xff]
    %v1746 = vld [vmem:[%s18 + $0x8] sm:$0xff]
    %v1747 = vld [vmem:[%s18 + $0x10] sm:$0xff]
    %v1748 = vld [vmem:[%s18 + $0x18] sm:$0xff]
    %v1749 = vld [vmem:[%s18 + $0x20] sm:$0xff]
    %v1750 = vld [vmem:[%s18 + $0x28] sm:$0xff]
    %v1751 = vld [vmem:[%s18 + $0x30] sm:$0xff]
    %v1752 = vld [vmem:[%s18 + $0x38] sm:$0xff]
    %v1753 = vld [vmem:[%s18 + $0x40] sm:$0xff]
    %v1754 = vld [vmem:[%s18 + $0x48] sm:$0xff]
    %v1755 = vld [vmem:[%s18 + $0x50] sm:$0xff]
    %v1756 = vld [vmem:[%s18 + $0x58] sm:$0xff]
    %v1757 = vld [vmem:[%s18 + $0x60] sm:$0xff]
    %v1758 = vld [vmem:[%s18 + $0x68] sm:$0xff]
    %v1759 = vld [vmem:[%s18 + $0x70] sm:$0xff]
    %v1760 = vld [vmem:[%s18 + $0x78] sm:$0xff]
    %v1761 = vld [vmem:[%s19] sm:$0xff]
    %v1766 = vrot.slane %v1741, 7
    %v1767 = vrot.slane %v1742, 7
    %v1768 = vsel %vm207, %v1766, %v1767
    %v1769 = vrot.slane %v1743, 7
    %v1770 = vsel %vm207, %v1767, %v1769
    %v1771 = vrot.slane %v1744, 7
    %v1772 = vsel %vm207, %v1769, %v1771
    %v1777 = vsel %vm207, 0.0, %v1766
    %v1778 = vsel %vm268, 0.0, %v1777
    %v1779 = vsel %vm269, 0.0, %v1768
    %v1780 = vsel %vm270, 0.0, %v1770
    %v1781 = vsel %vm271, 0.0, %v1772
    %v1782 = vrot.slane %v1741, 1
    %v1783 = vrot.slane %v1742, 1
    %v1784 = vsel %vm276, %v1782, %v1783
    %v1785 = vrot.slane %v1743, 1
    %v1786 = vsel %vm276, %v1783, %v1785
    %v1787 = vrot.slane %v1744, 1
    %v1788 = vsel %vm276, %v1785, %v1787
    %v1793 = vsel %vm276, %v1787, 0.0
    %v1794 = vsel %vm289, 0.0, %v1784
    %v1795 = vsel %vm290, 0.0, %v1786
    %v1796 = vsel %vm291, 0.0, %v1788
    %v1797 = vsel %vm292, 0.0, %v1793
    %v1798 = vpack.c.bf16 %v1779, %v1778
    %v1799 = vpack.c.bf16 %v1781, %v1780
    %v1802 = vunpack.c.l.b16 %v1798
    %v1803 = vunpack.c.h.b16 %v1798
    %v1804 = vunpack.c.l.b16 %v1799
    %v1805 = vunpack.c.h.b16 %v1799
    %v1806 = vpack.c.b16 %v1802, %v1802
    %v1807 = vpack.c.b16 %v1803, %v1803
    %v1808 = vpack.c.b16 %v1804, %v1804
    %v1809 = vpack.c.b16 %v1805, %v1805
    %1814 = vst [vmem:[#allocation2] sm:$0xf] %v1806
    %1815 = vst [vmem:[#allocation2 + $0xc] sm:$0xf] %v1807
    %1816 = vst [vmem:[#allocation2 + $0x18] sm:$0xf] %v1808
    %1817 = vst [vmem:[#allocation2 + $0x24] sm:$0xf] %v1809
    %v1818 = vpack.c.bf16 %v1742, %v1741
    %v1819 = vpack.c.bf16 %v1744, %v1743
    %v1822 = vunpack.c.l.b16 %v1818
    %v1823 = vunpack.c.h.b16 %v1818
    %v1824 = vunpack.c.l.b16 %v1819
    %v1825 = vunpack.c.h.b16 %v1819
    %v1826 = vpack.c.b16 %v1822, %v1822
    %v1827 = vpack.c.b16 %v1823, %v1823
    %v1828 = vpack.c.b16 %v1824, %v1824
    %v1829 = vpack.c.b16 %v1825, %v1825
    %1834 = vst [vmem:[#allocation2 + $0x4] sm:$0xf] %v1826
    %1835 = vst [vmem:[#allocation2 + $0x10] sm:$0xf] %v1827
    %1836 = vst [vmem:[#allocation2 + $0x1c] sm:$0xf] %v1828
    %1837 = vst [vmem:[#allocation2 + $0x28] sm:$0xf] %v1829
    %v1838 = vpack.c.bf16 %v1795, %v1794
    %v1839 = vpack.c.bf16 %v1797, %v1796
    %v1842 = vunpack.c.l.b16 %v1838
    %v1843 = vunpack.c.h.b16 %v1838
    %v1844 = vunpack.c.l.b16 %v1839
    %v1845 = vunpack.c.h.b16 %v1839
    %v1846 = vpack.c.b16 %v1842, %v1842
    %v1847 = vpack.c.b16 %v1843, %v1843
    %v1848 = vpack.c.b16 %v1844, %v1844
    %v1849 = vpack.c.b16 %v1845, %v1845
    %1854 = vst [vmem:[#allocation2 + $0x8] sm:$0xf] %v1846
    %1855 = vst [vmem:[#allocation2 + $0x14] sm:$0xf] %v1847
    %1856 = vst [vmem:[#allocation2 + $0x20] sm:$0xf] %v1848
    %1857 = vst [vmem:[#allocation2 + $0x2c] sm:$0xf] %v1849
    %v1858 = vld [vmem:[#allocation2] sm:$0xff]
    %v1859 = vld [vmem:[#allocation2 + $0x8] sm:$0xf]
    %v1860 = vld [vmem:[#allocation2 + $0xc] sm:$0xff]
    %v1861 = vld [vmem:[#allocation2 + $0x14] sm:$0xf]
    %v1862 = vld [vmem:[#allocation2 + $0x18] sm:$0xff]
    %v1863 = vld [vmem:[#allocation2 + $0x20] sm:$0xf]
    %v1864 = vld [vmem:[#allocation2 + $0x24] sm:$0xff]
    %v1865 = vld [vmem:[#allocation2 + $0x2c] sm:$0xf]
    %v1866 = vld [vmem:[#allocation15] sm:$0xf]
    %v1867 = vld [vmem:[#allocation15 + $0x4] sm:$0xf]
    %v1868 = vld [vmem:[#allocation15 + $0x8] sm:$0xf]
    %v1869 = vld [vmem:[#allocation15 + $0xc] sm:$0xf]
    %v1870 = vld [vmem:[#allocation15 + $0x10] sm:$0xf]
    %v1871 = vld [vmem:[#allocation15 + $0x14] sm:$0xf]
    %v1872 = vld [vmem:[#allocation15 + $0x18] sm:$0xf]
    %v1873 = vld [vmem:[#allocation15 + $0x1c] sm:$0xf]
    %v1874 = vld [vmem:[#allocation15 + $0x20] sm:$0xf]
    %v1875 = vld [vmem:[#allocation15 + $0x24] sm:$0xf]
    %v1876 = vld [vmem:[#allocation15 + $0x28] sm:$0xf]
    %v1877 = vld [vmem:[#allocation15 + $0x2c] sm:$0xf]
    %v1878 = vld [vmem:[#allocation15 + $0x30] sm:$0xf]
    %v1879 = vld [vmem:[#allocation15 + $0x34] sm:$0xf]
    %v1880 = vld [vmem:[#allocation15 + $0x38] sm:$0xf]
    %v1881 = vld [vmem:[#allocation15 + $0x3c] sm:$0xf]
    %v1882 = vld [vmem:[#allocation15 + $0x40] sm:$0xf]
    %v1883 = vld [vmem:[#allocation15 + $0x44] sm:$0xf]
    %v1884 = vld [vmem:[#allocation15 + $0x48] sm:$0xf]
    %v1885 = vld [vmem:[#allocation15 + $0x4c] sm:$0xf]
    %v1886 = vld [vmem:[#allocation15 + $0x50] sm:$0xf]
    %v1887 = vld [vmem:[#allocation15 + $0x54] sm:$0xf]
    %v1888 = vld [vmem:[#allocation15 + $0x58] sm:$0xf]
    %v1889 = vld [vmem:[#allocation15 + $0x5c] sm:$0xf]
    %v1890 = vld [vmem:[#allocation15 + $0x60] sm:$0xf]
    %v1891 = vld [vmem:[#allocation15 + $0x64] sm:$0xf]
    %v1892 = vld [vmem:[#allocation15 + $0x68] sm:$0xf]
    %v1893 = vld [vmem:[#allocation15 + $0x6c] sm:$0xf]
    %v1894 = vld [vmem:[#allocation15 + $0x70] sm:$0xf]
    %v1895 = vld [vmem:[#allocation15 + $0x74] sm:$0xf]
    %v1896 = vld [vmem:[#allocation15 + $0x78] sm:$0xf]
    %v1897 = vld [vmem:[#allocation15 + $0x7c] sm:$0xf]
    %v1898 = vld [vmem:[#allocation15 + $0x80] sm:$0xf]
    %v1899 = vld [vmem:[#allocation15 + $0x84] sm:$0xf]
    %v1900 = vld [vmem:[#allocation15 + $0x88] sm:$0xf]
    %v1901 = vld [vmem:[#allocation15 + $0x8c] sm:$0xf]
    %v1902 = vld [vmem:[#allocation15 + $0x90] sm:$0xf]
    %v1903 = vld [vmem:[#allocation15 + $0x94] sm:$0xf]
    %v1904 = vld [vmem:[#allocation15 + $0x98] sm:$0xf]
    %v1905 = vld [vmem:[#allocation15 + $0x9c] sm:$0xf]
    %v1906 = vld [vmem:[#allocation15 + $0xa0] sm:$0xf]
    %v1907 = vld [vmem:[#allocation15 + $0xa4] sm:$0xf]
    %v1908 = vld [vmem:[#allocation15 + $0xa8] sm:$0xf]
    %v1909 = vld [vmem:[#allocation15 + $0xac] sm:$0xf]
    %v1910 = vld [vmem:[#allocation15 + $0xb0] sm:$0xf]
    %v1911 = vld [vmem:[#allocation15 + $0xb4] sm:$0xf]
    %v1912 = vld [vmem:[#allocation15 + $0xb8] sm:$0xf]
    %v1913 = vld [vmem:[#allocation15 + $0xbc] sm:$0xf]
    %v1922 = vunpack.c.l.b16 %v1858
    %v1923 = vunpack.c.h.b16 %v1858
    %v1924 = vunpack.c.l.b16 %v1859
    %v1925 = vunpack.c.l.b16 %v1860
    %v1926 = vunpack.c.h.b16 %v1860
    %v1927 = vunpack.c.l.b16 %v1861
    %v1928 = vunpack.c.l.b16 %v1862
    %v1929 = vunpack.c.h.b16 %v1862
    %v1930 = vunpack.c.l.b16 %v1863
    %v1931 = vunpack.c.l.b16 %v1864
    %v1932 = vunpack.c.h.b16 %v1864
    %v1933 = vunpack.c.l.b16 %v1865
    %v1934 = vpack.c.b16 %v1925, %v1922
    %v1935 = vpack.c.b16 %v1926, %v1923
    %v1936 = vpack.c.b16 %v1927, %v1924
    %v1937 = vpack.c.b16 %v1931, %v1928
    %v1938 = vpack.c.b16 %v1932, %v1929
    %v1939 = vpack.c.b16 %v1933, %v1930
    %v1994 = vunpack.c.l.b16 %v1866
    %v1995 = vunpack.c.l.b16 %v1867
    %v1996 = vunpack.c.l.b16 %v1868
    %v1997 = vunpack.c.l.b16 %v1869
    %v1998 = vunpack.c.l.b16 %v1870
    %v1999 = vunpack.c.l.b16 %v1871
    %v2000 = vunpack.c.l.b16 %v1872
    %v2001 = vunpack.c.l.b16 %v1873
    %v2002 = vunpack.c.l.b16 %v1874
    %v2003 = vunpack.c.l.b16 %v1875
    %v2004 = vunpack.c.l.b16 %v1876
    %v2005 = vunpack.c.l.b16 %v1877
    %v2006 = vunpack.c.l.b16 %v1878
    %v2007 = vunpack.c.l.b16 %v1879
    %v2008 = vunpack.c.l.b16 %v1880
    %v2009 = vunpack.c.l.b16 %v1881
    %v2010 = vunpack.c.l.b16 %v1882
    %v2011 = vunpack.c.l.b16 %v1883
    %v2012 = vunpack.c.l.b16 %v1884
    %v2013 = vunpack.c.l.b16 %v1885
    %v2014 = vunpack.c.l.b16 %v1886
    %v2015 = vunpack.c.l.b16 %v1887
    %v2016 = vunpack.c.l.b16 %v1888
    %v2017 = vunpack.c.l.b16 %v1889
    %v2018 = vunpack.c.l.b16 %v1890
    %v2019 = vunpack.c.l.b16 %v1891
    %v2020 = vunpack.c.l.b16 %v1892
    %v2021 = vunpack.c.l.b16 %v1893
    %v2022 = vunpack.c.l.b16 %v1894
    %v2023 = vunpack.c.l.b16 %v1895
    %v2024 = vunpack.c.l.b16 %v1896
    %v2025 = vunpack.c.l.b16 %v1897
    %v2026 = vunpack.c.l.b16 %v1898
    %v2027 = vunpack.c.l.b16 %v1899
    %v2028 = vunpack.c.l.b16 %v1900
    %v2029 = vunpack.c.l.b16 %v1901
    %v2030 = vunpack.c.l.b16 %v1902
    %v2031 = vunpack.c.l.b16 %v1903
    %v2032 = vunpack.c.l.b16 %v1904
    %v2033 = vunpack.c.l.b16 %v1905
    %v2034 = vunpack.c.l.b16 %v1906
    %v2035 = vunpack.c.l.b16 %v1907
    %v2036 = vunpack.c.l.b16 %v1908
    %v2037 = vunpack.c.l.b16 %v1909
    %v2038 = vunpack.c.l.b16 %v1910
    %v2039 = vunpack.c.l.b16 %v1911
    %v2040 = vunpack.c.l.b16 %v1912
    %v2041 = vunpack.c.l.b16 %v1913
    %v2042 = vpack.c.b16 %v1995, %v1994
    %v2043 = vpack.c.b16 %v1997, %v1996
    %v2044 = vpack.c.b16 %v1999, %v1998
    %v2045 = vpack.c.b16 %v2001, %v2000
    %v2046 = vpack.c.b16 %v2003, %v2002
    %v2047 = vpack.c.b16 %v2005, %v2004
    %v2048 = vpack.c.b16 %v2007, %v2006
    %v2049 = vpack.c.b16 %v2009, %v2008
    %v2050 = vpack.c.b16 %v2011, %v2010
    %v2051 = vpack.c.b16 %v2013, %v2012
    %v2052 = vpack.c.b16 %v2015, %v2014
    %v2053 = vpack.c.b16 %v2017, %v2016
    %v2054 = vpack.c.b16 %v2019, %v2018
    %v2055 = vpack.c.b16 %v2021, %v2020
    %v2056 = vpack.c.b16 %v2023, %v2022
    %v2057 = vpack.c.b16 %v2025, %v2024
    %v2058 = vpack.c.b16 %v2027, %v2026
    %v2059 = vpack.c.b16 %v2029, %v2028
    %v2060 = vpack.c.b16 %v2031, %v2030
    %v2061 = vpack.c.b16 %v2033, %v2032
    %v2062 = vpack.c.b16 %v2035, %v2034
    %v2063 = vpack.c.b16 %v2037, %v2036
    %v2064 = vpack.c.b16 %v2039, %v2038
    %v2065 = vpack.c.b16 %v2041, %v2040
    %2090 = vmatprep.subr.bf16.mxu0 0
    %2091 = vmatpush1.bf16.msra.mxu0 %v2049
    %2092 = vmatprep.subr.bf16.mxu0 0
    %2093 = vmatpush1.bf16.msra.mxu0 %v2048
    %2094 = vmatprep.subr.bf16.mxu0 0
    %2095 = vmatpush1.bf16.msra.mxu0 %v2047
    %2096 = vmatprep.subr.bf16.mxu0 0
    %2097 = vmatpush1.bf16.msra.mxu0 %v2046
    %2098 = vmatprep.subr.bf16.mxu0 0
    %2099 = vmatpush1.bf16.msra.mxu0 %v2045
    %2100 = vmatprep.subr.bf16.mxu0 0
    %2101 = vmatpush1.bf16.msra.mxu0 %v2044
    %2102 = vmatprep.subr.bf16.mxu0 0
    %2103 = vmatpush1.bf16.msra.mxu0 %v2043
    %2104 = vmatprep.subr.bf16.mxu0 0
    %2105 = vmatpush1.bf16.msra.mxu0 %v2042
    %2106 = vmatprep.subr.bf16.mxu0 0
    %2107 = vmatpush2.bf16.msra.mxu0 %v2057
    %2108 = vmatprep.subr.bf16.mxu0 0
    %2109 = vmatpush2.bf16.msra.mxu0 %v2056
    %2110 = vmatprep.subr.bf16.mxu0 0
    %2111 = vmatpush2.bf16.msra.mxu0 %v2055
    %2112 = vmatprep.subr.bf16.mxu0 0
    %2113 = vmatpush2.bf16.msra.mxu0 %v2054
    %2114 = vmatprep.subr.bf16.mxu0 0
    %2115 = vmatpush2.bf16.msra.mxu0 %v2053
    %2116 = vmatprep.subr.bf16.mxu0 0
    %2117 = vmatpush2.bf16.msra.mxu0 %v2052
    %2118 = vmatprep.subr.bf16.mxu0 0
    %2119 = vmatpush2.bf16.msra.mxu0 %v2051
    %2120 = vmatprep.subr.bf16.mxu0 0
    %2121 = vmatpush2.bf16.msra.mxu0 %v2050
    %2122 = vmatprep.mubr.bf16.mxu0 %v1935
    %2123 = vmatmul.mubr.bf16.gmra.mxu0 %v1934
    %v2124 = vpop.f32.mrf.mxu0
    %v2125 = vadd.f32 0.0, %v2124
    %v2126 = vpop.f32.mrf.mxu0
    %v2127 = vpop.f32.mrf.mxu0
    %v2128 = vadd.f32 0.0, %v2127
    %v2129 = vpop.f32.mrf.mxu0
    %2130 = vmatprep.mubr.bf16.mxu0 %v1938
    %2131 = vmatmul.mubr.bf16.gmra.mxu0 %v1937
    %v2132 = vpop.f32.mrf.mxu0
    %v2133 = vadd.f32 0.0, %v2132
    %v2134 = vpop.f32.mrf.mxu0
    %v2135 = vpop.f32.mrf.mxu0
    %v2136 = vadd.f32 0.0, %v2135
    %v2137 = vpop.f32.mrf.mxu0
    %2138 = vdwg.mxu0
    %2139 = vmatprep.subr.bf16.mxu0 0
    %2140 = vmatpush1.bf16.msra.mxu0 %v2065
    %2141 = vmatprep.subr.bf16.mxu0 0
    %2142 = vmatpush1.bf16.msra.mxu0 %v2064
    %2143 = vmatprep.subr.bf16.mxu0 0
    %2144 = vmatpush1.bf16.msra.mxu0 %v2063
    %2145 = vmatprep.subr.bf16.mxu0 0
    %2146 = vmatpush1.bf16.msra.mxu0 %v2062
    %2147 = vmatprep.subr.bf16.mxu0 0
    %2148 = vmatpush1.bf16.msra.mxu0 %v2061
    %2149 = vmatprep.subr.bf16.mxu0 0
    %2150 = vmatpush1.bf16.msra.mxu0 %v2060
    %2151 = vmatprep.subr.bf16.mxu0 0
    %2152 = vmatpush1.bf16.msra.mxu0 %v2059
    %2153 = vmatprep.subr.bf16.mxu0 0
    %2154 = vmatpush1.bf16.msra.mxu0 %v2058
    %2155 = vmatprep.subr.bf16.mxu0 0
    %2156 = vmatpush2.bf16.msra.mxu0 0
    %2157 = vmatprep.subr.bf16.mxu0 0
    %2158 = vmatpush2.bf16.msra.mxu0 0
    %2159 = vmatprep.subr.bf16.mxu0 0
    %2160 = vmatpush2.bf16.msra.mxu0 0
    %2161 = vmatprep.subr.bf16.mxu0 0
    %2162 = vmatpush2.bf16.msra.mxu0 0
    %2163 = vmatprep.subr.bf16.mxu0 0
    %2164 = vmatpush2.bf16.msra.mxu0 0
    %2165 = vmatprep.subr.bf16.mxu0 0
    %2166 = vmatpush2.bf16.msra.mxu0 0
    %2167 = vmatprep.subr.bf16.mxu0 0
    %2168 = vmatpush2.bf16.msra.mxu0 0
    %2169 = vmatprep.subr.bf16.mxu0 0
    %2170 = vmatpush2.bf16.msra.mxu0 0
    %2171 = vmatprep.mubr.bf16.mxu0 0
    %2172 = vmatmul.mubr.bf16.gmra.mxu0 %v1936
    %v2173 = vpop.f32.mrf.mxu0
    %v2174 = vadd.f32 %v2125, %v2173
    %v2175 = vpop.f32.mrf.mxu0
    %v2176 = vpop.f32.mrf.mxu0
    %v2177 = vadd.f32 %v2128, %v2176
    %v2178 = vpop.f32.mrf.mxu0
    %2179 = vmatprep.mubr.bf16.mxu0 0
    %2180 = vmatmul.mubr.bf16.gmra.mxu0 %v1939
    %v2181 = vpop.f32.mrf.mxu0
    %v2182 = vadd.f32 %v2133, %v2181
    %v2183 = vpop.f32.mrf.mxu0
    %v2184 = vpop.f32.mrf.mxu0
    %v2185 = vadd.f32 %v2136, %v2184
    %v2186 = vpop.f32.mrf.mxu0
    %2187 = vdwg.mxu0
    %v2188 = vld [vmem:[%s13] sm:$0x1]
    %v2189 = vld [vmem:[%s14] sm:$0x1]
    %v2190 = vadd.f32 %v2174, %v2177
    %v2191 = vadd.f32 %v2190, %v2182
    %v2192 = vadd.f32 %v2191, %v2185
    %v2193 = vrot.slane %v2192, 4
    %v2194 = vadd.f32 %v2192, %v2193
    %v2195 = vrot.slane %v2194, 2
    %v2196 = vadd.f32 %v2194, %v2195
    %v2197 = vrot.slane %v2196, 1
    %v2198 = vadd.f32 %v2196, %v2197
    %v2199 = vmul.f32 %v2174, %v2174
    %v2200 = vmul.f32 %v2177, %v2177
    %v2201 = vmul.f32 %v2182, %v2182
    %v2202 = vmul.f32 %v2185, %v2185
    %v2203 = vadd.f32 %v2199, %v2200
    %v2204 = vadd.f32 %v2203, %v2201
    %v2205 = vadd.f32 %v2204, %v2202
    %v2206 = vrot.slane %v2205, 4
    %v2207 = vadd.f32 %v2205, %v2206
    %v2208 = vrot.slane %v2207, 2
    %v2209 = vadd.f32 %v2207, %v2208
    %v2210 = vrot.slane %v2209, 1
    %v2211 = vadd.f32 %v2209, %v2210
    %v2212 = vsel %vm207, %v2198, %v2211
    %2213 = vmatprep.subr.mxu0 0.0
    %2214 = vmatpush1.msra.mxu0 %v1760
    %2215 = vmatprep.subr.mxu0 0.0
    %2216 = vmatpush1.msra.mxu0 %v1759
    %2217 = vmatprep.subr.mxu0 0.0
    %2218 = vmatpush1.msra.mxu0 %v1758
    %2219 = vmatprep.subr.mxu0 0.0
    %2220 = vmatpush1.msra.mxu0 %v1757
    %2221 = vmatprep.subr.mxu0 0.0
    %2222 = vmatpush1.msra.mxu0 %v1756
    %2223 = vmatprep.subr.mxu0 0.0
    %2224 = vmatpush1.msra.mxu0 %v1755
    %2225 = vmatprep.subr.mxu0 0.0
    %2226 = vmatpush1.msra.mxu0 %v1754
    %2227 = vmatprep.subr.mxu0 0.0
    %2228 = vmatpush1.msra.mxu0 %v1753
    %2229 = vmatprep.subr.mxu0 0.0
    %2230 = vmatpush1.msra.mxu0 %v1752
    %2231 = vmatprep.subr.mxu0 0.0
    %2232 = vmatpush1.msra.mxu0 %v1751
    %2233 = vmatprep.subr.mxu0 0.0
    %2234 = vmatpush1.msra.mxu0 %v1750
    %2235 = vmatprep.subr.mxu0 0.0
    %2236 = vmatpush1.msra.mxu0 %v1749
    %2237 = vmatprep.subr.mxu0 0.0
    %2238 = vmatpush1.msra.mxu0 %v1748
    %2239 = vmatprep.subr.mxu0 0.0
    %2240 = vmatpush1.msra.mxu0 %v1747
    %2241 = vmatprep.subr.mxu0 0.0
    %2242 = vmatpush1.msra.mxu0 %v1746
    %2243 = vmatprep.subr.mxu0 0.0
    %2244 = vmatpush1.msra.mxu0 %v1745
    %2245 = vmatprep.subr.mxu0 0.0
    %2246 = vmatpush2.msra.mxu0 0.0
    %2247 = vmatprep.subr.mxu0 0.0
    %2248 = vmatpush2.msra.mxu0 0.0
    %2249 = vmatprep.subr.mxu0 0.0
    %2250 = vmatpush2.msra.mxu0 0.0
    %2251 = vmatprep.subr.mxu0 0.0
    %2252 = vmatpush2.msra.mxu0 0.0
    %2253 = vmatprep.subr.mxu0 0.0
    %2254 = vmatpush2.msra.mxu0 0.0
    %2255 = vmatprep.subr.mxu0 0.0
    %2256 = vmatpush2.msra.mxu0 0.0
    %2257 = vmatprep.subr.mxu0 0.0
    %2258 = vmatpush2.msra.mxu0 0.0
    %2259 = vmatprep.subr.mxu0 0.0
    %2260 = vmatpush2.msra.mxu0 0.0
    %2261 = vmatprep.subr.mxu0 0.0
    %2262 = vmatpush2.msra.mxu0 0.0
    %2263 = vmatprep.subr.mxu0 0.0
    %2264 = vmatpush2.msra.mxu0 0.0
    %2265 = vmatprep.subr.mxu0 0.0
    %2266 = vmatpush2.msra.mxu0 0.0
    %2267 = vmatprep.subr.mxu0 0.0
    %2268 = vmatpush2.msra.mxu0 0.0
    %2269 = vmatprep.subr.mxu0 0.0
    %2270 = vmatpush2.msra.mxu0 0.0
    %2271 = vmatprep.subr.mxu0 0.0
    %2272 = vmatpush2.msra.mxu0 0.0
    %2273 = vmatprep.subr.mxu0 0.0
    %2274 = vmatpush2.msra.mxu0 0.0
    %2275 = vmatprep.subr.mxu0 0.0
    %2276 = vmatpush2.msra.mxu0 0.0
    %2277 = vmatprep.mubr.f32.mxu0 0.0
    %2278 = vmatmul.mubr.f32.gmra.mxu0 %v2212
    %v2279 = vpop.f32.mrf.mxu0
    %v2280 = vadd.f32 0.0, %v2279
    %v2281 = vpop.f32.mrf.mxu0
    %2282 = vdwg.mxu0
    %v2283 = vmul.f32 %v2280, 0.001953125
    %v2284 = vmul.f32 %v2283, %v2283
    %v2286 = vrot.slane %v2284, 7
    %v2288 = vsub.f32 %v2283, %v2286
    %v2289 = vmax.f32 %v2288, 0.0
    %v2290 = vadd.f32 %v2289, 1e-05
    %v2291 = vrsqrt.pop %v2290
    %v2294 = vunpack.c.l.s4 1966171168
    %v2295 = vunpack.c.0.s8 %v2294
    %v2296 = vlaneseq
    %v2297 = vshrl.u32 %v2296, 7
    %v2298 = vsub.s32 %v2295, %v2297
    %v2299 = vrot.slane %v2291, %v2298
    %v2300 = vcombine.high %v2299, %v2299
    %v2302 = vunpack.c.l.s4 1966171168
    %v2303 = vunpack.c.0.s8 %v2302
    %v2304 = vlaneseq
    %v2305 = vshrl.u32 %v2304, 7
    %v2306 = vsub.s32 %v2303, %v2305
    %v2307 = vrot.slane %v2300, %v2306
    %v2309 = vmul.f32 %v2188, %v2307
    %v2310 = vmul.f32 %v2283, %v2309
    %v2311 = vsub.f32 %v2189, %v2310
    %v2313 = vlaneseq
    %v2314 = vshrl.u32 %v2313, 7
    %v2315 = vsub.s32 0, %v2314
    %v2316 = vrot.slane %v2311, %v2315
    %v2318 = vsel %vm207, %v2309, %v2316
    %v2320 = vsel %vm777, %v2318, 0
    %2322 = vmatprep.subr.mxu0 0.0
    %2323 = vmatpush1.msra.mxu0 0.0
    %2324 = vmatprep.subr.mxu0 0.0
    %2325 = vmatpush1.msra.mxu0 0.0
    %2326 = vmatprep.subr.mxu0 0.0
    %2327 = vmatpush1.msra.mxu0 0.0
    %2328 = vmatprep.subr.mxu0 0.0
    %2329 = vmatpush1.msra.mxu0 0.0
    %2330 = vmatprep.subr.mxu0 0.0
    %2331 = vmatpush1.msra.mxu0 0.0
    %2332 = vmatprep.subr.mxu0 0.0
    %2333 = vmatpush1.msra.mxu0 0.0
    %2334 = vmatprep.subr.mxu0 0.0
    %2335 = vmatpush1.msra.mxu0 0.0
    %2336 = vmatprep.subr.mxu0 0.0
    %2337 = vmatpush1.msra.mxu0 0.0
    %2338 = vmatprep.subr.mxu0 0.0
    %2339 = vmatpush1.msra.mxu0 0.0
    %2340 = vmatprep.subr.mxu0 0.0
    %2341 = vmatpush1.msra.mxu0 0.0
    %2342 = vmatprep.subr.mxu0 0.0
    %2343 = vmatpush1.msra.mxu0 0.0
    %2344 = vmatprep.subr.mxu0 0.0
    %2345 = vmatpush1.msra.mxu0 0.0
    %2346 = vmatprep.subr.mxu0 0.0
    %2347 = vmatpush1.msra.mxu0 0.0
    %2348 = vmatprep.subr.mxu0 0.0
    %2349 = vmatpush1.msra.mxu0 0.0
    %2350 = vmatprep.subr.mxu0 0.0
    %2351 = vmatpush1.msra.mxu0 0.0
    %2352 = vmatprep.subr.mxu0 0.0
    %2353 = vmatpush1.msra.mxu0 %v1761
    %2354 = vmatprep.subr.mxu0 0.0
    %2355 = vmatpush2.msra.mxu0 0.0
    %2356 = vmatprep.subr.mxu0 0.0
    %2357 = vmatpush2.msra.mxu0 0.0
    %2358 = vmatprep.subr.mxu0 0.0
    %2359 = vmatpush2.msra.mxu0 0.0
    %2360 = vmatprep.subr.mxu0 0.0
    %2361 = vmatpush2.msra.mxu0 0.0
    %2362 = vmatprep.subr.mxu0 0.0
    %2363 = vmatpush2.msra.mxu0 0.0
    %2364 = vmatprep.subr.mxu0 0.0
    %2365 = vmatpush2.msra.mxu0 0.0
    %2366 = vmatprep.subr.mxu0 0.0
    %2367 = vmatpush2.msra.mxu0 0.0
    %2368 = vmatprep.subr.mxu0 0.0
    %2369 = vmatpush2.msra.mxu0 0.0
    %2370 = vmatprep.subr.mxu0 0.0
    %2371 = vmatpush2.msra.mxu0 0.0
    %2372 = vmatprep.subr.mxu0 0.0
    %2373 = vmatpush2.msra.mxu0 0.0
    %2374 = vmatprep.subr.mxu0 0.0
    %2375 = vmatpush2.msra.mxu0 0.0
    %2376 = vmatprep.subr.mxu0 0.0
    %2377 = vmatpush2.msra.mxu0 0.0
    %2378 = vmatprep.subr.mxu0 0.0
    %2379 = vmatpush2.msra.mxu0 0.0
    %2380 = vmatprep.subr.mxu0 0.0
    %2381 = vmatpush2.msra.mxu0 0.0
    %2382 = vmatprep.subr.mxu0 0.0
    %2383 = vmatpush2.msra.mxu0 0.0
    %2384 = vmatprep.subr.mxu0 0.0
    %2385 = vmatpush2.msra.mxu0 0.0
    %2386 = vmatprep.mubr.f32.mxu0 0.0
    %2387 = vmatmul.mubr.f32.gmra.mxu0 %v2320
    %v2388 = vpop.f32.mrf.mxu0
    %v2389 = vadd.f32 0.0, %v2388
    %v2390 = vpop.f32.mrf.mxu0
    %2391 = vdwg.mxu0
    %v2392 = vlaneseq
    %v2393 = vshrl.u32 %v2392, 7
    %v2394 = vsub.s32 0, %v2393
    %v2395 = vrot.slane %v2389, %v2394
    %v2396 = vmul.f32 %v2174, %v2395
    %v2397 = vmul.f32 %v2177, %v2395
    %v2398 = vmul.f32 %v2182, %v2395
    %v2399 = vmul.f32 %v2185, %v2395
    %v2400 = vlaneseq
    %v2401 = vshrl.u32 %v2400, 7
    %v2402 = vsub.s32 1, %v2401
    %v2403 = vrot.slane %v2389, %v2402
    %v2404 = vadd.f32 %v2396, %v2403
    %v2405 = vadd.f32 %v2397, %v2403
    %v2406 = vadd.f32 %v2398, %v2403
    %v2407 = vadd.f32 %v2399, %v2403
    %v2408 = vmax.f32 %v2404, 0.0
    %v2409 = vmax.f32 %v2405, 0.0
    %v2410 = vmax.f32 %v2406, 0.0
    %v2411 = vmax.f32 %v2407, 0.0
    %v2416 = vrot.slane %v2408, 7
    %v2417 = vrot.slane %v2409, 7
    %v2418 = vsel %vm207, %v2416, %v2417
    %v2419 = vrot.slane %v2410, 7
    %v2420 = vsel %vm207, %v2417, %v2419
    %v2421 = vrot.slane %v2411, 7
    %v2422 = vsel %vm207, %v2419, %v2421
    %v2427 = vsel %vm207, 0.0, %v2416
    %v2428 = vsel %vm268, 0.0, %v2427
    %v2429 = vsel %vm269, 0.0, %v2418
    %v2430 = vsel %vm270, 0.0, %v2420
    %v2431 = vsel %vm271, 0.0, %v2422
    %v2432 = vrot.slane %v2408, 1
    %v2433 = vrot.slane %v2409, 1
    %v2434 = vsel %vm276, %v2432, %v2433
    %v2435 = vrot.slane %v2410, 1
    %v2436 = vsel %vm276, %v2433, %v2435
    %v2437 = vrot.slane %v2411, 1
    %v2438 = vsel %vm276, %v2435, %v2437
    %v2443 = vsel %vm276, %v2437, 0.0
    %v2444 = vsel %vm289, 0.0, %v2434
    %v2445 = vsel %vm290, 0.0, %v2436
    %v2446 = vsel %vm291, 0.0, %v2438
    %v2447 = vsel %vm292, 0.0, %v2443
    %v2448 = vpack.c.bf16 %v2429, %v2428
    %v2449 = vpack.c.bf16 %v2431, %v2430
    %v2452 = vunpack.c.l.b16 %v2448
    %v2453 = vunpack.c.h.b16 %v2448
    %v2454 = vunpack.c.l.b16 %v2449
    %v2455 = vunpack.c.h.b16 %v2449
    %v2456 = vpack.c.b16 %v2452, %v2452
    %v2457 = vpack.c.b16 %v2453, %v2453
    %v2458 = vpack.c.b16 %v2454, %v2454
    %v2459 = vpack.c.b16 %v2455, %v2455
    %2464 = vst [vmem:[#allocation2] sm:$0xf] %v2456
    %2465 = vst [vmem:[#allocation2 + $0xc] sm:$0xf] %v2457
    %2466 = vst [vmem:[#allocation2 + $0x18] sm:$0xf] %v2458
    %2467 = vst [vmem:[#allocation2 + $0x24] sm:$0xf] %v2459
    %v2468 = vpack.c.bf16 %v2409, %v2408
    %v2469 = vpack.c.bf16 %v2411, %v2410
    %v2472 = vunpack.c.l.b16 %v2468
    %v2473 = vunpack.c.h.b16 %v2468
    %v2474 = vunpack.c.l.b16 %v2469
    %v2475 = vunpack.c.h.b16 %v2469
    %v2476 = vpack.c.b16 %v2472, %v2472
    %v2477 = vpack.c.b16 %v2473, %v2473
    %v2478 = vpack.c.b16 %v2474, %v2474
    %v2479 = vpack.c.b16 %v2475, %v2475
    %2484 = vst [vmem:[#allocation2 + $0x4] sm:$0xf] %v2476
    %2485 = vst [vmem:[#allocation2 + $0x10] sm:$0xf] %v2477
    %2486 = vst [vmem:[#allocation2 + $0x1c] sm:$0xf] %v2478
    %2487 = vst [vmem:[#allocation2 + $0x28] sm:$0xf] %v2479
    %v2488 = vpack.c.bf16 %v2445, %v2444
    %v2489 = vpack.c.bf16 %v2447, %v2446
    %v2492 = vunpack.c.l.b16 %v2488
    %v2493 = vunpack.c.h.b16 %v2488
    %v2494 = vunpack.c.l.b16 %v2489
    %v2495 = vunpack.c.h.b16 %v2489
    %v2496 = vpack.c.b16 %v2492, %v2492
    %v2497 = vpack.c.b16 %v2493, %v2493
    %v2498 = vpack.c.b16 %v2494, %v2494
    %v2499 = vpack.c.b16 %v2495, %v2495
    %2504 = vst [vmem:[#allocation2 + $0x8] sm:$0xf] %v2496
    %2505 = vst [vmem:[#allocation2 + $0x14] sm:$0xf] %v2497
    %2506 = vst [vmem:[#allocation2 + $0x20] sm:$0xf] %v2498
    %2507 = vst [vmem:[#allocation2 + $0x2c] sm:$0xf] %v2499
    %v2508 = vld [vmem:[#allocation2] sm:$0xff]
    %v2509 = vld [vmem:[#allocation2 + $0x8] sm:$0xf]
    %v2510 = vld [vmem:[#allocation2 + $0xc] sm:$0xff]
    %v2511 = vld [vmem:[#allocation2 + $0x14] sm:$0xf]
    %v2512 = vld [vmem:[#allocation2 + $0x18] sm:$0xff]
    %v2513 = vld [vmem:[#allocation2 + $0x20] sm:$0xf]
    %v2514 = vld [vmem:[#allocation2 + $0x24] sm:$0xff]
    %v2515 = vld [vmem:[#allocation2 + $0x2c] sm:$0xf]
    %v2516 = vld [vmem:[#allocation17] sm:$0xf]
    %v2517 = vld [vmem:[#allocation17 + $0x4] sm:$0xf]
    %v2518 = vld [vmem:[#allocation17 + $0x8] sm:$0xf]
    %v2519 = vld [vmem:[#allocation17 + $0xc] sm:$0xf]
    %v2520 = vld [vmem:[#allocation17 + $0x10] sm:$0xf]
    %v2521 = vld [vmem:[#allocation17 + $0x14] sm:$0xf]
    %v2522 = vld [vmem:[#allocation17 + $0x18] sm:$0xf]
    %v2523 = vld [vmem:[#allocation17 + $0x1c] sm:$0xf]
    %v2524 = vld [vmem:[#allocation17 + $0x20] sm:$0xf]
    %v2525 = vld [vmem:[#allocation17 + $0x24] sm:$0xf]
    %v2526 = vld [vmem:[#allocation17 + $0x28] sm:$0xf]
    %v2527 = vld [vmem:[#allocation17 + $0x2c] sm:$0xf]
    %v2528 = vld [vmem:[#allocation17 + $0x30] sm:$0xf]
    %v2529 = vld [vmem:[#allocation17 + $0x34] sm:$0xf]
    %v2530 = vld [vmem:[#allocation17 + $0x38] sm:$0xf]
    %v2531 = vld [vmem:[#allocation17 + $0x3c] sm:$0xf]
    %v2532 = vld [vmem:[#allocation17 + $0x40] sm:$0xf]
    %v2533 = vld [vmem:[#allocation17 + $0x44] sm:$0xf]
    %v2534 = vld [vmem:[#allocation17 + $0x48] sm:$0xf]
    %v2535 = vld [vmem:[#allocation17 + $0x4c] sm:$0xf]
    %v2536 = vld [vmem:[#allocation17 + $0x50] sm:$0xf]
    %v2537 = vld [vmem:[#allocation17 + $0x54] sm:$0xf]
    %v2538 = vld [vmem:[#allocation17 + $0x58] sm:$0xf]
    %v2539 = vld [vmem:[#allocation17 + $0x5c] sm:$0xf]
    %v2540 = vld [vmem:[#allocation17 + $0x60] sm:$0xf]
    %v2541 = vld [vmem:[#allocation17 + $0x64] sm:$0xf]
    %v2542 = vld [vmem:[#allocation17 + $0x68] sm:$0xf]
    %v2543 = vld [vmem:[#allocation17 + $0x6c] sm:$0xf]
    %v2544 = vld [vmem:[#allocation17 + $0x70] sm:$0xf]
    %v2545 = vld [vmem:[#allocation17 + $0x74] sm:$0xf]
    %v2546 = vld [vmem:[#allocation17 + $0x78] sm:$0xf]
    %v2547 = vld [vmem:[#allocation17 + $0x7c] sm:$0xf]
    %v2548 = vld [vmem:[#allocation17 + $0x80] sm:$0xf]
    %v2549 = vld [vmem:[#allocation17 + $0x84] sm:$0xf]
    %v2550 = vld [vmem:[#allocation17 + $0x88] sm:$0xf]
    %v2551 = vld [vmem:[#allocation17 + $0x8c] sm:$0xf]
    %v2552 = vld [vmem:[#allocation17 + $0x90] sm:$0xf]
    %v2553 = vld [vmem:[#allocation17 + $0x94] sm:$0xf]
    %v2554 = vld [vmem:[#allocation17 + $0x98] sm:$0xf]
    %v2555 = vld [vmem:[#allocation17 + $0x9c] sm:$0xf]
    %v2556 = vld [vmem:[#allocation17 + $0xa0] sm:$0xf]
    %v2557 = vld [vmem:[#allocation17 + $0xa4] sm:$0xf]
    %v2558 = vld [vmem:[#allocation17 + $0xa8] sm:$0xf]
    %v2559 = vld [vmem:[#allocation17 + $0xac] sm:$0xf]
    %v2560 = vld [vmem:[#allocation17 + $0xb0] sm:$0xf]
    %v2561 = vld [vmem:[#allocation17 + $0xb4] sm:$0xf]
    %v2562 = vld [vmem:[#allocation17 + $0xb8] sm:$0xf]
    %v2563 = vld [vmem:[#allocation17 + $0xbc] sm:$0xf]
    %v2572 = vunpack.c.l.b16 %v2508
    %v2573 = vunpack.c.h.b16 %v2508
    %v2574 = vunpack.c.l.b16 %v2509
    %v2575 = vunpack.c.l.b16 %v2510
    %v2576 = vunpack.c.h.b16 %v2510
    %v2577 = vunpack.c.l.b16 %v2511
    %v2578 = vunpack.c.l.b16 %v2512
    %v2579 = vunpack.c.h.b16 %v2512
    %v2580 = vunpack.c.l.b16 %v2513
    %v2581 = vunpack.c.l.b16 %v2514
    %v2582 = vunpack.c.h.b16 %v2514
    %v2583 = vunpack.c.l.b16 %v2515
    %v2584 = vpack.c.b16 %v2575, %v2572
    %v2585 = vpack.c.b16 %v2576, %v2573
    %v2586 = vpack.c.b16 %v2577, %v2574
    %v2587 = vpack.c.b16 %v2581, %v2578
    %v2588 = vpack.c.b16 %v2582, %v2579
    %v2589 = vpack.c.b16 %v2583, %v2580
    %v2644 = vunpack.c.l.b16 %v2516
    %v2645 = vunpack.c.l.b16 %v2517
    %v2646 = vunpack.c.l.b16 %v2518
    %v2647 = vunpack.c.l.b16 %v2519
    %v2648 = vunpack.c.l.b16 %v2520
    %v2649 = vunpack.c.l.b16 %v2521
    %v2650 = vunpack.c.l.b16 %v2522
    %v2651 = vunpack.c.l.b16 %v2523
    %v2652 = vunpack.c.l.b16 %v2524
    %v2653 = vunpack.c.l.b16 %v2525
    %v2654 = vunpack.c.l.b16 %v2526
    %v2655 = vunpack.c.l.b16 %v2527
    %v2656 = vunpack.c.l.b16 %v2528
    %v2657 = vunpack.c.l.b16 %v2529
    %v2658 = vunpack.c.l.b16 %v2530
    %v2659 = vunpack.c.l.b16 %v2531
    %v2660 = vunpack.c.l.b16 %v2532
    %v2661 = vunpack.c.l.b16 %v2533
    %v2662 = vunpack.c.l.b16 %v2534
    %v2663 = vunpack.c.l.b16 %v2535
    %v2664 = vunpack.c.l.b16 %v2536
    %v2665 = vunpack.c.l.b16 %v2537
    %v2666 = vunpack.c.l.b16 %v2538
    %v2667 = vunpack.c.l.b16 %v2539
    %v2668 = vunpack.c.l.b16 %v2540
    %v2669 = vunpack.c.l.b16 %v2541
    %v2670 = vunpack.c.l.b16 %v2542
    %v2671 = vunpack.c.l.b16 %v2543
    %v2672 = vunpack.c.l.b16 %v2544
    %v2673 = vunpack.c.l.b16 %v2545
    %v2674 = vunpack.c.l.b16 %v2546
    %v2675 = vunpack.c.l.b16 %v2547
    %v2676 = vunpack.c.l.b16 %v2548
    %v2677 = vunpack.c.l.b16 %v2549
    %v2678 = vunpack.c.l.b16 %v2550
    %v2679 = vunpack.c.l.b16 %v2551
    %v2680 = vunpack.c.l.b16 %v2552
    %v2681 = vunpack.c.l.b16 %v2553
    %v2682 = vunpack.c.l.b16 %v2554
    %v2683 = vunpack.c.l.b16 %v2555
    %v2684 = vunpack.c.l.b16 %v2556
    %v2685 = vunpack.c.l.b16 %v2557
    %v2686 = vunpack.c.l.b16 %v2558
    %v2687 = vunpack.c.l.b16 %v2559
    %v2688 = vunpack.c.l.b16 %v2560
    %v2689 = vunpack.c.l.b16 %v2561
    %v2690 = vunpack.c.l.b16 %v2562
    %v2691 = vunpack.c.l.b16 %v2563
    %v2692 = vpack.c.b16 %v2645, %v2644
    %v2693 = vpack.c.b16 %v2647, %v2646
    %v2694 = vpack.c.b16 %v2649, %v2648
    %v2695 = vpack.c.b16 %v2651, %v2650
    %v2696 = vpack.c.b16 %v2653, %v2652
    %v2697 = vpack.c.b16 %v2655, %v2654
    %v2698 = vpack.c.b16 %v2657, %v2656
    %v2699 = vpack.c.b16 %v2659, %v2658
    %v2700 = vpack.c.b16 %v2661, %v2660
    %v2701 = vpack.c.b16 %v2663, %v2662
    %v2702 = vpack.c.b16 %v2665, %v2664
    %v2703 = vpack.c.b16 %v2667, %v2666
    %v2704 = vpack.c.b16 %v2669, %v2668
    %v2705 = vpack.c.b16 %v2671, %v2670
    %v2706 = vpack.c.b16 %v2673, %v2672
    %v2707 = vpack.c.b16 %v2675, %v2674
    %v2708 = vpack.c.b16 %v2677, %v2676
    %v2709 = vpack.c.b16 %v2679, %v2678
    %v2710 = vpack.c.b16 %v2681, %v2680
    %v2711 = vpack.c.b16 %v2683, %v2682
    %v2712 = vpack.c.b16 %v2685, %v2684
    %v2713 = vpack.c.b16 %v2687, %v2686
    %v2714 = vpack.c.b16 %v2689, %v2688
    %v2715 = vpack.c.b16 %v2691, %v2690
    %2740 = vmatprep.subr.bf16.mxu0 0
    %2741 = vmatpush1.bf16.msra.mxu0 %v2699
    %2742 = vmatprep.subr.bf16.mxu0 0
    %2743 = vmatpush1.bf16.msra.mxu0 %v2698
    %2744 = vmatprep.subr.bf16.mxu0 0
    %2745 = vmatpush1.bf16.msra.mxu0 %v2697
    %2746 = vmatprep.subr.bf16.mxu0 0
    %2747 = vmatpush1.bf16.msra.mxu0 %v2696
    %2748 = vmatprep.subr.bf16.mxu0 0
    %2749 = vmatpush1.bf16.msra.mxu0 %v2695
    %2750 = vmatprep.subr.bf16.mxu0 0
    %2751 = vmatpush1.bf16.msra.mxu0 %v2694
    %2752 = vmatprep.subr.bf16.mxu0 0
    %2753 = vmatpush1.bf16.msra.mxu0 %v2693
    %2754 = vmatprep.subr.bf16.mxu0 0
    %2755 = vmatpush1.bf16.msra.mxu0 %v2692
    %2756 = vmatprep.subr.bf16.mxu0 0
    %2757 = vmatpush2.bf16.msra.mxu0 %v2707
    %2758 = vmatprep.subr.bf16.mxu0 0
    %2759 = vmatpush2.bf16.msra.mxu0 %v2706
    %2760 = vmatprep.subr.bf16.mxu0 0
    %2761 = vmatpush2.bf16.msra.mxu0 %v2705
    %2762 = vmatprep.subr.bf16.mxu0 0
    %2763 = vmatpush2.bf16.msra.mxu0 %v2704
    %2764 = vmatprep.subr.bf16.mxu0 0
    %2765 = vmatpush2.bf16.msra.mxu0 %v2703
    %2766 = vmatprep.subr.bf16.mxu0 0
    %2767 = vmatpush2.bf16.msra.mxu0 %v2702
    %2768 = vmatprep.subr.bf16.mxu0 0
    %2769 = vmatpush2.bf16.msra.mxu0 %v2701
    %2770 = vmatprep.subr.bf16.mxu0 0
    %2771 = vmatpush2.bf16.msra.mxu0 %v2700
    %2772 = vmatprep.mubr.bf16.mxu0 %v2585
    %2773 = vmatmul.mubr.bf16.gmra.mxu0 %v2584
    %v2774 = vpop.f32.mrf.mxu0
    %v2775 = vadd.f32 0.0, %v2774
    %v2776 = vpop.f32.mrf.mxu0
    %v2777 = vpop.f32.mrf.mxu0
    %v2778 = vadd.f32 0.0, %v2777
    %v2779 = vpop.f32.mrf.mxu0
    %2780 = vmatprep.mubr.bf16.mxu0 %v2588
    %2781 = vmatmul.mubr.bf16.gmra.mxu0 %v2587
    %v2782 = vpop.f32.mrf.mxu0
    %v2783 = vadd.f32 0.0, %v2782
    %v2784 = vpop.f32.mrf.mxu0
    %v2785 = vpop.f32.mrf.mxu0
    %v2786 = vadd.f32 0.0, %v2785
    %v2787 = vpop.f32.mrf.mxu0
    %2788 = vdwg.mxu0
    %2789 = vmatprep.subr.bf16.mxu0 0
    %2790 = vmatpush1.bf16.msra.mxu0 %v2715
    %2791 = vmatprep.subr.bf16.mxu0 0
    %2792 = vmatpush1.bf16.msra.mxu0 %v2714
    %2793 = vmatprep.subr.bf16.mxu0 0
    %2794 = vmatpush1.bf16.msra.mxu0 %v2713
    %2795 = vmatprep.subr.bf16.mxu0 0
    %2796 = vmatpush1.bf16.msra.mxu0 %v2712
    %2797 = vmatprep.subr.bf16.mxu0 0
    %2798 = vmatpush1.bf16.msra.mxu0 %v2711
    %2799 = vmatprep.subr.bf16.mxu0 0
    %2800 = vmatpush1.bf16.msra.mxu0 %v2710
    %2801 = vmatprep.subr.bf16.mxu0 0
    %2802 = vmatpush1.bf16.msra.mxu0 %v2709
    %2803 = vmatprep.subr.bf16.mxu0 0
    %2804 = vmatpush1.bf16.msra.mxu0 %v2708
    %2805 = vmatprep.subr.bf16.mxu0 0
    %2806 = vmatpush2.bf16.msra.mxu0 0
    %2807 = vmatprep.subr.bf16.mxu0 0
    %2808 = vmatpush2.bf16.msra.mxu0 0
    %2809 = vmatprep.subr.bf16.mxu0 0
    %2810 = vmatpush2.bf16.msra.mxu0 0
    %2811 = vmatprep.subr.bf16.mxu0 0
    %2812 = vmatpush2.bf16.msra.mxu0 0
    %2813 = vmatprep.subr.bf16.mxu0 0
    %2814 = vmatpush2.bf16.msra.mxu0 0
    %2815 = vmatprep.subr.bf16.mxu0 0
    %2816 = vmatpush2.bf16.msra.mxu0 0
    %2817 = vmatprep.subr.bf16.mxu0 0
    %2818 = vmatpush2.bf16.msra.mxu0 0
    %2819 = vmatprep.subr.bf16.mxu0 0
    %2820 = vmatpush2.bf16.msra.mxu0 0
    %2821 = vmatprep.mubr.bf16.mxu0 0
    %2822 = vmatmul.mubr.bf16.gmra.mxu0 %v2586
    %v2823 = vpop.f32.mrf.mxu0
    %v2824 = vadd.f32 %v2775, %v2823
    %v2825 = vpop.f32.mrf.mxu0
    %v2826 = vpop.f32.mrf.mxu0
    %v2827 = vadd.f32 %v2778, %v2826
    %v2828 = vpop.f32.mrf.mxu0
    %2829 = vmatprep.mubr.bf16.mxu0 0
    %2830 = vmatmul.mubr.bf16.gmra.mxu0 %v2589
    %v2831 = vpop.f32.mrf.mxu0
    %v2832 = vadd.f32 %v2783, %v2831
    %v2833 = vpop.f32.mrf.mxu0
    %v2834 = vpop.f32.mrf.mxu0
    %v2835 = vadd.f32 %v2786, %v2834
    %v2836 = vpop.f32.mrf.mxu0
    %2837 = vdwg.mxu0
    %v2838 = vld [vmem:[%s16] sm:$0x1]
    %v2839 = vld [vmem:[%s17] sm:$0x1]
    %v2840 = vadd.f32 %v2824, %v2827
    %v2841 = vadd.f32 %v2840, %v2832
    %v2842 = vadd.f32 %v2841, %v2835
    %v2843 = vrot.slane %v2842, 4
    %v2844 = vadd.f32 %v2842, %v2843
    %v2845 = vrot.slane %v2844, 2
    %v2846 = vadd.f32 %v2844, %v2845
    %v2847 = vrot.slane %v2846, 1
    %v2848 = vadd.f32 %v2846, %v2847
    %v2849 = vmul.f32 %v2824, %v2824
    %v2850 = vmul.f32 %v2827, %v2827
    %v2851 = vmul.f32 %v2832, %v2832
    %v2852 = vmul.f32 %v2835, %v2835
    %v2853 = vadd.f32 %v2849, %v2850
    %v2854 = vadd.f32 %v2853, %v2851
    %v2855 = vadd.f32 %v2854, %v2852
    %v2856 = vrot.slane %v2855, 4
    %v2857 = vadd.f32 %v2855, %v2856
    %v2858 = vrot.slane %v2857, 2
    %v2859 = vadd.f32 %v2857, %v2858
    %v2860 = vrot.slane %v2859, 1
    %v2861 = vadd.f32 %v2859, %v2860
    %v2862 = vsel %vm207, %v2848, %v2861
    %2863 = vmatprep.subr.mxu0 0.0
    %2864 = vmatpush1.msra.mxu0 %v1760
    %2865 = vmatprep.subr.mxu0 0.0
    %2866 = vmatpush1.msra.mxu0 %v1759
    %2867 = vmatprep.subr.mxu0 0.0
    %2868 = vmatpush1.msra.mxu0 %v1758
    %2869 = vmatprep.subr.mxu0 0.0
    %2870 = vmatpush1.msra.mxu0 %v1757
    %2871 = vmatprep.subr.mxu0 0.0
    %2872 = vmatpush1.msra.mxu0 %v1756
    %2873 = vmatprep.subr.mxu0 0.0
    %2874 = vmatpush1.msra.mxu0 %v1755
    %2875 = vmatprep.subr.mxu0 0.0
    %2876 = vmatpush1.msra.mxu0 %v1754
    %2877 = vmatprep.subr.mxu0 0.0
    %2878 = vmatpush1.msra.mxu0 %v1753
    %2879 = vmatprep.subr.mxu0 0.0
    %2880 = vmatpush1.msra.mxu0 %v1752
    %2881 = vmatprep.subr.mxu0 0.0
    %2882 = vmatpush1.msra.mxu0 %v1751
    %2883 = vmatprep.subr.mxu0 0.0
    %2884 = vmatpush1.msra.mxu0 %v1750
    %2885 = vmatprep.subr.mxu0 0.0
    %2886 = vmatpush1.msra.mxu0 %v1749
    %2887 = vmatprep.subr.mxu0 0.0
    %2888 = vmatpush1.msra.mxu0 %v1748
    %2889 = vmatprep.subr.mxu0 0.0
    %2890 = vmatpush1.msra.mxu0 %v1747
    %2891 = vmatprep.subr.mxu0 0.0
    %2892 = vmatpush1.msra.mxu0 %v1746
    %2893 = vmatprep.subr.mxu0 0.0
    %2894 = vmatpush1.msra.mxu0 %v1745
    %2895 = vmatprep.subr.mxu0 0.0
    %2896 = vmatpush2.msra.mxu0 0.0
    %2897 = vmatprep.subr.mxu0 0.0
    %2898 = vmatpush2.msra.mxu0 0.0
    %2899 = vmatprep.subr.mxu0 0.0
    %2900 = vmatpush2.msra.mxu0 0.0
    %2901 = vmatprep.subr.mxu0 0.0
    %2902 = vmatpush2.msra.mxu0 0.0
    %2903 = vmatprep.subr.mxu0 0.0
    %2904 = vmatpush2.msra.mxu0 0.0
    %2905 = vmatprep.subr.mxu0 0.0
    %2906 = vmatpush2.msra.mxu0 0.0
    %2907 = vmatprep.subr.mxu0 0.0
    %2908 = vmatpush2.msra.mxu0 0.0
    %2909 = vmatprep.subr.mxu0 0.0
    %2910 = vmatpush2.msra.mxu0 0.0
    %2911 = vmatprep.subr.mxu0 0.0
    %2912 = vmatpush2.msra.mxu0 0.0
    %2913 = vmatprep.subr.mxu0 0.0
    %2914 = vmatpush2.msra.mxu0 0.0
    %2915 = vmatprep.subr.mxu0 0.0
    %2916 = vmatpush2.msra.mxu0 0.0
    %2917 = vmatprep.subr.mxu0 0.0
    %2918 = vmatpush2.msra.mxu0 0.0
    %2919 = vmatprep.subr.mxu0 0.0
    %2920 = vmatpush2.msra.mxu0 0.0
    %2921 = vmatprep.subr.mxu0 0.0
    %2922 = vmatpush2.msra.mxu0 0.0
    %2923 = vmatprep.subr.mxu0 0.0
    %2924 = vmatpush2.msra.mxu0 0.0
    %2925 = vmatprep.subr.mxu0 0.0
    %2926 = vmatpush2.msra.mxu0 0.0
    %2927 = vmatprep.mubr.f32.mxu0 0.0
    %2928 = vmatmul.mubr.f32.gmra.mxu0 %v2862
    %v2929 = vpop.f32.mrf.mxu0
    %v2930 = vadd.f32 0.0, %v2929
    %v2931 = vpop.f32.mrf.mxu0
    %2932 = vdwg.mxu0
    %v2933 = vmul.f32 %v2930, 0.001953125
    %v2934 = vmul.f32 %v2933, %v2933
    %v2936 = vrot.slane %v2934, 7
    %v2938 = vsub.f32 %v2933, %v2936
    %v2939 = vmax.f32 %v2938, 0.0
    %v2940 = vadd.f32 %v2939, 1e-05
    %v2941 = vrsqrt.pop %v2940
    %v2944 = vunpack.c.l.s4 1966171168
    %v2945 = vunpack.c.0.s8 %v2944
    %v2946 = vlaneseq
    %v2947 = vshrl.u32 %v2946, 7
    %v2948 = vsub.s32 %v2945, %v2947
    %v2949 = vrot.slane %v2941, %v2948
    %v2950 = vcombine.high %v2949, %v2949
    %v2952 = vunpack.c.l.s4 1966171168
    %v2953 = vunpack.c.0.s8 %v2952
    %v2954 = vlaneseq
    %v2955 = vshrl.u32 %v2954, 7
    %v2956 = vsub.s32 %v2953, %v2955
    %v2957 = vrot.slane %v2950, %v2956
    %v2959 = vmul.f32 %v2838, %v2957
    %v2960 = vmul.f32 %v2933, %v2959
    %v2961 = vsub.f32 %v2839, %v2960
    %v2963 = vlaneseq
    %v2964 = vshrl.u32 %v2963, 7
    %v2965 = vsub.s32 0, %v2964
    %v2966 = vrot.slane %v2961, %v2965
    %v2968 = vsel %vm207, %v2959, %v2966
    %v2970 = vsel %vm777, %v2968, 0
    %2972 = vmatprep.subr.mxu0 0.0
    %2973 = vmatpush1.msra.mxu0 0.0
    %2974 = vmatprep.subr.mxu0 0.0
    %2975 = vmatpush1.msra.mxu0 0.0
    %2976 = vmatprep.subr.mxu0 0.0
    %2977 = vmatpush1.msra.mxu0 0.0
    %2978 = vmatprep.subr.mxu0 0.0
    %2979 = vmatpush1.msra.mxu0 0.0
    %2980 = vmatprep.subr.mxu0 0.0
    %2981 = vmatpush1.msra.mxu0 0.0
    %2982 = vmatprep.subr.mxu0 0.0
    %2983 = vmatpush1.msra.mxu0 0.0
    %2984 = vmatprep.subr.mxu0 0.0
    %2985 = vmatpush1.msra.mxu0 0.0
    %2986 = vmatprep.subr.mxu0 0.0
    %2987 = vmatpush1.msra.mxu0 0.0
    %2988 = vmatprep.subr.mxu0 0.0
    %2989 = vmatpush1.msra.mxu0 0.0
    %2990 = vmatprep.subr.mxu0 0.0
    %2991 = vmatpush1.msra.mxu0 0.0
    %2992 = vmatprep.subr.mxu0 0.0
    %2993 = vmatpush1.msra.mxu0 0.0
    %2994 = vmatprep.subr.mxu0 0.0
    %2995 = vmatpush1.msra.mxu0 0.0
    %2996 = vmatprep.subr.mxu0 0.0
    %2997 = vmatpush1.msra.mxu0 0.0
    %2998 = vmatprep.subr.mxu0 0.0
    %2999 = vmatpush1.msra.mxu0 0.0
    %3000 = vmatprep.subr.mxu0 0.0
    %3001 = vmatpush1.msra.mxu0 0.0
    %3002 = vmatprep.subr.mxu0 0.0
    %3003 = vmatpush1.msra.mxu0 %v1761
    %3004 = vmatprep.subr.mxu0 0.0
    %3005 = vmatpush2.msra.mxu0 0.0
    %3006 = vmatprep.subr.mxu0 0.0
    %3007 = vmatpush2.msra.mxu0 0.0
    %3008 = vmatprep.subr.mxu0 0.0
    %3009 = vmatpush2.msra.mxu0 0.0
    %3010 = vmatprep.subr.mxu0 0.0
    %3011 = vmatpush2.msra.mxu0 0.0
    %3012 = vmatprep.subr.mxu0 0.0
    %3013 = vmatpush2.msra.mxu0 0.0
    %3014 = vmatprep.subr.mxu0 0.0
    %3015 = vmatpush2.msra.mxu0 0.0
    %3016 = vmatprep.subr.mxu0 0.0
    %3017 = vmatpush2.msra.mxu0 0.0
    %3018 = vmatprep.subr.mxu0 0.0
    %3019 = vmatpush2.msra.mxu0 0.0
    %3020 = vmatprep.subr.mxu0 0.0
    %3021 = vmatpush2.msra.mxu0 0.0
    %3022 = vmatprep.subr.mxu0 0.0
    %3023 = vmatpush2.msra.mxu0 0.0
    %3024 = vmatprep.subr.mxu0 0.0
    %3025 = vmatpush2.msra.mxu0 0.0
    %3026 = vmatprep.subr.mxu0 0.0
    %3027 = vmatpush2.msra.mxu0 0.0
    %3028 = vmatprep.subr.mxu0 0.0
    %3029 = vmatpush2.msra.mxu0 0.0
    %3030 = vmatprep.subr.mxu0 0.0
    %3031 = vmatpush2.msra.mxu0 0.0
    %3032 = vmatprep.subr.mxu0 0.0
    %3033 = vmatpush2.msra.mxu0 0.0
    %3034 = vmatprep.subr.mxu0 0.0
    %3035 = vmatpush2.msra.mxu0 0.0
    %3036 = vmatprep.mubr.f32.mxu0 0.0
    %3037 = vmatmul.mubr.f32.gmra.mxu0 %v2970
    %v3038 = vpop.f32.mrf.mxu0
    %v3039 = vadd.f32 0.0, %v3038
    %v3040 = vpop.f32.mrf.mxu0
    %3041 = vdwg.mxu0
    %v3042 = vlaneseq
    %v3043 = vshrl.u32 %v3042, 7
    %v3044 = vsub.s32 0, %v3043
    %v3045 = vrot.slane %v3039, %v3044
    %v3046 = vmul.f32 %v2824, %v3045
    %v3047 = vmul.f32 %v2827, %v3045
    %v3048 = vmul.f32 %v2832, %v3045
    %v3049 = vmul.f32 %v2835, %v3045
    %v3050 = vlaneseq
    %v3051 = vshrl.u32 %v3050, 7
    %v3052 = vsub.s32 1, %v3051
    %v3053 = vrot.slane %v3039, %v3052
    %v3054 = vadd.f32 %v3046, %v3053
    %v3055 = vadd.f32 %v3047, %v3053
    %v3056 = vadd.f32 %v3048, %v3053
    %v3057 = vadd.f32 %v3049, %v3053
    %v3058 = vadd.f32 %v3054, %v1741
    %v3059 = vadd.f32 %v3055, %v1742
    %v3060 = vadd.f32 %v3056, %v1743
    %v3061 = vadd.f32 %v3057, %v1744
    %v3062 = vmax.f32 %v3058, 0.0
    %v3063 = vmax.f32 %v3059, 0.0
    %v3064 = vmax.f32 %v3060, 0.0
    %v3065 = vmax.f32 %v3061, 0.0
    %3066 = vst [vmem:[#allocation18] sm:$0xff] %v3062
    %3067 = vst [vmem:[#allocation18 + $0x8] sm:$0xff] %v3063
    %3068 = vst [vmem:[#allocation18 + $0x10] sm:$0xff] %v3064
    %3069 = vst [vmem:[#allocation18 + $0x18] sm:$0xff] %v3065
    // Predicated region
    $region118: #{tpu_custom_call.1} parent=1 // pred_check
      _
    $region119: #{tpu_custom_call.1} parent=1 // pred_check_branch
      %3071 = sbr.rel (0) target = $region121
    $region120: #{tpu_custom_call.1} parent=1 // pred_region
      %s3073 = ssub.s32 512, 512
      %3074 = vsyncadd [#allocation5], %s3073
      %s3075 = sshll.u32 [#allocation18], 4
      %s3076 = int_to_ptr.vmem [resolvable:$true] %s3075
      %3081 = dma.vmem_to_hbm [thread:$0]  %s3076, 512, %s20, [#allocation5], 128, 128, 8
    $region121: #{tpu_custom_call.1} parent=1 // pred_fallthru
      _
    // Predicated region
    $region122: #{tpu_custom_call.1} parent=1 // pred_check
      _
    $region123: #{tpu_custom_call.1} parent=1 // pred_check_branch
      %3083 = sbr.rel (0) target = $region125
    $region124: #{tpu_custom_call.1} parent=1 // pred_region
      %3084 = dma.done [#allocation5], 512
    $region125: #{tpu_custom_call.1} parent=1 // pred_fallthru
      _
    %3085 = vsyncpa [#allocation4], 1
    %3086 = vsyncpa [#allocation7], 1
    %3087 = vsyncpa [#allocation10], 1
    %3088 = vsyncpa [#allocation13], 1
    %3089 = vsyncpa [#allocation16], 1
    %3090 = vsyncpa [#allocation5], 1

</llo_original>
